<compile_context>
chip_gen: v6e
topology: v6e:2x2x1
jax: 0.10.0
libtpu: 0.0.40
codegen_flags: <defaults>
</compile_context>

<pallas_src>
import jax
import jax.numpy as jnp
from jax.experimental import pallas as pl
from jax.experimental.pallas import tpu as pltpu


def _round_up(v, m):
    return ((v + m - 1) // m) * m


def _pick_vmem_limit(B_tile, Hp, WpC, HW, KKC, Cout_p, NC_p):
    """Scoped-VMEM cap derived from the per-step working set.

    Kept below v7x's 64 MiB physical VMEM; v5e/v6e (128 MiB) could raise the
    cap further to admit bigger batch / spatial tiles.
    """
    lane = lambda v: _round_up(v, 128)
    bhw = B_tile * HW
    est = (2 * B_tile * Hp * lane(WpC) * 2      # double-buffered bf16 input block
           + bhw * lane(KKC) * 2                # im2col VMEM scratch (bf16)
           + bhw * Cout_p * 4                   # conv/act f32 intermediate
           + KKC * Cout_p * 2                   # conv weight (bf16, resident)
           + Cout_p * NC_p * 2                  # fc weight (bf16, resident)
           + B_tile * lane(bhw) * 2             # pooling matrix (bf16)
           + (Cout_p + NC_p) * 4                # biases
           + (1 << 20))                         # slack for compiler temporaries
    return int(max(32 << 20, min(56 << 20, 2 * est)))


def make_basemodel_kernel(B_tile, K, H, W, Cin):
    HW = H * W
    KC = K * Cin           # contiguous (kx, ci) lane group for one ky
    KKC = K * KC           # full contraction width

    def kernel(x_ref, wconv_ref, bconv_ref, wfc_ref, bfc_ref, pool_ref,
               out_ref, patch_ref):
        # x_ref:     (B_tile, Hp, Wp*Cin)     bf16  padded images, lane-dense
        # wconv_ref: (K*K*Cin, Cout_p)        bf16  (ky, kx, ci)-major taps
        # bconv_ref: (1, Cout_p)              f32
        # wfc_ref:   (Cout_p, NC_p)           bf16
        # bfc_ref:   (1, NC_p)                f32
        # pool_ref:  (B_tile, B_tile*H*W)     bf16  block-diag 1/(H*W) matrix
        # out_ref:   (B_tile, NC_p)           f32
        # patch_ref: (B_tile*H*W, K*K*Cin)    bf16  im2col scratch (VMEM)

        # ---- in-VMEM im2col: same-orientation slice copies, no relayout ----
        # Patch row (b*H*W + w*H + h) holds x_pad[b, h+ky, w+kx, ci] at lane
        # ky*K*Cin + kx*Cin + ci.  Spatial order within an image is irrelevant
        # (it is mean-pooled), so the w-major order is used because it keeps
        # every copy sublane->sublane / lane->lane (no crossing).
        for b in range(B_tile):
            base = b * HW
            for ky in range(K):
                c0 = ky * KC
                for w in range(W):
                    patch_ref[base + w * H: base + (w + 1) * H, c0:c0 + KC] = \
                        x_ref[b, ky:ky + H, w * Cin: w * Cin + KC]

        # ---- features: ONE MXU matmul, bf16 operands / f32 accumulate ----
        conv = jnp.dot(patch_ref[...], wconv_ref[...],
                       preferred_element_type=jnp.float32)      # (B*HW, Cout_p)
        act = jnp.maximum(conv + bconv_ref[...], 0.0)            # bias + ReLU (f32)

        # ---- avgpool((1,1)) + flatten: ones-block matmul on the MXU ----
        pooled = jnp.dot(pool_ref[...], act.astype(jnp.bfloat16),
                         preferred_element_type=jnp.float32)     # (B_tile, Cout_p)

        # ---- classifier (fused epilogue, bf16 weights, f32 accumulate) ----
        logits = jnp.dot(pooled.astype(jnp.bfloat16), wfc_ref[...],
                         preferred_element_type=jnp.float32) + bfc_ref[...]
        out_ref[...] = logits.astype(out_ref.dtype)

    return kernel


def basemodel_forward(x_nchw, conv_w, conv_b, fc_w, fc_b):
    """x_nchw: (N, Cin, H, W); conv_w: (Cout, Cin, K, K); fc_w: (Cout, num_classes)."""
    N, Cin, H, W = x_nchw.shape
    Cout, _, K, _ = conv_w.shape
    num_classes = fc_w.shape[1]
    assert K % 2 == 1, "pad = K // 2 is PyTorch-'same' only for odd K"
    pad = K // 2

    LANE = 128
    # NOTE: for Cout >= 256 on v6e/v7x a 256-wide output-channel tile would
    # fill the 2x256x256 MXU better; Cout here is tiny so a single 128 tile.
    Cout_p = _round_up(Cout, LANE)
    NC_p = _round_up(num_classes, LANE)
    Hp, Wp = H + 2 * pad, W + 2 * pad
    HW = H * W
    KKC = K * K * Cin

    B_tile = min(N, 8)                      # batch tile per grid step
    num_tiles = pl.cdiv(N, B_tile)
    N_pad = num_tiles * B_tile
    BHW = B_tile * HW

    # ---- one-time glue (plain JAX): layout only, no im2col in HBM ----
    xp = jnp.pad(jnp.transpose(x_nchw, (0, 2, 3, 1)),
                 ((0, N_pad - N), (pad, pad), (pad, pad), (0, 0)))
    x2d = xp.reshape(N_pad, Hp, Wp * Cin).astype(jnp.bfloat16)       # lane-dense

    wconv = jnp.transpose(conv_w, (2, 3, 1, 0)).reshape(KKC, Cout)    # (ky,kx,ci)-major
    wconv = jnp.pad(wconv, ((0, 0), (0, Cout_p - Cout))).astype(jnp.bfloat16)
    bconv = jnp.pad(conv_b, (0, Cout_p - Cout)).reshape(1, Cout_p).astype(jnp.float32)
    wfc = jnp.pad(fc_w, ((0, Cout_p - Cout),
                         (0, NC_p - num_classes))).astype(jnp.bfloat16)
    bfc = jnp.pad(fc_b, (0, NC_p - num_classes)).reshape(1, NC_p).astype(jnp.float32)

    # block-diagonal mean-pooling matrix: pool[b, r] = 1/(H*W)  iff  r // HW == b
    pool = (jnp.arange(BHW)[None, :] // HW) == jnp.arange(B_tile)[:, None]
    pool = (pool.astype(jnp.float32) / float(HW)).astype(jnp.bfloat16)

    kernel = make_basemodel_kernel(B_tile, K, H, W, Cin)

    out = pl.pallas_call(
        kernel,
        out_shape=jax.ShapeDtypeStruct((num_tiles, B_tile, NC_p), jnp.float32),
        grid=(num_tiles,),
        in_specs=[
            # per-step batch of padded images (pipelined across the grid)
            pl.BlockSpec((B_tile, Hp, Wp * Cin), lambda n: (n, 0, 0)),
            # weights / biases / pooling matrix: constant index maps -> resident
            pl.BlockSpec((KKC, Cout_p), lambda n: (0, 0)),
            pl.BlockSpec((1, Cout_p), lambda n: (0, 0)),
            pl.BlockSpec((Cout_p, NC_p), lambda n: (0, 0)),
            pl.BlockSpec((1, NC_p), lambda n: (0, 0)),
            pl.BlockSpec((B_tile, BHW), lambda n: (0, 0)),
        ],
        out_specs=pl.BlockSpec((None, B_tile, NC_p), lambda n: (n, 0, 0)),
        scratch_shapes=[pltpu.VMEM((BHW, KKC), jnp.bfloat16)],   # im2col scratch
        compiler_params=pltpu.CompilerParams(
            dimension_semantics=("parallel",),               # megacore over batch tiles
            vmem_limit_bytes=_pick_vmem_limit(B_tile, Hp, Wp * Cin, HW, KKC,
                                              Cout_p, NC_p)),
    )(x2d, wconv, bconv, wfc, bfc, pool)

    return out.reshape(N_pad, NC_p)[:N, :num_classes]


def basemodel_reference(x_nchw, conv_w, conv_b, fc_w, fc_b):
    """Pure-JAX f32 reference (same math path) for correctness check."""
    N, Cin, H, W = x_nchw.shape
    Cout, _, K, _ = conv_w.shape
    pad = K // 2
    x = jnp.transpose(x_nchw, (0, 2, 3, 1))
    xp = jnp.pad(x, ((0, 0), (pad, pad), (pad, pad), (0, 0)))
    cols = []
    for ky in range(K):
        for kx in range(K):
            cols.append(xp[:, ky:ky + H, kx:kx + W, :])
    patches = jnp.concatenate(cols, axis=-1).reshape(N, H * W, K * K * Cin)
    wmat = jnp.transpose(conv_w, (2, 3, 1, 0)).reshape(K * K * Cin, Cout)
    act = jnp.maximum(jnp.einsum("nps,sc->npc", patches, wmat) + conv_b[None, None, :], 0.0)
    pooled = jnp.mean(act, axis=1)
    return pooled @ fc_w + fc_b[None, :]


if __name__ == "__main__":
    # small shapes consistent with the module's forward
    N, Cin, H, W = 2, 4, 16, 16
    Cout, K = 8, 3
    num_classes = 10

    key = jax.random.PRNGKey(0)
    kx_, kcw, kcb, kfw, kfb = jax.random.split(key, 5)

    x = jax.random.normal(kx_, (N, Cin, H, W), dtype=jnp.float32)
    conv_w = jax.random.normal(kcw, (Cout, Cin, K, K), dtype=jnp.float32) * 0.1
    conv_b = jax.random.normal(kcb, (Cout,), dtype=jnp.float32) * 0.1
    fc_w = jax.random.normal(kfw, (Cout, num_classes), dtype=jnp.float32) * 0.1
    fc_b = jax.random.normal(kfb, (num_classes,), dtype=jnp.float32) * 0.1

    out = basemodel_forward(x, conv_w, conv_b, fc_w, fc_b)
    out = jax.block_until_ready(out)

    ref = basemodel_reference(x, conv_w, conv_b, fc_w, fc_b)
    assert out.shape == (N, num_classes)
    # bf16 MXU operands (conv / pooling / fc) vs f32 reference -> loose tolerance
    assert jnp.allclose(out, ref, atol=2e-2, rtol=2e-2), "mismatch vs reference"

    print("KERNEL_OK")
</pallas_src>

<mosaic_0001>
module attributes {stable_mosaic.version = 11 : i64} {
  func.func @kernel(%arg0: i32, %arg1: memref<2x18x72xbf16, #tpu.memory_space<vmem>>, %arg2: memref<36x128xbf16, #tpu.memory_space<vmem>>, %arg3: memref<1x128xf32, #tpu.memory_space<vmem>>, %arg4: memref<128x128xbf16, #tpu.memory_space<vmem>>, %arg5: memref<1x128xf32, #tpu.memory_space<vmem>>, %arg6: memref<2x512xbf16, #tpu.memory_space<vmem>>, %arg7: memref<1x2x128xf32, #tpu.memory_space<vmem>>, %arg8: memref<512x36xbf16, #tpu.memory_space<vmem>>) attributes {dimension_semantics = [#tpu.dimension_semantics<parallel>], iteration_bounds = array<i64: 1>, scalar_prefetch = 0 : i64, scratch_operands = 1 : i64, tpu.core_type = #tpu.core_type<tc>, window_params = [{transform_indices = @transform_0, window_bounds = array<i64: 2, 18, 72>}, {pipeline_mode = #tpu.pipeline_mode<synchronous>, transform_indices = @transform_1, window_bounds = array<i64: 36, 128>}, {pipeline_mode = #tpu.pipeline_mode<synchronous>, transform_indices = @transform_2, window_bounds = array<i64: 1, 128>}, {pipeline_mode = #tpu.pipeline_mode<synchronous>, transform_indices = @transform_3, window_bounds = array<i64: 128, 128>}, {pipeline_mode = #tpu.pipeline_mode<synchronous>, transform_indices = @transform_4, window_bounds = array<i64: 1, 128>}, {pipeline_mode = #tpu.pipeline_mode<synchronous>, transform_indices = @transform_5, window_bounds = array<i64: 2, 512>}, {transform_indices = @transform_6, window_bounds = array<i64: 1, 2, 128>}]} {
    %c0 = arith.constant 0 : index
    %c0_0 = arith.constant 0 : index
    %c0_1 = arith.constant 0 : index
    %0 = vector.load %arg1[%c0, %c0_0, %c0_1] : memref<2x18x72xbf16, #tpu.memory_space<vmem>>, vector<1x16x12xbf16>
    %1 = vector.shape_cast %0 : vector<1x16x12xbf16> to vector<16x12xbf16>
    %c0_2 = arith.constant 0 : index
    %c0_3 = arith.constant 0 : index
    %2 = vector.load %arg8[%c0_2, %c0_3] : memref<512x36xbf16, #tpu.memory_space<vmem>>, vector<16x12xbf16>
    tpu.vector_store %arg8[%c0_2, %c0_3], %1 {strides = array<i32>} : memref<512x36xbf16, #tpu.memory_space<vmem>>, vector<16x12xbf16>,
    %c0_4 = arith.constant 0 : index
    %c0_5 = arith.constant 0 : index
    %c4 = arith.constant 4 : index
    %3 = vector.load %arg1[%c0_4, %c0_5, %c4] : memref<2x18x72xbf16, #tpu.memory_space<vmem>>, vector<1x16x12xbf16>
    %4 = vector.shape_cast %3 : vector<1x16x12xbf16> to vector<16x12xbf16>
    %c16 = arith.constant 16 : index
    %c0_6 = arith.constant 0 : index
    %5 = vector.load %arg8[%c16, %c0_6] : memref<512x36xbf16, #tpu.memory_space<vmem>>, vector<16x12xbf16>
    tpu.vector_store %arg8[%c16, %c0_6], %4 {strides = array<i32>} : memref<512x36xbf16, #tpu.memory_space<vmem>>, vector<16x12xbf16>,
    %c0_7 = arith.constant 0 : index
    %c0_8 = arith.constant 0 : index
    %c8 = arith.constant 8 : index
    %6 = vector.load %arg1[%c0_7, %c0_8, %c8] : memref<2x18x72xbf16, #tpu.memory_space<vmem>>, vector<1x16x12xbf16>
    %7 = vector.shape_cast %6 : vector<1x16x12xbf16> to vector<16x12xbf16>
    %c32 = arith.constant 32 : index
    %c0_9 = arith.constant 0 : index
    %8 = vector.load %arg8[%c32, %c0_9] : memref<512x36xbf16, #tpu.memory_space<vmem>>, vector<16x12xbf16>
    tpu.vector_store %arg8[%c32, %c0_9], %7 {strides = array<i32>} : memref<512x36xbf16, #tpu.memory_space<vmem>>, vector<16x12xbf16>,
    %c0_10 = arith.constant 0 : index
    %c0_11 = arith.constant 0 : index
    %c12 = arith.constant 12 : index
    %9 = vector.load %arg1[%c0_10, %c0_11, %c12] : memref<2x18x72xbf16, #tpu.memory_space<vmem>>, vector<1x16x12xbf16>
    %10 = vector.shape_cast %9 : vector<1x16x12xbf16> to vector<16x12xbf16>
    %c48 = arith.constant 48 : index
    %c0_12 = arith.constant 0 : index
    %11 = vector.load %arg8[%c48, %c0_12] : memref<512x36xbf16, #tpu.memory_space<vmem>>, vector<16x12xbf16>
    tpu.vector_store %arg8[%c48, %c0_12], %10 {strides = array<i32>} : memref<512x36xbf16, #tpu.memory_space<vmem>>, vector<16x12xbf16>,
    %c0_13 = arith.constant 0 : index
    %c0_14 = arith.constant 0 : index
    %c16_15 = arith.constant 16 : index
    %12 = vector.load %arg1[%c0_13, %c0_14, %c16_15] : memref<2x18x72xbf16, #tpu.memory_space<vmem>>, vector<1x16x12xbf16>
    %13 = vector.shape_cast %12 : vector<1x16x12xbf16> to vector<16x12xbf16>
    %c64 = arith.constant 64 : index
    %c0_16 = arith.constant 0 : index
    %14 = vector.load %arg8[%c64, %c0_16] : memref<512x36xbf16, #tpu.memory_space<vmem>>, vector<16x12xbf16>
    tpu.vector_store %arg8[%c64, %c0_16], %13 {strides = array<i32>} : memref<512x36xbf16, #tpu.memory_space<vmem>>, vector<16x12xbf16>,
    %c0_17 = arith.constant 0 : index
    %c0_18 = arith.constant 0 : index
    %c20 = arith.constant 20 : index
    %15 = vector.load %arg1[%c0_17, %c0_18, %c20] : memref<2x18x72xbf16, #tpu.memory_space<vmem>>, vector<1x16x12xbf16>
    %16 = vector.shape_cast %15 : vector<1x16x12xbf16> to vector<16x12xbf16>
    %c80 = arith.constant 80 : index
    %c0_19 = arith.constant 0 : index
    %17 = vector.load %arg8[%c80, %c0_19] : memref<512x36xbf16, #tpu.memory_space<vmem>>, vector<16x12xbf16>
    tpu.vector_store %arg8[%c80, %c0_19], %16 {strides = array<i32>} : memref<512x36xbf16, #tpu.memory_space<vmem>>, vector<16x12xbf16>,
    %c0_20 = arith.constant 0 : index
    %c0_21 = arith.constant 0 : index
    %c24 = arith.constant 24 : index
    %18 = vector.load %arg1[%c0_20, %c0_21, %c24] : memref<2x18x72xbf16, #tpu.memory_space<vmem>>, vector<1x16x12xbf16>
    %19 = vector.shape_cast %18 : vector<1x16x12xbf16> to vector<16x12xbf16>
    %c96 = arith.constant 96 : index
    %c0_22 = arith.constant 0 : index
    %20 = vector.load %arg8[%c96, %c0_22] : memref<512x36xbf16, #tpu.memory_space<vmem>>, vector<16x12xbf16>
    tpu.vector_store %arg8[%c96, %c0_22], %19 {strides = array<i32>} : memref<512x36xbf16, #tpu.memory_space<vmem>>, vector<16x12xbf16>,
    %c0_23 = arith.constant 0 : index
    %c0_24 = arith.constant 0 : index
    %c28 = arith.constant 28 : index
    %21 = vector.load %arg1[%c0_23, %c0_24, %c28] : memref<2x18x72xbf16, #tpu.memory_space<vmem>>, vector<1x16x12xbf16>
    %22 = vector.shape_cast %21 : vector<1x16x12xbf16> to vector<16x12xbf16>
    %c112 = arith.constant 112 : index
    %c0_25 = arith.constant 0 : index
    %23 = vector.load %arg8[%c112, %c0_25] : memref<512x36xbf16, #tpu.memory_space<vmem>>, vector<16x12xbf16>
    tpu.vector_store %arg8[%c112, %c0_25], %22 {strides = array<i32>} : memref<512x36xbf16, #tpu.memory_space<vmem>>, vector<16x12xbf16>,
    %c0_26 = arith.constant 0 : index
    %c0_27 = arith.constant 0 : index
    %c32_28 = arith.constant 32 : index
    %24 = vector.load %arg1[%c0_26, %c0_27, %c32_28] : memref<2x18x72xbf16, #tpu.memory_space<vmem>>, vector<1x16x12xbf16>
    %25 = vector.shape_cast %24 : vector<1x16x12xbf16> to vector<16x12xbf16>
    %c128 = arith.constant 128 : index
    %c0_29 = arith.constant 0 : index
    %26 = vector.load %arg8[%c128, %c0_29] : memref<512x36xbf16, #tpu.memory_space<vmem>>, vector<16x12xbf16>
    tpu.vector_store %arg8[%c128, %c0_29], %25 {strides = array<i32>} : memref<512x36xbf16, #tpu.memory_space<vmem>>, vector<16x12xbf16>,
    %c0_30 = arith.constant 0 : index
    %c0_31 = arith.constant 0 : index
    %c36 = arith.constant 36 : index
    %27 = vector.load %arg1[%c0_30, %c0_31, %c36] : memref<2x18x72xbf16, #tpu.memory_space<vmem>>, vector<1x16x12xbf16>
    %28 = vector.shape_cast %27 : vector<1x16x12xbf16> to vector<16x12xbf16>
    %c144 = arith.constant 144 : index
    %c0_32 = arith.constant 0 : index
    %29 = vector.load %arg8[%c144, %c0_32] : memref<512x36xbf16, #tpu.memory_space<vmem>>, vector<16x12xbf16>
    tpu.vector_store %arg8[%c144, %c0_32], %28 {strides = array<i32>} : memref<512x36xbf16, #tpu.memory_space<vmem>>, vector<16x12xbf16>,
    %c0_33 = arith.constant 0 : index
    %c0_34 = arith.constant 0 : index
    %c40 = arith.constant 40 : index
    %30 = vector.load %arg1[%c0_33, %c0_34, %c40] : memref<2x18x72xbf16, #tpu.memory_space<vmem>>, vector<1x16x12xbf16>
    %31 = vector.shape_cast %30 : vector<1x16x12xbf16> to vector<16x12xbf16>
    %c160 = arith.constant 160 : index
    %c0_35 = arith.constant 0 : index
    %32 = vector.load %arg8[%c160, %c0_35] : memref<512x36xbf16, #tpu.memory_space<vmem>>, vector<16x12xbf16>
    tpu.vector_store %arg8[%c160, %c0_35], %31 {strides = array<i32>} : memref<512x36xbf16, #tpu.memory_space<vmem>>, vector<16x12xbf16>,
    %c0_36 = arith.constant 0 : index
    %c0_37 = arith.constant 0 : index
    %c44 = arith.constant 44 : index
    %33 = vector.load %arg1[%c0_36, %c0_37, %c44] : memref<2x18x72xbf16, #tpu.memory_space<vmem>>, vector<1x16x12xbf16>
    %34 = vector.shape_cast %33 : vector<1x16x12xbf16> to vector<16x12xbf16>
    %c176 = arith.constant 176 : index
    %c0_38 = arith.constant 0 : index
    %35 = vector.load %arg8[%c176, %c0_38] : memref<512x36xbf16, #tpu.memory_space<vmem>>, vector<16x12xbf16>
    tpu.vector_store %arg8[%c176, %c0_38], %34 {strides = array<i32>} : memref<512x36xbf16, #tpu.memory_space<vmem>>, vector<16x12xbf16>,
    %c0_39 = arith.constant 0 : index
    %c0_40 = arith.constant 0 : index
    %c48_41 = arith.constant 48 : index
    %36 = vector.load %arg1[%c0_39, %c0_40, %c48_41] : memref<2x18x72xbf16, #tpu.memory_space<vmem>>, vector<1x16x12xbf16>
    %37 = vector.shape_cast %36 : vector<1x16x12xbf16> to vector<16x12xbf16>
    %c192 = arith.constant 192 : index
    %c0_42 = arith.constant 0 : index
    %38 = vector.load %arg8[%c192, %c0_42] : memref<512x36xbf16, #tpu.memory_space<vmem>>, vector<16x12xbf16>
    tpu.vector_store %arg8[%c192, %c0_42], %37 {strides = array<i32>} : memref<512x36xbf16, #tpu.memory_space<vmem>>, vector<16x12xbf16>,
    %c0_43 = arith.constant 0 : index
    %c0_44 = arith.constant 0 : index
    %c52 = arith.constant 52 : index
    %39 = vector.load %arg1[%c0_43, %c0_44, %c52] : memref<2x18x72xbf16, #tpu.memory_space<vmem>>, vector<1x16x12xbf16>
    %40 = vector.shape_cast %39 : vector<1x16x12xbf16> to vector<16x12xbf16>
    %c208 = arith.constant 208 : index
    %c0_45 = arith.constant 0 : index
    %41 = vector.load %arg8[%c208, %c0_45] : memref<512x36xbf16, #tpu.memory_space<vmem>>, vector<16x12xbf16>
    tpu.vector_store %arg8[%c208, %c0_45], %40 {strides = array<i32>} : memref<512x36xbf16, #tpu.memory_space<vmem>>, vector<16x12xbf16>,
    %c0_46 = arith.constant 0 : index
    %c0_47 = arith.constant 0 : index
    %c56 = arith.constant 56 : index
    %42 = vector.load %arg1[%c0_46, %c0_47, %c56] : memref<2x18x72xbf16, #tpu.memory_space<vmem>>, vector<1x16x12xbf16>
    %43 = vector.shape_cast %42 : vector<1x16x12xbf16> to vector<16x12xbf16>
    %c224 = arith.constant 224 : index
    %c0_48 = arith.constant 0 : index
    %44 = vector.load %arg8[%c224, %c0_48] : memref<512x36xbf16, #tpu.memory_space<vmem>>, vector<16x12xbf16>
    tpu.vector_store %arg8[%c224, %c0_48], %43 {strides = array<i32>} : memref<512x36xbf16, #tpu.memory_space<vmem>>, vector<16x12xbf16>,
    %c0_49 = arith.constant 0 : index
    %c0_50 = arith.constant 0 : index
    %c60 = arith.constant 60 : index
    %45 = vector.load %arg1[%c0_49, %c0_50, %c60] : memref<2x18x72xbf16, #tpu.memory_space<vmem>>, vector<1x16x12xbf16>
    %46 = vector.shape_cast %45 : vector<1x16x12xbf16> to vector<16x12xbf16>
    %c240 = arith.constant 240 : index
    %c0_51 = arith.constant 0 : index
    %47 = vector.load %arg8[%c240, %c0_51] : memref<512x36xbf16, #tpu.memory_space<vmem>>, vector<16x12xbf16>
    tpu.vector_store %arg8[%c240, %c0_51], %46 {strides = array<i32>} : memref<512x36xbf16, #tpu.memory_space<vmem>>, vector<16x12xbf16>,
    %c0_52 = arith.constant 0 : index
    %c1 = arith.constant 1 : index
    %c0_53 = arith.constant 0 : index
    %48 = vector.load %arg1[%c0_52, %c1, %c0_53] : memref<2x18x72xbf16, #tpu.memory_space<vmem>>, vector<1x16x12xbf16>
    %49 = vector.shape_cast %48 : vector<1x16x12xbf16> to vector<16x12xbf16>
    %c0_54 = arith.constant 0 : index
    %c12_55 = arith.constant 12 : index
    %50 = vector.load %arg8[%c0_54, %c12_55] : memref<512x36xbf16, #tpu.memory_space<vmem>>, vector<16x12xbf16>
    tpu.vector_store %arg8[%c0_54, %c12_55], %49 {strides = array<i32>} : memref<512x36xbf16, #tpu.memory_space<vmem>>, vector<16x12xbf16>,
    %c0_56 = arith.constant 0 : index
    %c1_57 = arith.constant 1 : index
    %c4_58 = arith.constant 4 : index
    %51 = vector.load %arg1[%c0_56, %c1_57, %c4_58] : memref<2x18x72xbf16, #tpu.memory_space<vmem>>, vector<1x16x12xbf16>
    %52 = vector.shape_cast %51 : vector<1x16x12xbf16> to vector<16x12xbf16>
    %c16_59 = arith.constant 16 : index
    %c12_60 = arith.constant 12 : index
    %53 = vector.load %arg8[%c16_59, %c12_60] : memref<512x36xbf16, #tpu.memory_space<vmem>>, vector<16x12xbf16>
    tpu.vector_store %arg8[%c16_59, %c12_60], %52 {strides = array<i32>} : memref<512x36xbf16, #tpu.memory_space<vmem>>, vector<16x12xbf16>,
    %c0_61 = arith.constant 0 : index
    %c1_62 = arith.constant 1 : index
    %c8_63 = arith.constant 8 : index
    %54 = vector.load %arg1[%c0_61, %c1_62, %c8_63] : memref<2x18x72xbf16, #tpu.memory_space<vmem>>, vector<1x16x12xbf16>
    %55 = vector.shape_cast %54 : vector<1x16x12xbf16> to vector<16x12xbf16>
    %c32_64 = arith.constant 32 : index
    %c12_65 = arith.constant 12 : index
    %56 = vector.load %arg8[%c32_64, %c12_65] : memref<512x36xbf16, #tpu.memory_space<vmem>>, vector<16x12xbf16>
    tpu.vector_store %arg8[%c32_64, %c12_65], %55 {strides = array<i32>} : memref<512x36xbf16, #tpu.memory_space<vmem>>, vector<16x12xbf16>,
    %c0_66 = arith.constant 0 : index
    %c1_67 = arith.constant 1 : index
    %c12_68 = arith.constant 12 : index
    %57 = vector.load %arg1[%c0_66, %c1_67, %c12_68] : memref<2x18x72xbf16, #tpu.memory_space<vmem>>, vector<1x16x12xbf16>
    %58 = vector.shape_cast %57 : vector<1x16x12xbf16> to vector<16x12xbf16>
    %c48_69 = arith.constant 48 : index
    %c12_70 = arith.constant 12 : index
    %59 = vector.load %arg8[%c48_69, %c12_70] : memref<512x36xbf16, #tpu.memory_space<vmem>>, vector<16x12xbf16>
    tpu.vector_store %arg8[%c48_69, %c12_70], %58 {strides = array<i32>} : memref<512x36xbf16, #tpu.memory_space<vmem>>, vector<16x12xbf16>,
    %c0_71 = arith.constant 0 : index
    %c1_72 = arith.constant 1 : index
    %c16_73 = arith.constant 16 : index
    %60 = vector.load %arg1[%c0_71, %c1_72, %c16_73] : memref<2x18x72xbf16, #tpu.memory_space<vmem>>, vector<1x16x12xbf16>
    %61 = vector.shape_cast %60 : vector<1x16x12xbf16> to vector<16x12xbf16>
    %c64_74 = arith.constant 64 : index
    %c12_75 = arith.constant 12 : index
    %62 = vector.load %arg8[%c64_74, %c12_75] : memref<512x36xbf16, #tpu.memory_space<vmem>>, vector<16x12xbf16>
    tpu.vector_store %arg8[%c64_74, %c12_75], %61 {strides = array<i32>} : memref<512x36xbf16, #tpu.memory_space<vmem>>, vector<16x12xbf16>,
    %c0_76 = arith.constant 0 : index
    %c1_77 = arith.constant 1 : index
    %c20_78 = arith.constant 20 : index
    %63 = vector.load %arg1[%c0_76, %c1_77, %c20_78] : memref<2x18x72xbf16, #tpu.memory_space<vmem>>, vector<1x16x12xbf16>
    %64 = vector.shape_cast %63 : vector<1x16x12xbf16> to vector<16x12xbf16>
    %c80_79 = arith.constant 80 : index
    %c12_80 = arith.constant 12 : index
    %65 = vector.load %arg8[%c80_79, %c12_80] : memref<512x36xbf16, #tpu.memory_space<vmem>>, vector<16x12xbf16>
    tpu.vector_store %arg8[%c80_79, %c12_80], %64 {strides = array<i32>} : memref<512x36xbf16, #tpu.memory_space<vmem>>, vector<16x12xbf16>,
    %c0_81 = arith.constant 0 : index
    %c1_82 = arith.constant 1 : index
    %c24_83 = arith.constant 24 : index
    %66 = vector.load %arg1[%c0_81, %c1_82, %c24_83] : memref<2x18x72xbf16, #tpu.memory_space<vmem>>, vector<1x16x12xbf16>
    %67 = vector.shape_cast %66 : vector<1x16x12xbf16> to vector<16x12xbf16>
    %c96_84 = arith.constant 96 : index
    %c12_85 = arith.constant 12 : index
    %68 = vector.load %arg8[%c96_84, %c12_85] : memref<512x36xbf16, #tpu.memory_space<vmem>>, vector<16x12xbf16>
    tpu.vector_store %arg8[%c96_84, %c12_85], %67 {strides = array<i32>} : memref<512x36xbf16, #tpu.memory_space<vmem>>, vector<16x12xbf16>,
    %c0_86 = arith.constant 0 : index
    %c1_87 = arith.constant 1 : index
    %c28_88 = arith.constant 28 : index
    %69 = vector.load %arg1[%c0_86, %c1_87, %c28_88] : memref<2x18x72xbf16, #tpu.memory_space<vmem>>, vector<1x16x12xbf16>
    %70 = vector.shape_cast %69 : vector<1x16x12xbf16> to vector<16x12xbf16>
    %c112_89 = arith.constant 112 : index
    %c12_90 = arith.constant 12 : index
    %71 = vector.load %arg8[%c112_89, %c12_90] : memref<512x36xbf16, #tpu.memory_space<vmem>>, vector<16x12xbf16>
    tpu.vector_store %arg8[%c112_89, %c12_90], %70 {strides = array<i32>} : memref<512x36xbf16, #tpu.memory_space<vmem>>, vector<16x12xbf16>,
    %c0_91 = arith.constant 0 : index
    %c1_92 = arith.constant 1 : index
    %c32_93 = arith.constant 32 : index
    %72 = vector.load %arg1[%c0_91, %c1_92, %c32_93] : memref<2x18x72xbf16, #tpu.memory_space<vmem>>, vector<1x16x12xbf16>
    %73 = vector.shape_cast %72 : vector<1x16x12xbf16> to vector<16x12xbf16>
    %c128_94 = arith.constant 128 : index
    %c12_95 = arith.constant 12 : index
    %74 = vector.load %arg8[%c128_94, %c12_95] : memref<512x36xbf16, #tpu.memory_space<vmem>>, vector<16x12xbf16>
    tpu.vector_store %arg8[%c128_94, %c12_95], %73 {strides = array<i32>} : memref<512x36xbf16, #tpu.memory_space<vmem>>, vector<16x12xbf16>,
    %c0_96 = arith.constant 0 : index
    %c1_97 = arith.constant 1 : index
    %c36_98 = arith.constant 36 : index
    %75 = vector.load %arg1[%c0_96, %c1_97, %c36_98] : memref<2x18x72xbf16, #tpu.memory_space<vmem>>, vector<1x16x12xbf16>
    %76 = vector.shape_cast %75 : vector<1x16x12xbf16> to vector<16x12xbf16>
    %c144_99 = arith.constant 144 : index
    %c12_100 = arith.constant 12 : index
    %77 = vector.load %arg8[%c144_99, %c12_100] : memref<512x36xbf16, #tpu.memory_space<vmem>>, vector<16x12xbf16>
    tpu.vector_store %arg8[%c144_99, %c12_100], %76 {strides = array<i32>} : memref<512x36xbf16, #tpu.memory_space<vmem>>, vector<16x12xbf16>,
    %c0_101 = arith.constant 0 : index
    %c1_102 = arith.constant 1 : index
    %c40_103 = arith.constant 40 : index
    %78 = vector.load %arg1[%c0_101, %c1_102, %c40_103] : memref<2x18x72xbf16, #tpu.memory_space<vmem>>, vector<1x16x12xbf16>
    %79 = vector.shape_cast %78 : vector<1x16x12xbf16> to vector<16x12xbf16>
    %c160_104 = arith.constant 160 : index
    %c12_105 = arith.constant 12 : index
    %80 = vector.load %arg8[%c160_104, %c12_105] : memref<512x36xbf16, #tpu.memory_space<vmem>>, vector<16x12xbf16>
    tpu.vector_store %arg8[%c160_104, %c12_105], %79 {strides = array<i32>} : memref<512x36xbf16, #tpu.memory_space<vmem>>, vector<16x12xbf16>,
    %c0_106 = arith.constant 0 : index
    %c1_107 = arith.constant 1 : index
    %c44_108 = arith.constant 44 : index
    %81 = vector.load %arg1[%c0_106, %c1_107, %c44_108] : memref<2x18x72xbf16, #tpu.memory_space<vmem>>, vector<1x16x12xbf16>
    %82 = vector.shape_cast %81 : vector<1x16x12xbf16> to vector<16x12xbf16>
    %c176_109 = arith.constant 176 : index
    %c12_110 = arith.constant 12 : index
    %83 = vector.load %arg8[%c176_109, %c12_110] : memref<512x36xbf16, #tpu.memory_space<vmem>>, vector<16x12xbf16>
    tpu.vector_store %arg8[%c176_109, %c12_110], %82 {strides = array<i32>} : memref<512x36xbf16, #tpu.memory_space<vmem>>, vector<16x12xbf16>,
    %c0_111 = arith.constant 0 : index
    %c1_112 = arith.constant 1 : index
    %c48_113 = arith.constant 48 : index
    %84 = vector.load %arg1[%c0_111, %c1_112, %c48_113] : memref<2x18x72xbf16, #tpu.memory_space<vmem>>, vector<1x16x12xbf16>
    %85 = vector.shape_cast %84 : vector<1x16x12xbf16> to vector<16x12xbf16>
    %c192_114 = arith.constant 192 : index
    %c12_115 = arith.constant 12 : index
    %86 = vector.load %arg8[%c192_114, %c12_115] : memref<512x36xbf16, #tpu.memory_space<vmem>>, vector<16x12xbf16>
    tpu.vector_store %arg8[%c192_114, %c12_115], %85 {strides = array<i32>} : memref<512x36xbf16, #tpu.memory_space<vmem>>, vector<16x12xbf16>,
    %c0_116 = arith.constant 0 : index
    %c1_117 = arith.constant 1 : index
    %c52_118 = arith.constant 52 : index
    %87 = vector.load %arg1[%c0_116, %c1_117, %c52_118] : memref<2x18x72xbf16, #tpu.memory_space<vmem>>, vector<1x16x12xbf16>
    %88 = vector.shape_cast %87 : vector<1x16x12xbf16> to vector<16x12xbf16>
    %c208_119 = arith.constant 208 : index
    %c12_120 = arith.constant 12 : index
    %89 = vector.load %arg8[%c208_119, %c12_120] : memref<512x36xbf16, #tpu.memory_space<vmem>>, vector<16x12xbf16>
    tpu.vector_store %arg8[%c208_119, %c12_120], %88 {strides = array<i32>} : memref<512x36xbf16, #tpu.memory_space<vmem>>, vector<16x12xbf16>,
    %c0_121 = arith.constant 0 : index
    %c1_122 = arith.constant 1 : index
    %c56_123 = arith.constant 56 : index
    %90 = vector.load %arg1[%c0_121, %c1_122, %c56_123] : memref<2x18x72xbf16, #tpu.memory_space<vmem>>, vector<1x16x12xbf16>
    %91 = vector.shape_cast %90 : vector<1x16x12xbf16> to vector<16x12xbf16>
    %c224_124 = arith.constant 224 : index
    %c12_125 = arith.constant 12 : index
    %92 = vector.load %arg8[%c224_124, %c12_125] : memref<512x36xbf16, #tpu.memory_space<vmem>>, vector<16x12xbf16>
    tpu.vector_store %arg8[%c224_124, %c12_125], %91 {strides = array<i32>} : memref<512x36xbf16, #tpu.memory_space<vmem>>, vector<16x12xbf16>,
    %c0_126 = arith.constant 0 : index
    %c1_127 = arith.constant 1 : index
    %c60_128 = arith.constant 60 : index
    %93 = vector.load %arg1[%c0_126, %c1_127, %c60_128] : memref<2x18x72xbf16, #tpu.memory_space<vmem>>, vector<1x16x12xbf16>
    %94 = vector.shape_cast %93 : vector<1x16x12xbf16> to vector<16x12xbf16>
    %c240_129 = arith.constant 240 : index
    %c12_130 = arith.constant 12 : index
    %95 = vector.load %arg8[%c240_129, %c12_130] : memref<512x36xbf16, #tpu.memory_space<vmem>>, vector<16x12xbf16>
    tpu.vector_store %arg8[%c240_129, %c12_130], %94 {strides = array<i32>} : memref<512x36xbf16, #tpu.memory_space<vmem>>, vector<16x12xbf16>,
    %c0_131 = arith.constant 0 : index
    %c2 = arith.constant 2 : index
    %c0_132 = arith.constant 0 : index
    %96 = vector.load %arg1[%c0_131, %c2, %c0_132] : memref<2x18x72xbf16, #tpu.memory_space<vmem>>, vector<1x16x12xbf16>
    %97 = vector.shape_cast %96 : vector<1x16x12xbf16> to vector<16x12xbf16>
    %c0_133 = arith.constant 0 : index
    %c24_134 = arith.constant 24 : index
    %98 = vector.load %arg8[%c0_133, %c24_134] : memref<512x36xbf16, #tpu.memory_space<vmem>>, vector<16x12xbf16>
    tpu.vector_store %arg8[%c0_133, %c24_134], %97 {strides = array<i32>} : memref<512x36xbf16, #tpu.memory_space<vmem>>, vector<16x12xbf16>,
    %c0_135 = arith.constant 0 : index
    %c2_136 = arith.constant 2 : index
    %c4_137 = arith.constant 4 : index
    %99 = vector.load %arg1[%c0_135, %c2_136, %c4_137] : memref<2x18x72xbf16, #tpu.memory_space<vmem>>, vector<1x16x12xbf16>
    %100 = vector.shape_cast %99 : vector<1x16x12xbf16> to vector<16x12xbf16>
    %c16_138 = arith.constant 16 : index
    %c24_139 = arith.constant 24 : index
    %101 = vector.load %arg8[%c16_138, %c24_139] : memref<512x36xbf16, #tpu.memory_space<vmem>>, vector<16x12xbf16>
    tpu.vector_store %arg8[%c16_138, %c24_139], %100 {strides = array<i32>} : memref<512x36xbf16, #tpu.memory_space<vmem>>, vector<16x12xbf16>,
    %c0_140 = arith.constant 0 : index
    %c2_141 = arith.constant 2 : index
    %c8_142 = arith.constant 8 : index
    %102 = vector.load %arg1[%c0_140, %c2_141, %c8_142] : memref<2x18x72xbf16, #tpu.memory_space<vmem>>, vector<1x16x12xbf16>
    %103 = vector.shape_cast %102 : vector<1x16x12xbf16> to vector<16x12xbf16>
    %c32_143 = arith.constant 32 : index
    %c24_144 = arith.constant 24 : index
    %104 = vector.load %arg8[%c32_143, %c24_144] : memref<512x36xbf16, #tpu.memory_space<vmem>>, vector<16x12xbf16>
    tpu.vector_store %arg8[%c32_143, %c24_144], %103 {strides = array<i32>} : memref<512x36xbf16, #tpu.memory_space<vmem>>, vector<16x12xbf16>,
    %c0_145 = arith.constant 0 : index
    %c2_146 = arith.constant 2 : index
    %c12_147 = arith.constant 12 : index
    %105 = vector.load %arg1[%c0_145, %c2_146, %c12_147] : memref<2x18x72xbf16, #tpu.memory_space<vmem>>, vector<1x16x12xbf16>
    %106 = vector.shape_cast %105 : vector<1x16x12xbf16> to vector<16x12xbf16>
    %c48_148 = arith.constant 48 : index
    %c24_149 = arith.constant 24 : index
    %107 = vector.load %arg8[%c48_148, %c24_149] : memref<512x36xbf16, #tpu.memory_space<vmem>>, vector<16x12xbf16>
    tpu.vector_store %arg8[%c48_148, %c24_149], %106 {strides = array<i32>} : memref<512x36xbf16, #tpu.memory_space<vmem>>, vector<16x12xbf16>,
    %c0_150 = arith.constant 0 : index
    %c2_151 = arith.constant 2 : index
    %c16_152 = arith.constant 16 : index
    %108 = vector.load %arg1[%c0_150, %c2_151, %c16_152] : memref<2x18x72xbf16, #tpu.memory_space<vmem>>, vector<1x16x12xbf16>
    %109 = vector.shape_cast %108 : vector<1x16x12xbf16> to vector<16x12xbf16>
    %c64_153 = arith.constant 64 : index
    %c24_154 = arith.constant 24 : index
    %110 = vector.load %arg8[%c64_153, %c24_154] : memref<512x36xbf16, #tpu.memory_space<vmem>>, vector<16x12xbf16>
    tpu.vector_store %arg8[%c64_153, %c24_154], %109 {strides = array<i32>} : memref<512x36xbf16, #tpu.memory_space<vmem>>, vector<16x12xbf16>,
    %c0_155 = arith.constant 0 : index
    %c2_156 = arith.constant 2 : index
    %c20_157 = arith.constant 20 : index
    %111 = vector.load %arg1[%c0_155, %c2_156, %c20_157] : memref<2x18x72xbf16, #tpu.memory_space<vmem>>, vector<1x16x12xbf16>
    %112 = vector.shape_cast %111 : vector<1x16x12xbf16> to vector<16x12xbf16>
    %c80_158 = arith.constant 80 : index
    %c24_159 = arith.constant 24 : index
    %113 = vector.load %arg8[%c80_158, %c24_159] : memref<512x36xbf16, #tpu.memory_space<vmem>>, vector<16x12xbf16>
    tpu.vector_store %arg8[%c80_158, %c24_159], %112 {strides = array<i32>} : memref<512x36xbf16, #tpu.memory_space<vmem>>, vector<16x12xbf16>,
    %c0_160 = arith.constant 0 : index
    %c2_161 = arith.constant 2 : index
    %c24_162 = arith.constant 24 : index
    %114 = vector.load %arg1[%c0_160, %c2_161, %c24_162] : memref<2x18x72xbf16, #tpu.memory_space<vmem>>, vector<1x16x12xbf16>
    %115 = vector.shape_cast %114 : vector<1x16x12xbf16> to vector<16x12xbf16>
    %c96_163 = arith.constant 96 : index
    %c24_164 = arith.constant 24 : index
    %116 = vector.load %arg8[%c96_163, %c24_164] : memref<512x36xbf16, #tpu.memory_space<vmem>>, vector<16x12xbf16>
    tpu.vector_store %arg8[%c96_163, %c24_164], %115 {strides = array<i32>} : memref<512x36xbf16, #tpu.memory_space<vmem>>, vector<16x12xbf16>,
    %c0_165 = arith.constant 0 : index
    %c2_166 = arith.constant 2 : index
    %c28_167 = arith.constant 28 : index
    %117 = vector.load %arg1[%c0_165, %c2_166, %c28_167] : memref<2x18x72xbf16, #tpu.memory_space<vmem>>, vector<1x16x12xbf16>
    %118 = vector.shape_cast %117 : vector<1x16x12xbf16> to vector<16x12xbf16>
    %c112_168 = arith.constant 112 : index
    %c24_169 = arith.constant 24 : index
    %119 = vector.load %arg8[%c112_168, %c24_169] : memref<512x36xbf16, #tpu.memory_space<vmem>>, vector<16x12xbf16>
    tpu.vector_store %arg8[%c112_168, %c24_169], %118 {strides = array<i32>} : memref<512x36xbf16, #tpu.memory_space<vmem>>, vector<16x12xbf16>,
    %c0_170 = arith.constant 0 : index
    %c2_171 = arith.constant 2 : index
    %c32_172 = arith.constant 32 : index
    %120 = vector.load %arg1[%c0_170, %c2_171, %c32_172] : memref<2x18x72xbf16, #tpu.memory_space<vmem>>, vector<1x16x12xbf16>
    %121 = vector.shape_cast %120 : vector<1x16x12xbf16> to vector<16x12xbf16>
    %c128_173 = arith.constant 128 : index
    %c24_174 = arith.constant 24 : index
    %122 = vector.load %arg8[%c128_173, %c24_174] : memref<512x36xbf16, #tpu.memory_space<vmem>>, vector<16x12xbf16>
    tpu.vector_store %arg8[%c128_173, %c24_174], %121 {strides = array<i32>} : memref<512x36xbf16, #tpu.memory_space<vmem>>, vector<16x12xbf16>,
    %c0_175 = arith.constant 0 : index
    %c2_176 = arith.constant 2 : index
    %c36_177 = arith.constant 36 : index
    %123 = vector.load %arg1[%c0_175, %c2_176, %c36_177] : memref<2x18x72xbf16, #tpu.memory_space<vmem>>, vector<1x16x12xbf16>
    %124 = vector.shape_cast %123 : vector<1x16x12xbf16> to vector<16x12xbf16>
    %c144_178 = arith.constant 144 : index
    %c24_179 = arith.constant 24 : index
    %125 = vector.load %arg8[%c144_178, %c24_179] : memref<512x36xbf16, #tpu.memory_space<vmem>>, vector<16x12xbf16>
    tpu.vector_store %arg8[%c144_178, %c24_179], %124 {strides = array<i32>} : memref<512x36xbf16, #tpu.memory_space<vmem>>, vector<16x12xbf16>,
    %c0_180 = arith.constant 0 : index
    %c2_181 = arith.constant 2 : index
    %c40_182 = arith.constant 40 : index
    %126 = vector.load %arg1[%c0_180, %c2_181, %c40_182] : memref<2x18x72xbf16, #tpu.memory_space<vmem>>, vector<1x16x12xbf16>
    %127 = vector.shape_cast %126 : vector<1x16x12xbf16> to vector<16x12xbf16>
    %c160_183 = arith.constant 160 : index
    %c24_184 = arith.constant 24 : index
    %128 = vector.load %arg8[%c160_183, %c24_184] : memref<512x36xbf16, #tpu.memory_space<vmem>>, vector<16x12xbf16>
    tpu.vector_store %arg8[%c160_183, %c24_184], %127 {strides = array<i32>} : memref<512x36xbf16, #tpu.memory_space<vmem>>, vector<16x12xbf16>,
    %c0_185 = arith.constant 0 : index
    %c2_186 = arith.constant 2 : index
    %c44_187 = arith.constant 44 : index
    %129 = vector.load %arg1[%c0_185, %c2_186, %c44_187] : memref<2x18x72xbf16, #tpu.memory_space<vmem>>, vector<1x16x12xbf16>
    %130 = vector.shape_cast %129 : vector<1x16x12xbf16> to vector<16x12xbf16>
    %c176_188 = arith.constant 176 : index
    %c24_189 = arith.constant 24 : index
    %131 = vector.load %arg8[%c176_188, %c24_189] : memref<512x36xbf16, #tpu.memory_space<vmem>>, vector<16x12xbf16>
    tpu.vector_store %arg8[%c176_188, %c24_189], %130 {strides = array<i32>} : memref<512x36xbf16, #tpu.memory_space<vmem>>, vector<16x12xbf16>,
    %c0_190 = arith.constant 0 : index
    %c2_191 = arith.constant 2 : index
    %c48_192 = arith.constant 48 : index
    %132 = vector.load %arg1[%c0_190, %c2_191, %c48_192] : memref<2x18x72xbf16, #tpu.memory_space<vmem>>, vector<1x16x12xbf16>
    %133 = vector.shape_cast %132 : vector<1x16x12xbf16> to vector<16x12xbf16>
    %c192_193 = arith.constant 192 : index
    %c24_194 = arith.constant 24 : index
    %134 = vector.load %arg8[%c192_193, %c24_194] : memref<512x36xbf16, #tpu.memory_space<vmem>>, vector<16x12xbf16>
    tpu.vector_store %arg8[%c192_193, %c24_194], %133 {strides = array<i32>} : memref<512x36xbf16, #tpu.memory_space<vmem>>, vector<16x12xbf16>,
    %c0_195 = arith.constant 0 : index
    %c2_196 = arith.constant 2 : index
    %c52_197 = arith.constant 52 : index
    %135 = vector.load %arg1[%c0_195, %c2_196, %c52_197] : memref<2x18x72xbf16, #tpu.memory_space<vmem>>, vector<1x16x12xbf16>
    %136 = vector.shape_cast %135 : vector<1x16x12xbf16> to vector<16x12xbf16>
    %c208_198 = arith.constant 208 : index
    %c24_199 = arith.constant 24 : index
    %137 = vector.load %arg8[%c208_198, %c24_199] : memref<512x36xbf16, #tpu.memory_space<vmem>>, vector<16x12xbf16>
    tpu.vector_store %arg8[%c208_198, %c24_199], %136 {strides = array<i32>} : memref<512x36xbf16, #tpu.memory_space<vmem>>, vector<16x12xbf16>,
    %c0_200 = arith.constant 0 : index
    %c2_201 = arith.constant 2 : index
    %c56_202 = arith.constant 56 : index
    %138 = vector.load %arg1[%c0_200, %c2_201, %c56_202] : memref<2x18x72xbf16, #tpu.memory_space<vmem>>, vector<1x16x12xbf16>
    %139 = vector.shape_cast %138 : vector<1x16x12xbf16> to vector<16x12xbf16>
    %c224_203 = arith.constant 224 : index
    %c24_204 = arith.constant 24 : index
    %140 = vector.load %arg8[%c224_203, %c24_204] : memref<512x36xbf16, #tpu.memory_space<vmem>>, vector<16x12xbf16>
    tpu.vector_store %arg8[%c224_203, %c24_204], %139 {strides = array<i32>} : memref<512x36xbf16, #tpu.memory_space<vmem>>, vector<16x12xbf16>,
    %c0_205 = arith.constant 0 : index
    %c2_206 = arith.constant 2 : index
    %c60_207 = arith.constant 60 : index
    %141 = vector.load %arg1[%c0_205, %c2_206, %c60_207] : memref<2x18x72xbf16, #tpu.memory_space<vmem>>, vector<1x16x12xbf16>
    %142 = vector.shape_cast %141 : vector<1x16x12xbf16> to vector<16x12xbf16>
    %c240_208 = arith.constant 240 : index
    %c24_209 = arith.constant 24 : index
    %143 = vector.load %arg8[%c240_208, %c24_209] : memref<512x36xbf16, #tpu.memory_space<vmem>>, vector<16x12xbf16>
    tpu.vector_store %arg8[%c240_208, %c24_209], %142 {strides = array<i32>} : memref<512x36xbf16, #tpu.memory_space<vmem>>, vector<16x12xbf16>,
    %c1_210 = arith.constant 1 : index
    %c0_211 = arith.constant 0 : index
    %c0_212 = arith.constant 0 : index
    %144 = vector.load %arg1[%c1_210, %c0_211, %c0_212] : memref<2x18x72xbf16, #tpu.memory_space<vmem>>, vector<1x16x12xbf16>
    %145 = vector.shape_cast %144 : vector<1x16x12xbf16> to vector<16x12xbf16>
    %c256 = arith.constant 256 : index
    %c0_213 = arith.constant 0 : index
    %146 = vector.load %arg8[%c256, %c0_213] : memref<512x36xbf16, #tpu.memory_space<vmem>>, vector<16x12xbf16>
    tpu.vector_store %arg8[%c256, %c0_213], %145 {strides = array<i32>} : memref<512x36xbf16, #tpu.memory_space<vmem>>, vector<16x12xbf16>,
    %c1_214 = arith.constant 1 : index
    %c0_215 = arith.constant 0 : index
    %c4_216 = arith.constant 4 : index
    %147 = vector.load %arg1[%c1_214, %c0_215, %c4_216] : memref<2x18x72xbf16, #tpu.memory_space<vmem>>, vector<1x16x12xbf16>
    %148 = vector.shape_cast %147 : vector<1x16x12xbf16> to vector<16x12xbf16>
    %c272 = arith.constant 272 : index
    %c0_217 = arith.constant 0 : index
    %149 = vector.load %arg8[%c272, %c0_217] : memref<512x36xbf16, #tpu.memory_space<vmem>>, vector<16x12xbf16>
    tpu.vector_store %arg8[%c272, %c0_217], %148 {strides = array<i32>} : memref<512x36xbf16, #tpu.memory_space<vmem>>, vector<16x12xbf16>,
    %c1_218 = arith.constant 1 : index
    %c0_219 = arith.constant 0 : index
    %c8_220 = arith.constant 8 : index
    %150 = vector.load %arg1[%c1_218, %c0_219, %c8_220] : memref<2x18x72xbf16, #tpu.memory_space<vmem>>, vector<1x16x12xbf16>
    %151 = vector.shape_cast %150 : vector<1x16x12xbf16> to vector<16x12xbf16>
    %c288 = arith.constant 288 : index
    %c0_221 = arith.constant 0 : index
    %152 = vector.load %arg8[%c288, %c0_221] : memref<512x36xbf16, #tpu.memory_space<vmem>>, vector<16x12xbf16>
    tpu.vector_store %arg8[%c288, %c0_221], %151 {strides = array<i32>} : memref<512x36xbf16, #tpu.memory_space<vmem>>, vector<16x12xbf16>,
    %c1_222 = arith.constant 1 : index
    %c0_223 = arith.constant 0 : index
    %c12_224 = arith.constant 12 : index
    %153 = vector.load %arg1[%c1_222, %c0_223, %c12_224] : memref<2x18x72xbf16, #tpu.memory_space<vmem>>, vector<1x16x12xbf16>
    %154 = vector.shape_cast %153 : vector<1x16x12xbf16> to vector<16x12xbf16>
    %c304 = arith.constant 304 : index
    %c0_225 = arith.constant 0 : index
    %155 = vector.load %arg8[%c304, %c0_225] : memref<512x36xbf16, #tpu.memory_space<vmem>>, vector<16x12xbf16>
    tpu.vector_store %arg8[%c304, %c0_225], %154 {strides = array<i32>} : memref<512x36xbf16, #tpu.memory_space<vmem>>, vector<16x12xbf16>,
    %c1_226 = arith.constant 1 : index
    %c0_227 = arith.constant 0 : index
    %c16_228 = arith.constant 16 : index
    %156 = vector.load %arg1[%c1_226, %c0_227, %c16_228] : memref<2x18x72xbf16, #tpu.memory_space<vmem>>, vector<1x16x12xbf16>
    %157 = vector.shape_cast %156 : vector<1x16x12xbf16> to vector<16x12xbf16>
    %c320 = arith.constant 320 : index
    %c0_229 = arith.constant 0 : index
    %158 = vector.load %arg8[%c320, %c0_229] : memref<512x36xbf16, #tpu.memory_space<vmem>>, vector<16x12xbf16>
    tpu.vector_store %arg8[%c320, %c0_229], %157 {strides = array<i32>} : memref<512x36xbf16, #tpu.memory_space<vmem>>, vector<16x12xbf16>,
    %c1_230 = arith.constant 1 : index
    %c0_231 = arith.constant 0 : index
    %c20_232 = arith.constant 20 : index
    %159 = vector.load %arg1[%c1_230, %c0_231, %c20_232] : memref<2x18x72xbf16, #tpu.memory_space<vmem>>, vector<1x16x12xbf16>
    %160 = vector.shape_cast %159 : vector<1x16x12xbf16> to vector<16x12xbf16>
    %c336 = arith.constant 336 : index
    %c0_233 = arith.constant 0 : index
    %161 = vector.load %arg8[%c336, %c0_233] : memref<512x36xbf16, #tpu.memory_space<vmem>>, vector<16x12xbf16>
    tpu.vector_store %arg8[%c336, %c0_233], %160 {strides = array<i32>} : memref<512x36xbf16, #tpu.memory_space<vmem>>, vector<16x12xbf16>,
    %c1_234 = arith.constant 1 : index
    %c0_235 = arith.constant 0 : index
    %c24_236 = arith.constant 24 : index
    %162 = vector.load %arg1[%c1_234, %c0_235, %c24_236] : memref<2x18x72xbf16, #tpu.memory_space<vmem>>, vector<1x16x12xbf16>
    %163 = vector.shape_cast %162 : vector<1x16x12xbf16> to vector<16x12xbf16>
    %c352 = arith.constant 352 : index
    %c0_237 = arith.constant 0 : index
    %164 = vector.load %arg8[%c352, %c0_237] : memref<512x36xbf16, #tpu.memory_space<vmem>>, vector<16x12xbf16>
    tpu.vector_store %arg8[%c352, %c0_237], %163 {strides = array<i32>} : memref<512x36xbf16, #tpu.memory_space<vmem>>, vector<16x12xbf16>,
    %c1_238 = arith.constant 1 : index
    %c0_239 = arith.constant 0 : index
    %c28_240 = arith.constant 28 : index
    %165 = vector.load %arg1[%c1_238, %c0_239, %c28_240] : memref<2x18x72xbf16, #tpu.memory_space<vmem>>, vector<1x16x12xbf16>
    %166 = vector.shape_cast %165 : vector<1x16x12xbf16> to vector<16x12xbf16>
    %c368 = arith.constant 368 : index
    %c0_241 = arith.constant 0 : index
    %167 = vector.load %arg8[%c368, %c0_241] : memref<512x36xbf16, #tpu.memory_space<vmem>>, vector<16x12xbf16>
    tpu.vector_store %arg8[%c368, %c0_241], %166 {strides = array<i32>} : memref<512x36xbf16, #tpu.memory_space<vmem>>, vector<16x12xbf16>,
    %c1_242 = arith.constant 1 : index
    %c0_243 = arith.constant 0 : index
    %c32_244 = arith.constant 32 : index
    %168 = vector.load %arg1[%c1_242, %c0_243, %c32_244] : memref<2x18x72xbf16, #tpu.memory_space<vmem>>, vector<1x16x12xbf16>
    %169 = vector.shape_cast %168 : vector<1x16x12xbf16> to vector<16x12xbf16>
    %c384 = arith.constant 384 : index
    %c0_245 = arith.constant 0 : index
    %170 = vector.load %arg8[%c384, %c0_245] : memref<512x36xbf16, #tpu.memory_space<vmem>>, vector<16x12xbf16>
    tpu.vector_store %arg8[%c384, %c0_245], %169 {strides = array<i32>} : memref<512x36xbf16, #tpu.memory_space<vmem>>, vector<16x12xbf16>,
    %c1_246 = arith.constant 1 : index
    %c0_247 = arith.constant 0 : index
    %c36_248 = arith.constant 36 : index
    %171 = vector.load %arg1[%c1_246, %c0_247, %c36_248] : memref<2x18x72xbf16, #tpu.memory_space<vmem>>, vector<1x16x12xbf16>
    %172 = vector.shape_cast %171 : vector<1x16x12xbf16> to vector<16x12xbf16>
    %c400 = arith.constant 400 : index
    %c0_249 = arith.constant 0 : index
    %173 = vector.load %arg8[%c400, %c0_249] : memref<512x36xbf16, #tpu.memory_space<vmem>>, vector<16x12xbf16>
    tpu.vector_store %arg8[%c400, %c0_249], %172 {strides = array<i32>} : memref<512x36xbf16, #tpu.memory_space<vmem>>, vector<16x12xbf16>,
    %c1_250 = arith.constant 1 : index
    %c0_251 = arith.constant 0 : index
    %c40_252 = arith.constant 40 : index
    %174 = vector.load %arg1[%c1_250, %c0_251, %c40_252] : memref<2x18x72xbf16, #tpu.memory_space<vmem>>, vector<1x16x12xbf16>
    %175 = vector.shape_cast %174 : vector<1x16x12xbf16> to vector<16x12xbf16>
    %c416 = arith.constant 416 : index
    %c0_253 = arith.constant 0 : index
    %176 = vector.load %arg8[%c416, %c0_253] : memref<512x36xbf16, #tpu.memory_space<vmem>>, vector<16x12xbf16>
    tpu.vector_store %arg8[%c416, %c0_253], %175 {strides = array<i32>} : memref<512x36xbf16, #tpu.memory_space<vmem>>, vector<16x12xbf16>,
    %c1_254 = arith.constant 1 : index
    %c0_255 = arith.constant 0 : index
    %c44_256 = arith.constant 44 : index
    %177 = vector.load %arg1[%c1_254, %c0_255, %c44_256] : memref<2x18x72xbf16, #tpu.memory_space<vmem>>, vector<1x16x12xbf16>
    %178 = vector.shape_cast %177 : vector<1x16x12xbf16> to vector<16x12xbf16>
    %c432 = arith.constant 432 : index
    %c0_257 = arith.constant 0 : index
    %179 = vector.load %arg8[%c432, %c0_257] : memref<512x36xbf16, #tpu.memory_space<vmem>>, vector<16x12xbf16>
    tpu.vector_store %arg8[%c432, %c0_257], %178 {strides = array<i32>} : memref<512x36xbf16, #tpu.memory_space<vmem>>, vector<16x12xbf16>,
    %c1_258 = arith.constant 1 : index
    %c0_259 = arith.constant 0 : index
    %c48_260 = arith.constant 48 : index
    %180 = vector.load %arg1[%c1_258, %c0_259, %c48_260] : memref<2x18x72xbf16, #tpu.memory_space<vmem>>, vector<1x16x12xbf16>
    %181 = vector.shape_cast %180 : vector<1x16x12xbf16> to vector<16x12xbf16>
    %c448 = arith.constant 448 : index
    %c0_261 = arith.constant 0 : index
    %182 = vector.load %arg8[%c448, %c0_261] : memref<512x36xbf16, #tpu.memory_space<vmem>>, vector<16x12xbf16>
    tpu.vector_store %arg8[%c448, %c0_261], %181 {strides = array<i32>} : memref<512x36xbf16, #tpu.memory_space<vmem>>, vector<16x12xbf16>,
    %c1_262 = arith.constant 1 : index
    %c0_263 = arith.constant 0 : index
    %c52_264 = arith.constant 52 : index
    %183 = vector.load %arg1[%c1_262, %c0_263, %c52_264] : memref<2x18x72xbf16, #tpu.memory_space<vmem>>, vector<1x16x12xbf16>
    %184 = vector.shape_cast %183 : vector<1x16x12xbf16> to vector<16x12xbf16>
    %c464 = arith.constant 464 : index
    %c0_265 = arith.constant 0 : index
    %185 = vector.load %arg8[%c464, %c0_265] : memref<512x36xbf16, #tpu.memory_space<vmem>>, vector<16x12xbf16>
    tpu.vector_store %arg8[%c464, %c0_265], %184 {strides = array<i32>} : memref<512x36xbf16, #tpu.memory_space<vmem>>, vector<16x12xbf16>,
    %c1_266 = arith.constant 1 : index
    %c0_267 = arith.constant 0 : index
    %c56_268 = arith.constant 56 : index
    %186 = vector.load %arg1[%c1_266, %c0_267, %c56_268] : memref<2x18x72xbf16, #tpu.memory_space<vmem>>, vector<1x16x12xbf16>
    %187 = vector.shape_cast %186 : vector<1x16x12xbf16> to vector<16x12xbf16>
    %c480 = arith.constant 480 : index
    %c0_269 = arith.constant 0 : index
    %188 = vector.load %arg8[%c480, %c0_269] : memref<512x36xbf16, #tpu.memory_space<vmem>>, vector<16x12xbf16>
    tpu.vector_store %arg8[%c480, %c0_269], %187 {strides = array<i32>} : memref<512x36xbf16, #tpu.memory_space<vmem>>, vector<16x12xbf16>,
    %c1_270 = arith.constant 1 : index
    %c0_271 = arith.constant 0 : index
    %c60_272 = arith.constant 60 : index
    %189 = vector.load %arg1[%c1_270, %c0_271, %c60_272] : memref<2x18x72xbf16, #tpu.memory_space<vmem>>, vector<1x16x12xbf16>
    %190 = vector.shape_cast %189 : vector<1x16x12xbf16> to vector<16x12xbf16>
    %c496 = arith.constant 496 : index
    %c0_273 = arith.constant 0 : index
    %191 = vector.load %arg8[%c496, %c0_273] : memref<512x36xbf16, #tpu.memory_space<vmem>>, vector<16x12xbf16>
    tpu.vector_store %arg8[%c496, %c0_273], %190 {strides = array<i32>} : memref<512x36xbf16, #tpu.memory_space<vmem>>, vector<16x12xbf16>,
    %c1_274 = arith.constant 1 : index
    %c1_275 = arith.constant 1 : index
    %c0_276 = arith.constant 0 : index
    %192 = vector.load %arg1[%c1_274, %c1_275, %c0_276] : memref<2x18x72xbf16, #tpu.memory_space<vmem>>, vector<1x16x12xbf16>
    %193 = vector.shape_cast %192 : vector<1x16x12xbf16> to vector<16x12xbf16>
    %c256_277 = arith.constant 256 : index
    %c12_278 = arith.constant 12 : index
    %194 = vector.load %arg8[%c256_277, %c12_278] : memref<512x36xbf16, #tpu.memory_space<vmem>>, vector<16x12xbf16>
    tpu.vector_store %arg8[%c256_277, %c12_278], %193 {strides = array<i32>} : memref<512x36xbf16, #tpu.memory_space<vmem>>, vector<16x12xbf16>,
    %c1_279 = arith.constant 1 : index
    %c1_280 = arith.constant 1 : index
    %c4_281 = arith.constant 4 : index
    %195 = vector.load %arg1[%c1_279, %c1_280, %c4_281] : memref<2x18x72xbf16, #tpu.memory_space<vmem>>, vector<1x16x12xbf16>
    %196 = vector.shape_cast %195 : vector<1x16x12xbf16> to vector<16x12xbf16>
    %c272_282 = arith.constant 272 : index
    %c12_283 = arith.constant 12 : index
    %197 = vector.load %arg8[%c272_282, %c12_283] : memref<512x36xbf16, #tpu.memory_space<vmem>>, vector<16x12xbf16>
    tpu.vector_store %arg8[%c272_282, %c12_283], %196 {strides = array<i32>} : memref<512x36xbf16, #tpu.memory_space<vmem>>, vector<16x12xbf16>,
    %c1_284 = arith.constant 1 : index
    %c1_285 = arith.constant 1 : index
    %c8_286 = arith.constant 8 : index
    %198 = vector.load %arg1[%c1_284, %c1_285, %c8_286] : memref<2x18x72xbf16, #tpu.memory_space<vmem>>, vector<1x16x12xbf16>
    %199 = vector.shape_cast %198 : vector<1x16x12xbf16> to vector<16x12xbf16>
    %c288_287 = arith.constant 288 : index
    %c12_288 = arith.constant 12 : index
    %200 = vector.load %arg8[%c288_287, %c12_288] : memref<512x36xbf16, #tpu.memory_space<vmem>>, vector<16x12xbf16>
    tpu.vector_store %arg8[%c288_287, %c12_288], %199 {strides = array<i32>} : memref<512x36xbf16, #tpu.memory_space<vmem>>, vector<16x12xbf16>,
    %c1_289 = arith.constant 1 : index
    %c1_290 = arith.constant 1 : index
    %c12_291 = arith.constant 12 : index
    %201 = vector.load %arg1[%c1_289, %c1_290, %c12_291] : memref<2x18x72xbf16, #tpu.memory_space<vmem>>, vector<1x16x12xbf16>
    %202 = vector.shape_cast %201 : vector<1x16x12xbf16> to vector<16x12xbf16>
    %c304_292 = arith.constant 304 : index
    %c12_293 = arith.constant 12 : index
    %203 = vector.load %arg8[%c304_292, %c12_293] : memref<512x36xbf16, #tpu.memory_space<vmem>>, vector<16x12xbf16>
    tpu.vector_store %arg8[%c304_292, %c12_293], %202 {strides = array<i32>} : memref<512x36xbf16, #tpu.memory_space<vmem>>, vector<16x12xbf16>,
    %c1_294 = arith.constant 1 : index
    %c1_295 = arith.constant 1 : index
    %c16_296 = arith.constant 16 : index
    %204 = vector.load %arg1[%c1_294, %c1_295, %c16_296] : memref<2x18x72xbf16, #tpu.memory_space<vmem>>, vector<1x16x12xbf16>
    %205 = vector.shape_cast %204 : vector<1x16x12xbf16> to vector<16x12xbf16>
    %c320_297 = arith.constant 320 : index
    %c12_298 = arith.constant 12 : index
    %206 = vector.load %arg8[%c320_297, %c12_298] : memref<512x36xbf16, #tpu.memory_space<vmem>>, vector<16x12xbf16>
    tpu.vector_store %arg8[%c320_297, %c12_298], %205 {strides = array<i32>} : memref<512x36xbf16, #tpu.memory_space<vmem>>, vector<16x12xbf16>,
    %c1_299 = arith.constant 1 : index
    %c1_300 = arith.constant 1 : index
    %c20_301 = arith.constant 20 : index
    %207 = vector.load %arg1[%c1_299, %c1_300, %c20_301] : memref<2x18x72xbf16, #tpu.memory_space<vmem>>, vector<1x16x12xbf16>
    %208 = vector.shape_cast %207 : vector<1x16x12xbf16> to vector<16x12xbf16>
    %c336_302 = arith.constant 336 : index
    %c12_303 = arith.constant 12 : index
    %209 = vector.load %arg8[%c336_302, %c12_303] : memref<512x36xbf16, #tpu.memory_space<vmem>>, vector<16x12xbf16>
    tpu.vector_store %arg8[%c336_302, %c12_303], %208 {strides = array<i32>} : memref<512x36xbf16, #tpu.memory_space<vmem>>, vector<16x12xbf16>,
    %c1_304 = arith.constant 1 : index
    %c1_305 = arith.constant 1 : index
    %c24_306 = arith.constant 24 : index
    %210 = vector.load %arg1[%c1_304, %c1_305, %c24_306] : memref<2x18x72xbf16, #tpu.memory_space<vmem>>, vector<1x16x12xbf16>
    %211 = vector.shape_cast %210 : vector<1x16x12xbf16> to vector<16x12xbf16>
    %c352_307 = arith.constant 352 : index
    %c12_308 = arith.constant 12 : index
    %212 = vector.load %arg8[%c352_307, %c12_308] : memref<512x36xbf16, #tpu.memory_space<vmem>>, vector<16x12xbf16>
    tpu.vector_store %arg8[%c352_307, %c12_308], %211 {strides = array<i32>} : memref<512x36xbf16, #tpu.memory_space<vmem>>, vector<16x12xbf16>,
    %c1_309 = arith.constant 1 : index
    %c1_310 = arith.constant 1 : index
    %c28_311 = arith.constant 28 : index
    %213 = vector.load %arg1[%c1_309, %c1_310, %c28_311] : memref<2x18x72xbf16, #tpu.memory_space<vmem>>, vector<1x16x12xbf16>
    %214 = vector.shape_cast %213 : vector<1x16x12xbf16> to vector<16x12xbf16>
    %c368_312 = arith.constant 368 : index
    %c12_313 = arith.constant 12 : index
    %215 = vector.load %arg8[%c368_312, %c12_313] : memref<512x36xbf16, #tpu.memory_space<vmem>>, vector<16x12xbf16>
    tpu.vector_store %arg8[%c368_312, %c12_313], %214 {strides = array<i32>} : memref<512x36xbf16, #tpu.memory_space<vmem>>, vector<16x12xbf16>,
    %c1_314 = arith.constant 1 : index
    %c1_315 = arith.constant 1 : index
    %c32_316 = arith.constant 32 : index
    %216 = vector.load %arg1[%c1_314, %c1_315, %c32_316] : memref<2x18x72xbf16, #tpu.memory_space<vmem>>, vector<1x16x12xbf16>
    %217 = vector.shape_cast %216 : vector<1x16x12xbf16> to vector<16x12xbf16>
    %c384_317 = arith.constant 384 : index
    %c12_318 = arith.constant 12 : index
    %218 = vector.load %arg8[%c384_317, %c12_318] : memref<512x36xbf16, #tpu.memory_space<vmem>>, vector<16x12xbf16>
    tpu.vector_store %arg8[%c384_317, %c12_318], %217 {strides = array<i32>} : memref<512x36xbf16, #tpu.memory_space<vmem>>, vector<16x12xbf16>,
    %c1_319 = arith.constant 1 : index
    %c1_320 = arith.constant 1 : index
    %c36_321 = arith.constant 36 : index
    %219 = vector.load %arg1[%c1_319, %c1_320, %c36_321] : memref<2x18x72xbf16, #tpu.memory_space<vmem>>, vector<1x16x12xbf16>
    %220 = vector.shape_cast %219 : vector<1x16x12xbf16> to vector<16x12xbf16>
    %c400_322 = arith.constant 400 : index
    %c12_323 = arith.constant 12 : index
    %221 = vector.load %arg8[%c400_322, %c12_323] : memref<512x36xbf16, #tpu.memory_space<vmem>>, vector<16x12xbf16>
    tpu.vector_store %arg8[%c400_322, %c12_323], %220 {strides = array<i32>} : memref<512x36xbf16, #tpu.memory_space<vmem>>, vector<16x12xbf16>,
    %c1_324 = arith.constant 1 : index
    %c1_325 = arith.constant 1 : index
    %c40_326 = arith.constant 40 : index
    %222 = vector.load %arg1[%c1_324, %c1_325, %c40_326] : memref<2x18x72xbf16, #tpu.memory_space<vmem>>, vector<1x16x12xbf16>
    %223 = vector.shape_cast %222 : vector<1x16x12xbf16> to vector<16x12xbf16>
    %c416_327 = arith.constant 416 : index
    %c12_328 = arith.constant 12 : index
    %224 = vector.load %arg8[%c416_327, %c12_328] : memref<512x36xbf16, #tpu.memory_space<vmem>>, vector<16x12xbf16>
    tpu.vector_store %arg8[%c416_327, %c12_328], %223 {strides = array<i32>} : memref<512x36xbf16, #tpu.memory_space<vmem>>, vector<16x12xbf16>,
    %c1_329 = arith.constant 1 : index
    %c1_330 = arith.constant 1 : index
    %c44_331 = arith.constant 44 : index
    %225 = vector.load %arg1[%c1_329, %c1_330, %c44_331] : memref<2x18x72xbf16, #tpu.memory_space<vmem>>, vector<1x16x12xbf16>
    %226 = vector.shape_cast %225 : vector<1x16x12xbf16> to vector<16x12xbf16>
    %c432_332 = arith.constant 432 : index
    %c12_333 = arith.constant 12 : index
    %227 = vector.load %arg8[%c432_332, %c12_333] : memref<512x36xbf16, #tpu.memory_space<vmem>>, vector<16x12xbf16>
    tpu.vector_store %arg8[%c432_332, %c12_333], %226 {strides = array<i32>} : memref<512x36xbf16, #tpu.memory_space<vmem>>, vector<16x12xbf16>,
    %c1_334 = arith.constant 1 : index
    %c1_335 = arith.constant 1 : index
    %c48_336 = arith.constant 48 : index
    %228 = vector.load %arg1[%c1_334, %c1_335, %c48_336] : memref<2x18x72xbf16, #tpu.memory_space<vmem>>, vector<1x16x12xbf16>
    %229 = vector.shape_cast %228 : vector<1x16x12xbf16> to vector<16x12xbf16>
    %c448_337 = arith.constant 448 : index
    %c12_338 = arith.constant 12 : index
    %230 = vector.load %arg8[%c448_337, %c12_338] : memref<512x36xbf16, #tpu.memory_space<vmem>>, vector<16x12xbf16>
    tpu.vector_store %arg8[%c448_337, %c12_338], %229 {strides = array<i32>} : memref<512x36xbf16, #tpu.memory_space<vmem>>, vector<16x12xbf16>,
    %c1_339 = arith.constant 1 : index
    %c1_340 = arith.constant 1 : index
    %c52_341 = arith.constant 52 : index
    %231 = vector.load %arg1[%c1_339, %c1_340, %c52_341] : memref<2x18x72xbf16, #tpu.memory_space<vmem>>, vector<1x16x12xbf16>
    %232 = vector.shape_cast %231 : vector<1x16x12xbf16> to vector<16x12xbf16>
    %c464_342 = arith.constant 464 : index
    %c12_343 = arith.constant 12 : index
    %233 = vector.load %arg8[%c464_342, %c12_343] : memref<512x36xbf16, #tpu.memory_space<vmem>>, vector<16x12xbf16>
    tpu.vector_store %arg8[%c464_342, %c12_343], %232 {strides = array<i32>} : memref<512x36xbf16, #tpu.memory_space<vmem>>, vector<16x12xbf16>,
    %c1_344 = arith.constant 1 : index
    %c1_345 = arith.constant 1 : index
    %c56_346 = arith.constant 56 : index
    %234 = vector.load %arg1[%c1_344, %c1_345, %c56_346] : memref<2x18x72xbf16, #tpu.memory_space<vmem>>, vector<1x16x12xbf16>
    %235 = vector.shape_cast %234 : vector<1x16x12xbf16> to vector<16x12xbf16>
    %c480_347 = arith.constant 480 : index
    %c12_348 = arith.constant 12 : index
    %236 = vector.load %arg8[%c480_347, %c12_348] : memref<512x36xbf16, #tpu.memory_space<vmem>>, vector<16x12xbf16>
    tpu.vector_store %arg8[%c480_347, %c12_348], %235 {strides = array<i32>} : memref<512x36xbf16, #tpu.memory_space<vmem>>, vector<16x12xbf16>,
    %c1_349 = arith.constant 1 : index
    %c1_350 = arith.constant 1 : index
    %c60_351 = arith.constant 60 : index
    %237 = vector.load %arg1[%c1_349, %c1_350, %c60_351] : memref<2x18x72xbf16, #tpu.memory_space<vmem>>, vector<1x16x12xbf16>
    %238 = vector.shape_cast %237 : vector<1x16x12xbf16> to vector<16x12xbf16>
    %c496_352 = arith.constant 496 : index
    %c12_353 = arith.constant 12 : index
    %239 = vector.load %arg8[%c496_352, %c12_353] : memref<512x36xbf16, #tpu.memory_space<vmem>>, vector<16x12xbf16>
    tpu.vector_store %arg8[%c496_352, %c12_353], %238 {strides = array<i32>} : memref<512x36xbf16, #tpu.memory_space<vmem>>, vector<16x12xbf16>,
    %c1_354 = arith.constant 1 : index
    %c2_355 = arith.constant 2 : index
    %c0_356 = arith.constant 0 : index
    %240 = vector.load %arg1[%c1_354, %c2_355, %c0_356] : memref<2x18x72xbf16, #tpu.memory_space<vmem>>, vector<1x16x12xbf16>
    %241 = vector.shape_cast %240 : vector<1x16x12xbf16> to vector<16x12xbf16>
    %c256_357 = arith.constant 256 : index
    %c24_358 = arith.constant 24 : index
    %242 = vector.load %arg8[%c256_357, %c24_358] : memref<512x36xbf16, #tpu.memory_space<vmem>>, vector<16x12xbf16>
    tpu.vector_store %arg8[%c256_357, %c24_358], %241 {strides = array<i32>} : memref<512x36xbf16, #tpu.memory_space<vmem>>, vector<16x12xbf16>,
    %c1_359 = arith.constant 1 : index
    %c2_360 = arith.constant 2 : index
    %c4_361 = arith.constant 4 : index
    %243 = vector.load %arg1[%c1_359, %c2_360, %c4_361] : memref<2x18x72xbf16, #tpu.memory_space<vmem>>, vector<1x16x12xbf16>
    %244 = vector.shape_cast %243 : vector<1x16x12xbf16> to vector<16x12xbf16>
    %c272_362 = arith.constant 272 : index
    %c24_363 = arith.constant 24 : index
    %245 = vector.load %arg8[%c272_362, %c24_363] : memref<512x36xbf16, #tpu.memory_space<vmem>>, vector<16x12xbf16>
    tpu.vector_store %arg8[%c272_362, %c24_363], %244 {strides = array<i32>} : memref<512x36xbf16, #tpu.memory_space<vmem>>, vector<16x12xbf16>,
    %c1_364 = arith.constant 1 : index
    %c2_365 = arith.constant 2 : index
    %c8_366 = arith.constant 8 : index
    %246 = vector.load %arg1[%c1_364, %c2_365, %c8_366] : memref<2x18x72xbf16, #tpu.memory_space<vmem>>, vector<1x16x12xbf16>
    %247 = vector.shape_cast %246 : vector<1x16x12xbf16> to vector<16x12xbf16>
    %c288_367 = arith.constant 288 : index
    %c24_368 = arith.constant 24 : index
    %248 = vector.load %arg8[%c288_367, %c24_368] : memref<512x36xbf16, #tpu.memory_space<vmem>>, vector<16x12xbf16>
    tpu.vector_store %arg8[%c288_367, %c24_368], %247 {strides = array<i32>} : memref<512x36xbf16, #tpu.memory_space<vmem>>, vector<16x12xbf16>,
    %c1_369 = arith.constant 1 : index
    %c2_370 = arith.constant 2 : index
    %c12_371 = arith.constant 12 : index
    %249 = vector.load %arg1[%c1_369, %c2_370, %c12_371] : memref<2x18x72xbf16, #tpu.memory_space<vmem>>, vector<1x16x12xbf16>
    %250 = vector.shape_cast %249 : vector<1x16x12xbf16> to vector<16x12xbf16>
    %c304_372 = arith.constant 304 : index
    %c24_373 = arith.constant 24 : index
    %251 = vector.load %arg8[%c304_372, %c24_373] : memref<512x36xbf16, #tpu.memory_space<vmem>>, vector<16x12xbf16>
    tpu.vector_store %arg8[%c304_372, %c24_373], %250 {strides = array<i32>} : memref<512x36xbf16, #tpu.memory_space<vmem>>, vector<16x12xbf16>,
    %c1_374 = arith.constant 1 : index
    %c2_375 = arith.constant 2 : index
    %c16_376 = arith.constant 16 : index
    %252 = vector.load %arg1[%c1_374, %c2_375, %c16_376] : memref<2x18x72xbf16, #tpu.memory_space<vmem>>, vector<1x16x12xbf16>
    %253 = vector.shape_cast %252 : vector<1x16x12xbf16> to vector<16x12xbf16>
    %c320_377 = arith.constant 320 : index
    %c24_378 = arith.constant 24 : index
    %254 = vector.load %arg8[%c320_377, %c24_378] : memref<512x36xbf16, #tpu.memory_space<vmem>>, vector<16x12xbf16>
    tpu.vector_store %arg8[%c320_377, %c24_378], %253 {strides = array<i32>} : memref<512x36xbf16, #tpu.memory_space<vmem>>, vector<16x12xbf16>,
    %c1_379 = arith.constant 1 : index
    %c2_380 = arith.constant 2 : index
    %c20_381 = arith.constant 20 : index
    %255 = vector.load %arg1[%c1_379, %c2_380, %c20_381] : memref<2x18x72xbf16, #tpu.memory_space<vmem>>, vector<1x16x12xbf16>
    %256 = vector.shape_cast %255 : vector<1x16x12xbf16> to vector<16x12xbf16>
    %c336_382 = arith.constant 336 : index
    %c24_383 = arith.constant 24 : index
    %257 = vector.load %arg8[%c336_382, %c24_383] : memref<512x36xbf16, #tpu.memory_space<vmem>>, vector<16x12xbf16>
    tpu.vector_store %arg8[%c336_382, %c24_383], %256 {strides = array<i32>} : memref<512x36xbf16, #tpu.memory_space<vmem>>, vector<16x12xbf16>,
    %c1_384 = arith.constant 1 : index
    %c2_385 = arith.constant 2 : index
    %c24_386 = arith.constant 24 : index
    %258 = vector.load %arg1[%c1_384, %c2_385, %c24_386] : memref<2x18x72xbf16, #tpu.memory_space<vmem>>, vector<1x16x12xbf16>
    %259 = vector.shape_cast %258 : vector<1x16x12xbf16> to vector<16x12xbf16>
    %c352_387 = arith.constant 352 : index
    %c24_388 = arith.constant 24 : index
    %260 = vector.load %arg8[%c352_387, %c24_388] : memref<512x36xbf16, #tpu.memory_space<vmem>>, vector<16x12xbf16>
    tpu.vector_store %arg8[%c352_387, %c24_388], %259 {strides = array<i32>} : memref<512x36xbf16, #tpu.memory_space<vmem>>, vector<16x12xbf16>,
    %c1_389 = arith.constant 1 : index
    %c2_390 = arith.constant 2 : index
    %c28_391 = arith.constant 28 : index
    %261 = vector.load %arg1[%c1_389, %c2_390, %c28_391] : memref<2x18x72xbf16, #tpu.memory_space<vmem>>, vector<1x16x12xbf16>
    %262 = vector.shape_cast %261 : vector<1x16x12xbf16> to vector<16x12xbf16>
    %c368_392 = arith.constant 368 : index
    %c24_393 = arith.constant 24 : index
    %263 = vector.load %arg8[%c368_392, %c24_393] : memref<512x36xbf16, #tpu.memory_space<vmem>>, vector<16x12xbf16>
    tpu.vector_store %arg8[%c368_392, %c24_393], %262 {strides = array<i32>} : memref<512x36xbf16, #tpu.memory_space<vmem>>, vector<16x12xbf16>,
    %c1_394 = arith.constant 1 : index
    %c2_395 = arith.constant 2 : index
    %c32_396 = arith.constant 32 : index
    %264 = vector.load %arg1[%c1_394, %c2_395, %c32_396] : memref<2x18x72xbf16, #tpu.memory_space<vmem>>, vector<1x16x12xbf16>
    %265 = vector.shape_cast %264 : vector<1x16x12xbf16> to vector<16x12xbf16>
    %c384_397 = arith.constant 384 : index
    %c24_398 = arith.constant 24 : index
    %266 = vector.load %arg8[%c384_397, %c24_398] : memref<512x36xbf16, #tpu.memory_space<vmem>>, vector<16x12xbf16>
    tpu.vector_store %arg8[%c384_397, %c24_398], %265 {strides = array<i32>} : memref<512x36xbf16, #tpu.memory_space<vmem>>, vector<16x12xbf16>,
    %c1_399 = arith.constant 1 : index
    %c2_400 = arith.constant 2 : index
    %c36_401 = arith.constant 36 : index
    %267 = vector.load %arg1[%c1_399, %c2_400, %c36_401] : memref<2x18x72xbf16, #tpu.memory_space<vmem>>, vector<1x16x12xbf16>
    %268 = vector.shape_cast %267 : vector<1x16x12xbf16> to vector<16x12xbf16>
    %c400_402 = arith.constant 400 : index
    %c24_403 = arith.constant 24 : index
    %269 = vector.load %arg8[%c400_402, %c24_403] : memref<512x36xbf16, #tpu.memory_space<vmem>>, vector<16x12xbf16>
    tpu.vector_store %arg8[%c400_402, %c24_403], %268 {strides = array<i32>} : memref<512x36xbf16, #tpu.memory_space<vmem>>, vector<16x12xbf16>,
    %c1_404 = arith.constant 1 : index
    %c2_405 = arith.constant 2 : index
    %c40_406 = arith.constant 40 : index
    %270 = vector.load %arg1[%c1_404, %c2_405, %c40_406] : memref<2x18x72xbf16, #tpu.memory_space<vmem>>, vector<1x16x12xbf16>
    %271 = vector.shape_cast %270 : vector<1x16x12xbf16> to vector<16x12xbf16>
    %c416_407 = arith.constant 416 : index
    %c24_408 = arith.constant 24 : index
    %272 = vector.load %arg8[%c416_407, %c24_408] : memref<512x36xbf16, #tpu.memory_space<vmem>>, vector<16x12xbf16>
    tpu.vector_store %arg8[%c416_407, %c24_408], %271 {strides = array<i32>} : memref<512x36xbf16, #tpu.memory_space<vmem>>, vector<16x12xbf16>,
    %c1_409 = arith.constant 1 : index
    %c2_410 = arith.constant 2 : index
    %c44_411 = arith.constant 44 : index
    %273 = vector.load %arg1[%c1_409, %c2_410, %c44_411] : memref<2x18x72xbf16, #tpu.memory_space<vmem>>, vector<1x16x12xbf16>
    %274 = vector.shape_cast %273 : vector<1x16x12xbf16> to vector<16x12xbf16>
    %c432_412 = arith.constant 432 : index
    %c24_413 = arith.constant 24 : index
    %275 = vector.load %arg8[%c432_412, %c24_413] : memref<512x36xbf16, #tpu.memory_space<vmem>>, vector<16x12xbf16>
    tpu.vector_store %arg8[%c432_412, %c24_413], %274 {strides = array<i32>} : memref<512x36xbf16, #tpu.memory_space<vmem>>, vector<16x12xbf16>,
    %c1_414 = arith.constant 1 : index
    %c2_415 = arith.constant 2 : index
    %c48_416 = arith.constant 48 : index
    %276 = vector.load %arg1[%c1_414, %c2_415, %c48_416] : memref<2x18x72xbf16, #tpu.memory_space<vmem>>, vector<1x16x12xbf16>
    %277 = vector.shape_cast %276 : vector<1x16x12xbf16> to vector<16x12xbf16>
    %c448_417 = arith.constant 448 : index
    %c24_418 = arith.constant 24 : index
    %278 = vector.load %arg8[%c448_417, %c24_418] : memref<512x36xbf16, #tpu.memory_space<vmem>>, vector<16x12xbf16>
    tpu.vector_store %arg8[%c448_417, %c24_418], %277 {strides = array<i32>} : memref<512x36xbf16, #tpu.memory_space<vmem>>, vector<16x12xbf16>,
    %c1_419 = arith.constant 1 : index
    %c2_420 = arith.constant 2 : index
    %c52_421 = arith.constant 52 : index
    %279 = vector.load %arg1[%c1_419, %c2_420, %c52_421] : memref<2x18x72xbf16, #tpu.memory_space<vmem>>, vector<1x16x12xbf16>
    %280 = vector.shape_cast %279 : vector<1x16x12xbf16> to vector<16x12xbf16>
    %c464_422 = arith.constant 464 : index
    %c24_423 = arith.constant 24 : index
    %281 = vector.load %arg8[%c464_422, %c24_423] : memref<512x36xbf16, #tpu.memory_space<vmem>>, vector<16x12xbf16>
    tpu.vector_store %arg8[%c464_422, %c24_423], %280 {strides = array<i32>} : memref<512x36xbf16, #tpu.memory_space<vmem>>, vector<16x12xbf16>,
    %c1_424 = arith.constant 1 : index
    %c2_425 = arith.constant 2 : index
    %c56_426 = arith.constant 56 : index
    %282 = vector.load %arg1[%c1_424, %c2_425, %c56_426] : memref<2x18x72xbf16, #tpu.memory_space<vmem>>, vector<1x16x12xbf16>
    %283 = vector.shape_cast %282 : vector<1x16x12xbf16> to vector<16x12xbf16>
    %c480_427 = arith.constant 480 : index
    %c24_428 = arith.constant 24 : index
    %284 = vector.load %arg8[%c480_427, %c24_428] : memref<512x36xbf16, #tpu.memory_space<vmem>>, vector<16x12xbf16>
    tpu.vector_store %arg8[%c480_427, %c24_428], %283 {strides = array<i32>} : memref<512x36xbf16, #tpu.memory_space<vmem>>, vector<16x12xbf16>,
    %c1_429 = arith.constant 1 : index
    %c2_430 = arith.constant 2 : index
    %c60_431 = arith.constant 60 : index
    %285 = vector.load %arg1[%c1_429, %c2_430, %c60_431] : memref<2x18x72xbf16, #tpu.memory_space<vmem>>, vector<1x16x12xbf16>
    %286 = vector.shape_cast %285 : vector<1x16x12xbf16> to vector<16x12xbf16>
    %c496_432 = arith.constant 496 : index
    %c24_433 = arith.constant 24 : index
    %287 = vector.load %arg8[%c496_432, %c24_433] : memref<512x36xbf16, #tpu.memory_space<vmem>>, vector<16x12xbf16>
    tpu.vector_store %arg8[%c496_432, %c24_433], %286 {strides = array<i32>} : memref<512x36xbf16, #tpu.memory_space<vmem>>, vector<16x12xbf16>,
    %c0_434 = arith.constant 0 : index
    %c0_435 = arith.constant 0 : index
    %288 = vector.load %arg8[%c0_434, %c0_435] : memref<512x36xbf16, #tpu.memory_space<vmem>>, vector<512x36xbf16>
    %c0_436 = arith.constant 0 : index
    %c0_437 = arith.constant 0 : index
    %289 = vector.load %arg2[%c0_436, %c0_437] : memref<36x128xbf16, #tpu.memory_space<vmem>>, vector<36x128xbf16>
    %cst = arith.constant dense<0.000000e+00> : vector<512x128xf32>
    %290 = tpu.matmul %288, %289, %cst {dimension_numbers = #tpu.dot_dimension_numbers<[1], [0], [0], [1], [0, 0, 1, 1], [], []>} : vector<512x36xbf16>, vector<36x128xbf16>, vector<512x128xf32> -> vector<512x128xf32>
    %c0_438 = arith.constant 0 : index
    %c0_439 = arith.constant 0 : index
    %291 = vector.load %arg3[%c0_438, %c0_439] : memref<1x128xf32, #tpu.memory_space<vmem>>, vector<1x128xf32>
    %292 = vector.broadcast %291 : vector<1x128xf32> to vector<512x128xf32>
    %293 = arith.addf %290, %292 : vector<512x128xf32>
    %cst_440 = arith.constant 0.000000e+00 : f32
    %294 = vector.broadcast %cst_440 : f32 to vector<512x128xf32>
    %295 = arith.maximumf %293, %294 : vector<512x128xf32>
    %c0_441 = arith.constant 0 : index
    %c0_442 = arith.constant 0 : index
    %296 = vector.load %arg6[%c0_441, %c0_442] : memref<2x512xbf16, #tpu.memory_space<vmem>>, vector<2x512xbf16>
    %297 = arith.truncf %295 : vector<512x128xf32> to vector<512x128xbf16>
    %cst_443 = arith.constant dense<0.000000e+00> : vector<2x128xf32>
    %298 = tpu.matmul %296, %297, %cst_443 {dimension_numbers = #tpu.dot_dimension_numbers<[1], [0], [0], [1], [0, 0, 1, 1], [], []>} : vector<2x512xbf16>, vector<512x128xbf16>, vector<2x128xf32> -> vector<2x128xf32>
    %299 = arith.truncf %298 : vector<2x128xf32> to vector<2x128xbf16>
    %c0_444 = arith.constant 0 : index
    %c0_445 = arith.constant 0 : index
    %300 = vector.load %arg4[%c0_444, %c0_445] : memref<128x128xbf16, #tpu.memory_space<vmem>>, vector<128x128xbf16>
    %cst_446 = arith.constant dense<0.000000e+00> : vector<2x128xf32>
    %301 = tpu.matmul %299, %300, %cst_446 {dimension_numbers = #tpu.dot_dimension_numbers<[1], [0], [0], [1], [0, 0, 1, 1], [], []>} : vector<2x128xbf16>, vector<128x128xbf16>, vector<2x128xf32> -> vector<2x128xf32>
    %c0_447 = arith.constant 0 : index
    %c0_448 = arith.constant 0 : index
    %302 = vector.load %arg5[%c0_447, %c0_448] : memref<1x128xf32, #tpu.memory_space<vmem>>, vector<1x128xf32>
    %303 = vector.broadcast %302 : vector<1x128xf32> to vector<2x128xf32>
    %304 = arith.addf %301, %303 : vector<2x128xf32>
    %c0_449 = arith.constant 0 : index
    %c0_450 = arith.constant 0 : index
    %c0_451 = arith.constant 0 : index
    %305 = vector.load %arg7[%c0_449, %c0_450, %c0_451] : memref<1x2x128xf32, #tpu.memory_space<vmem>>, vector<1x2x128xf32>
    %306 = vector.shape_cast %305 : vector<1x2x128xf32> to vector<2x128xf32>
    %307 = vector.shape_cast %304 : vector<2x128xf32> to vector<1x2x128xf32>
    tpu.vector_store %arg7[%c0_449, %c0_450, %c0_451], %307 {strides = array<i32>} : memref<1x2x128xf32, #tpu.memory_space<vmem>>, vector<1x2x128xf32>,
    return
  }
  func.func @transform_0(%arg0: i32) -> (i32, i32, i32) {
    %c0_i32 = arith.constant 0 : i32
    %c0_i32_0 = arith.constant 0 : i32
    %c0_i32_1 = arith.constant 0 : i32
    return %arg0, %c0_i32, %c0_i32_0 : i32, i32, i32
  }
  func.func @transform_1(%arg0: i32) -> (i32, i32) {
    %c0_i32 = arith.constant 0 : i32
    %c0_i32_0 = arith.constant 0 : i32
    %c0_i32_1 = arith.constant 0 : i32
    return %c0_i32, %c0_i32_0 : i32, i32
  }
  func.func @transform_2(%arg0: i32) -> (i32, i32) {
    %c0_i32 = arith.constant 0 : i32
    %c0_i32_0 = arith.constant 0 : i32
    %c0_i32_1 = arith.constant 0 : i32
    return %c0_i32, %c0_i32_0 : i32, i32
  }
  func.func @transform_3(%arg0: i32) -> (i32, i32) {
    %c0_i32 = arith.constant 0 : i32
    %c0_i32_0 = arith.constant 0 : i32
    %c0_i32_1 = arith.constant 0 : i32
    return %c0_i32, %c0_i32_0 : i32, i32
  }
  func.func @transform_4(%arg0: i32) -> (i32, i32) {
    %c0_i32 = arith.constant 0 : i32
    %c0_i32_0 = arith.constant 0 : i32
    %c0_i32_1 = arith.constant 0 : i32
    return %c0_i32, %c0_i32_0 : i32, i32
  }
  func.func @transform_5(%arg0: i32) -> (i32, i32) {
    %c0_i32 = arith.constant 0 : i32
    %c0_i32_0 = arith.constant 0 : i32
    %c0_i32_1 = arith.constant 0 : i32
    return %c0_i32, %c0_i32_0 : i32, i32
  }
  func.func @transform_6(%arg0: i32) -> (i32, i32, i32) {
    %c0_i32 = arith.constant 0 : i32
    %c0_i32_0 = arith.constant 0 : i32
    %c0_i32_1 = arith.constant 0 : i32
    return %arg0, %c0_i32, %c0_i32_0 : i32, i32, i32
  }
}

</mosaic_0001>

<llo_original>
// kernel: tpu_custom_call.1
$region0: #{tpu_custom_call.1}
  #allocation0 [shape = 'u32[]', space=smem, size = 0x4, offset = 0x4, fixed_abs, tag = 'smem constant byte address 0x4 - core index']
  #allocation1 [shape = 'u32[144,128]{1,0:T(1,128)}', space=vmem, size = 0x12000, scoped, tag = 'internal scratch']
  #allocation2 [shape = 'bf16[512,36]{1,0:T(8,128)(2,1)}', space=vmem, size = 0x20000, scoped, tag = 'scratch operand']
  %s0 = inlined_call_operand.vmem [shape: bf16[2,18,72], index: 0, kind: input, shape index: {}]
  %s1 = inlined_call_operand.vmem [shape: bf16[36,128], index: 1, kind: input, shape index: {}]
  %s2 = inlined_call_operand.vmem [shape: f32[1,128], index: 2, kind: input, shape index: {}]
  %s3 = inlined_call_operand.hbm [shape: bf16[128,128], index: 3, kind: input, shape index: {}]
  %s4 = inlined_call_operand.vmem [shape: f32[1,128], index: 4, kind: input, shape index: {}]
  %s5 = inlined_call_operand.vmem [shape: bf16[2,512], index: 5, kind: input, shape index: {}]
  %s6 = inlined_call_operand.hbm [shape: f32[1,2,128], index: 6, kind: output, shape index: {}]
  %s7 = sld [smem:[#allocation0]]
  $region38: #{tpu_custom_call.1} parent=0
    _
  %s9 = ssub.s32 1, %s7
  %s10 = scalar_select 0, %s9, %s7
  $region1: #{tpu_custom_call.1} parent=0
    #allocation3 [shape = 'u8[32768]{0}', space=vmem, size = 0x8000, scoped, tag = 'input window, operand 3, single buffered']
    #allocation4 [shape = 's32[1]{0}', space=sflag, size = 0x4, scoped, tag = 'scoped memory for tpu_custom_call.1']
    #allocation5 [shape = 's32[1]{0}', space=sflag, size = 0x4, scoped, tag = 'scoped memory for tpu_custom_call.1']
    #allocation6 [shape = 'u8[1024]{0}', space=vmem, size = 0x400, scoped, tag = 'output window, operand 0, single buffered']
    %11 = vsyncpa [#allocation4], 0
    %12 = vsyncpa [#allocation5], 0
    // Predicated region
    $region2: #{tpu_custom_call.1} parent=1 // pred_check
      _
    $region3: #{tpu_custom_call.1} parent=1 // pred_check_branch
      %14 = sbr.rel (0) target = $region5
    $region4: #{tpu_custom_call.1} parent=1 // pred_region
      _
    $region5: #{tpu_custom_call.1} parent=1 // pred_fallthru
      _
    // Predicated region
    $region6: #{tpu_custom_call.1} parent=1 // pred_check
      _
    $region7: #{tpu_custom_call.1} parent=1 // pred_check_branch
      %16 = sbr.rel (0) target = $region9
    $region8: #{tpu_custom_call.1} parent=1 // pred_region
      _
    $region9: #{tpu_custom_call.1} parent=1 // pred_fallthru
      _
    // Predicated region
    $region10: #{tpu_custom_call.1} parent=1 // pred_check
      _
    $region11: #{tpu_custom_call.1} parent=1 // pred_check_branch
      %18 = sbr.rel (0) target = $region13
    $region12: #{tpu_custom_call.1} parent=1 // pred_region
      _
    $region13: #{tpu_custom_call.1} parent=1 // pred_fallthru
      _
    // Predicated region
    $region14: #{tpu_custom_call.1} parent=1 // pred_check
      _
    $region15: #{tpu_custom_call.1} parent=1 // pred_check_branch
      %20 = sbr.rel (0) target = $region17
    $region16: #{tpu_custom_call.1} parent=1 // pred_region
      %s22 = ssub.s32 1024, 1024
      %23 = vsyncadd [#allocation4], %s22
      %s24 = sshll.u32 [#allocation3], 4
      %s25 = int_to_ptr.vmem [resolvable:$true] %s24
      %30 = dma.hbm_to_vmem [thread:$0]  %s3, 1024, %s25, [#allocation4], 64, 64, 4
    $region17: #{tpu_custom_call.1} parent=1 // pred_fallthru
      _
    // Predicated region
    $region18: #{tpu_custom_call.1} parent=1 // pred_check
      _
    $region19: #{tpu_custom_call.1} parent=1 // pred_check_branch
      %32 = sbr.rel (0) target = $region21
    $region20: #{tpu_custom_call.1} parent=1 // pred_region
      _
    $region21: #{tpu_custom_call.1} parent=1 // pred_fallthru
      _
    // Predicated region
    $region22: #{tpu_custom_call.1} parent=1 // pred_check
      _
    $region23: #{tpu_custom_call.1} parent=1 // pred_check_branch
      %34 = sbr.rel (0) target = $region25
    $region24: #{tpu_custom_call.1} parent=1 // pred_region
      _
    $region25: #{tpu_custom_call.1} parent=1 // pred_fallthru
      _
    // Predicated region
    $region26: #{tpu_custom_call.1} parent=1 // pred_check
      _
    $region27: #{tpu_custom_call.1} parent=1 // pred_check_branch
      %36 = sbr.rel (0) target = $region29
    $region28: #{tpu_custom_call.1} parent=1 // pred_region
      %37 = dma.done [#allocation4], 1024
    $region29: #{tpu_custom_call.1} parent=1 // pred_fallthru
      _
    %v39 = vld [vmem:[%s0] sm:$0xf]
    %v40 = vld [vmem:[%s0 + $0x4] sm:$0xf]
    %vm41 = vcmask 93184
    %42 = vst.msk [vmem:[#allocation2] sm:$0xf] %vm41, %v39
    %43 = vst.msk [vmem:[#allocation2 + $0x4] sm:$0xf] %vm41, %v40
    %v44 = vld [vmem:[%s0] sm:$0xf]
    %v45 = vld [vmem:[%s0 + $0x4] sm:$0xf]
    %48 = vrot.lane.b32.xlu0 %v44, 124
    %v49 = vpop.permute.xlu0 %48
    %50 = vrot.lane.b32.xlu0 %v45, 124
    %v51 = vpop.permute.xlu0 %50
    %54 = vst.msk [vmem:[#allocation2 + $0x8] sm:$0xf] %vm41, %v49
    %55 = vst.msk [vmem:[#allocation2 + $0xc] sm:$0xf] %vm41, %v51
    %v56 = vld [vmem:[%s0] sm:$0xf]
    %v57 = vld [vmem:[%s0 + $0x4] sm:$0xf]
    %60 = vrot.lane.b32.xlu0 %v56, 120
    %v61 = vpop.permute.xlu0 %60
    %62 = vrot.lane.b32.xlu0 %v57, 120
    %v63 = vpop.permute.xlu0 %62
    %66 = vst.msk [vmem:[#allocation2 + $0x10] sm:$0xf] %vm41, %v61
    %67 = vst.msk [vmem:[#allocation2 + $0x14] sm:$0xf] %vm41, %v63
    %v68 = vld [vmem:[%s0] sm:$0xf]
    %v69 = vld [vmem:[%s0 + $0x4] sm:$0xf]
    %72 = vrot.lane.b32.xlu0 %v68, 116
    %v73 = vpop.permute.xlu0 %72
    %74 = vrot.lane.b32.xlu0 %v69, 116
    %v75 = vpop.permute.xlu0 %74
    %78 = vst.msk [vmem:[#allocation2 + $0x18] sm:$0xf] %vm41, %v73
    %79 = vst.msk [vmem:[#allocation2 + $0x1c] sm:$0xf] %vm41, %v75
    %v80 = vld [vmem:[%s0] sm:$0xf]
    %v81 = vld [vmem:[%s0 + $0x4] sm:$0xf]
    %84 = vrot.lane.b32.xlu0 %v80, 112
    %v85 = vpop.permute.xlu0 %84
    %86 = vrot.lane.b32.xlu0 %v81, 112
    %v87 = vpop.permute.xlu0 %86
    %90 = vst.msk [vmem:[#allocation2 + $0x20] sm:$0xf] %vm41, %v85
    %91 = vst.msk [vmem:[#allocation2 + $0x24] sm:$0xf] %vm41, %v87
    %v92 = vld [vmem:[%s0] sm:$0xf]
    %v93 = vld [vmem:[%s0 + $0x4] sm:$0xf]
    %96 = vrot.lane.b32.xlu0 %v92, 108
    %v97 = vpop.permute.xlu0 %96
    %98 = vrot.lane.b32.xlu0 %v93, 108
    %v99 = vpop.permute.xlu0 %98
    %102 = vst.msk [vmem:[#allocation2 + $0x28] sm:$0xf] %vm41, %v97
    %103 = vst.msk [vmem:[#allocation2 + $0x2c] sm:$0xf] %vm41, %v99
    %v104 = vld [vmem:[%s0] sm:$0xf]
    %v105 = vld [vmem:[%s0 + $0x4] sm:$0xf]
    %108 = vrot.lane.b32.xlu0 %v104, 104
    %v109 = vpop.permute.xlu0 %108
    %110 = vrot.lane.b32.xlu0 %v105, 104
    %v111 = vpop.permute.xlu0 %110
    %114 = vst.msk [vmem:[#allocation2 + $0x30] sm:$0xf] %vm41, %v109
    %115 = vst.msk [vmem:[#allocation2 + $0x34] sm:$0xf] %vm41, %v111
    %v116 = vld [vmem:[%s0] sm:$0xf]
    %v117 = vld [vmem:[%s0 + $0x4] sm:$0xf]
    %120 = vrot.lane.b32.xlu0 %v116, 100
    %v121 = vpop.permute.xlu0 %120
    %122 = vrot.lane.b32.xlu0 %v117, 100
    %v123 = vpop.permute.xlu0 %122
    %126 = vst.msk [vmem:[#allocation2 + $0x38] sm:$0xf] %vm41, %v121
    %127 = vst.msk [vmem:[#allocation2 + $0x3c] sm:$0xf] %vm41, %v123
    %v128 = vld [vmem:[%s0] sm:$0xf]
    %v129 = vld [vmem:[%s0 + $0x4] sm:$0xf]
    %132 = vrot.lane.b32.xlu0 %v128, 96
    %v133 = vpop.permute.xlu0 %132
    %134 = vrot.lane.b32.xlu0 %v129, 96
    %v135 = vpop.permute.xlu0 %134
    %138 = vst.msk [vmem:[#allocation2 + $0x40] sm:$0xf] %vm41, %v133
    %139 = vst.msk [vmem:[#allocation2 + $0x44] sm:$0xf] %vm41, %v135
    %v140 = vld [vmem:[%s0] sm:$0xf]
    %v141 = vld [vmem:[%s0 + $0x4] sm:$0xf]
    %144 = vrot.lane.b32.xlu0 %v140, 92
    %v145 = vpop.permute.xlu0 %144
    %146 = vrot.lane.b32.xlu0 %v141, 92
    %v147 = vpop.permute.xlu0 %146
    %150 = vst.msk [vmem:[#allocation2 + $0x48] sm:$0xf] %vm41, %v145
    %151 = vst.msk [vmem:[#allocation2 + $0x4c] sm:$0xf] %vm41, %v147
    %v152 = vld [vmem:[%s0] sm:$0xf]
    %v153 = vld [vmem:[%s0 + $0x4] sm:$0xf]
    %156 = vrot.lane.b32.xlu0 %v152, 88
    %v157 = vpop.permute.xlu0 %156
    %158 = vrot.lane.b32.xlu0 %v153, 88
    %v159 = vpop.permute.xlu0 %158
    %162 = vst.msk [vmem:[#allocation2 + $0x50] sm:$0xf] %vm41, %v157
    %163 = vst.msk [vmem:[#allocation2 + $0x54] sm:$0xf] %vm41, %v159
    %v164 = vld [vmem:[%s0] sm:$0xf]
    %v165 = vld [vmem:[%s0 + $0x4] sm:$0xf]
    %168 = vrot.lane.b32.xlu0 %v164, 84
    %v169 = vpop.permute.xlu0 %168
    %170 = vrot.lane.b32.xlu0 %v165, 84
    %v171 = vpop.permute.xlu0 %170
    %174 = vst.msk [vmem:[#allocation2 + $0x58] sm:$0xf] %vm41, %v169
    %175 = vst.msk [vmem:[#allocation2 + $0x5c] sm:$0xf] %vm41, %v171
    %v176 = vld [vmem:[%s0] sm:$0xf]
    %v177 = vld [vmem:[%s0 + $0x4] sm:$0xf]
    %180 = vrot.lane.b32.xlu0 %v176, 80
    %v181 = vpop.permute.xlu0 %180
    %182 = vrot.lane.b32.xlu0 %v177, 80
    %v183 = vpop.permute.xlu0 %182
    %186 = vst.msk [vmem:[#allocation2 + $0x60] sm:$0xf] %vm41, %v181
    %187 = vst.msk [vmem:[#allocation2 + $0x64] sm:$0xf] %vm41, %v183
    %v188 = vld [vmem:[%s0] sm:$0xf]
    %v189 = vld [vmem:[%s0 + $0x4] sm:$0xf]
    %192 = vrot.lane.b32.xlu0 %v188, 76
    %v193 = vpop.permute.xlu0 %192
    %194 = vrot.lane.b32.xlu0 %v189, 76
    %v195 = vpop.permute.xlu0 %194
    %198 = vst.msk [vmem:[#allocation2 + $0x68] sm:$0xf] %vm41, %v193
    %199 = vst.msk [vmem:[#allocation2 + $0x6c] sm:$0xf] %vm41, %v195
    %v200 = vld [vmem:[%s0] sm:$0xf]
    %v201 = vld [vmem:[%s0 + $0x4] sm:$0xf]
    %204 = vrot.lane.b32.xlu0 %v200, 72
    %v205 = vpop.permute.xlu0 %204
    %206 = vrot.lane.b32.xlu0 %v201, 72
    %v207 = vpop.permute.xlu0 %206
    %210 = vst.msk [vmem:[#allocation2 + $0x70] sm:$0xf] %vm41, %v205
    %211 = vst.msk [vmem:[#allocation2 + $0x74] sm:$0xf] %vm41, %v207
    %v212 = vld [vmem:[%s0] sm:$0xf]
    %v213 = vld [vmem:[%s0 + $0x4] sm:$0xf]
    %216 = vrot.lane.b32.xlu0 %v212, 68
    %v217 = vpop.permute.xlu0 %216
    %218 = vrot.lane.b32.xlu0 %v213, 68
    %v219 = vpop.permute.xlu0 %218
    %222 = vst.msk [vmem:[#allocation2 + $0x78] sm:$0xf] %vm41, %v217
    %223 = vst.msk [vmem:[#allocation2 + $0x7c] sm:$0xf] %vm41, %v219
    %v224 = vld [vmem:[%s0] sm:$0xf]
    %v225 = vld [vmem:[%s0 + $0x4] sm:$0xf]
    %v226 = vld [vmem:[%s0 + $0x8] sm:$0x1]
    %vm227 = vsmask.f32 3328
    %vm228 = vsmask.f32 7440
    %vm229 = vmor %vm227, %vm228
    %v231 = vshrl.u32 %v224, 16
    %v233 = vrot.slane %v231, 4
    %v234 = vshll.u32 %v224, 16
    %v236 = vrot.slane %v234, 5
    %v237 = vor.u32 %v233, %v236
    %v238 = vrot.slane %v237, 4
    %v240 = vshll.u32 %v225, 16
    %v242 = vrot.slane %v240, 5
    %v243 = vsel %vm229, %v238, %v242
    %v244 = vshrl.u32 %v225, 16
    %v246 = vrot.slane %v244, 4
    %v247 = vor.u32 %v246, %v242
    %v248 = vrot.slane %v247, 4
    %v250 = vshll.u32 %v226, 16
    %v252 = vrot.slane %v250, 5
    %v253 = vsel %vm229, %v248, %v252
    %254 = vrot.lane.b32.xlu0 %v243, 12
    %v255 = vpop.permute.xlu0 %254
    %256 = vrot.lane.b32.xlu0 %v253, 12
    %v257 = vpop.permute.xlu0 %256
    %vm260 = vcmask 191584
    %261 = vst.msk [vmem:[#allocation2] sm:$0xf] %vm260, %v255
    %262 = vst.msk [vmem:[#allocation2 + $0x4] sm:$0xf] %vm260, %v257
    %v263 = vld [vmem:[%s0] sm:$0xf]
    %v264 = vld [vmem:[%s0 + $0x4] sm:$0xf]
    %v265 = vld [vmem:[%s0 + $0x8] sm:$0x1]
    %v267 = vshrl.u32 %v263, 16
    %v269 = vrot.slane %v267, 4
    %v270 = vshll.u32 %v263, 16
    %v272 = vrot.slane %v270, 5
    %v273 = vor.u32 %v269, %v272
    %v274 = vrot.slane %v273, 4
    %v276 = vshll.u32 %v264, 16
    %v278 = vrot.slane %v276, 5
    %v279 = vsel %vm229, %v274, %v278
    %v280 = vshrl.u32 %v264, 16
    %v282 = vrot.slane %v280, 4
    %v283 = vor.u32 %v282, %v278
    %v284 = vrot.slane %v283, 4
    %v286 = vshll.u32 %v265, 16
    %v288 = vrot.slane %v286, 5
    %v289 = vsel %vm229, %v284, %v288
    %290 = vrot.lane.b32.xlu0 %v279, 8
    %v291 = vpop.permute.xlu0 %290
    %292 = vrot.lane.b32.xlu0 %v289, 8
    %v293 = vpop.permute.xlu0 %292
    %296 = vst.msk [vmem:[#allocation2 + $0x8] sm:$0xf] %vm260, %v291
    %297 = vst.msk [vmem:[#allocation2 + $0xc] sm:$0xf] %vm260, %v293
    %v298 = vld [vmem:[%s0] sm:$0xf]
    %v299 = vld [vmem:[%s0 + $0x4] sm:$0xf]
    %v300 = vld [vmem:[%s0 + $0x8] sm:$0x1]
    %v302 = vshrl.u32 %v298, 16
    %v304 = vrot.slane %v302, 4
    %v305 = vshll.u32 %v298, 16
    %v307 = vrot.slane %v305, 5
    %v308 = vor.u32 %v304, %v307
    %v309 = vrot.slane %v308, 4
    %v311 = vshll.u32 %v299, 16
    %v313 = vrot.slane %v311, 5
    %v314 = vsel %vm229, %v309, %v313
    %v315 = vshrl.u32 %v299, 16
    %v317 = vrot.slane %v315, 4
    %v318 = vor.u32 %v317, %v313
    %v319 = vrot.slane %v318, 4
    %v321 = vshll.u32 %v300, 16
    %v323 = vrot.slane %v321, 5
    %v324 = vsel %vm229, %v319, %v323
    %325 = vrot.lane.b32.xlu0 %v314, 4
    %v326 = vpop.permute.xlu0 %325
    %327 = vrot.lane.b32.xlu0 %v324, 4
    %v328 = vpop.permute.xlu0 %327
    %331 = vst.msk [vmem:[#allocation2 + $0x10] sm:$0xf] %vm260, %v326
    %332 = vst.msk [vmem:[#allocation2 + $0x14] sm:$0xf] %vm260, %v328
    %v333 = vld [vmem:[%s0] sm:$0xf]
    %v334 = vld [vmem:[%s0 + $0x4] sm:$0xf]
    %v335 = vld [vmem:[%s0 + $0x8] sm:$0x1]
    %v337 = vshrl.u32 %v333, 16
    %v339 = vrot.slane %v337, 4
    %v340 = vshll.u32 %v333, 16
    %v342 = vrot.slane %v340, 5
    %v343 = vor.u32 %v339, %v342
    %v344 = vrot.slane %v343, 4
    %v346 = vshll.u32 %v334, 16
    %v348 = vrot.slane %v346, 5
    %v349 = vsel %vm229, %v344, %v348
    %v350 = vshrl.u32 %v334, 16
    %v352 = vrot.slane %v350, 4
    %v353 = vor.u32 %v352, %v348
    %v354 = vrot.slane %v353, 4
    %v356 = vshll.u32 %v335, 16
    %v358 = vrot.slane %v356, 5
    %v359 = vsel %vm229, %v354, %v358
    %362 = vst.msk [vmem:[#allocation2 + $0x18] sm:$0xf] %vm260, %v349
    %363 = vst.msk [vmem:[#allocation2 + $0x1c] sm:$0xf] %vm260, %v359
    %v364 = vld [vmem:[%s0] sm:$0xf]
    %v365 = vld [vmem:[%s0 + $0x4] sm:$0xf]
    %v366 = vld [vmem:[%s0 + $0x8] sm:$0x1]
    %v368 = vshrl.u32 %v364, 16
    %v370 = vrot.slane %v368, 4
    %v371 = vshll.u32 %v364, 16
    %v373 = vrot.slane %v371, 5
    %v374 = vor.u32 %v370, %v373
    %v375 = vrot.slane %v374, 4
    %v377 = vshll.u32 %v365, 16
    %v379 = vrot.slane %v377, 5
    %v380 = vsel %vm229, %v375, %v379
    %v381 = vshrl.u32 %v365, 16
    %v383 = vrot.slane %v381, 4
    %v384 = vor.u32 %v383, %v379
    %v385 = vrot.slane %v384, 4
    %v387 = vshll.u32 %v366, 16
    %v389 = vrot.slane %v387, 5
    %v390 = vsel %vm229, %v385, %v389
    %391 = vrot.lane.b32.xlu0 %v380, 124
    %v392 = vpop.permute.xlu0 %391
    %393 = vrot.lane.b32.xlu0 %v390, 124
    %v394 = vpop.permute.xlu0 %393
    %397 = vst.msk [vmem:[#allocation2 + $0x20] sm:$0xf] %vm260, %v392
    %398 = vst.msk [vmem:[#allocation2 + $0x24] sm:$0xf] %vm260, %v394
    %v399 = vld [vmem:[%s0] sm:$0xf]
    %v400 = vld [vmem:[%s0 + $0x4] sm:$0xf]
    %v401 = vld [vmem:[%s0 + $0x8] sm:$0x1]
    %v403 = vshrl.u32 %v399, 16
    %v405 = vrot.slane %v403, 4
    %v406 = vshll.u32 %v399, 16
    %v408 = vrot.slane %v406, 5
    %v409 = vor.u32 %v405, %v408
    %v410 = vrot.slane %v409, 4
    %v412 = vshll.u32 %v400, 16
    %v414 = vrot.slane %v412, 5
    %v415 = vsel %vm229, %v410, %v414
    %v416 = vshrl.u32 %v400, 16
    %v418 = vrot.slane %v416, 4
    %v419 = vor.u32 %v418, %v414
    %v420 = vrot.slane %v419, 4
    %v422 = vshll.u32 %v401, 16
    %v424 = vrot.slane %v422, 5
    %v425 = vsel %vm229, %v420, %v424
    %426 = vrot.lane.b32.xlu0 %v415, 120
    %v427 = vpop.permute.xlu0 %426
    %428 = vrot.lane.b32.xlu0 %v425, 120
    %v429 = vpop.permute.xlu0 %428
    %432 = vst.msk [vmem:[#allocation2 + $0x28] sm:$0xf] %vm260, %v427
    %433 = vst.msk [vmem:[#allocation2 + $0x2c] sm:$0xf] %vm260, %v429
    %v434 = vld [vmem:[%s0] sm:$0xf]
    %v435 = vld [vmem:[%s0 + $0x4] sm:$0xf]
    %v436 = vld [vmem:[%s0 + $0x8] sm:$0x1]
    %v438 = vshrl.u32 %v434, 16
    %v440 = vrot.slane %v438, 4
    %v441 = vshll.u32 %v434, 16
    %v443 = vrot.slane %v441, 5
    %v444 = vor.u32 %v440, %v443
    %v445 = vrot.slane %v444, 4
    %v447 = vshll.u32 %v435, 16
    %v449 = vrot.slane %v447, 5
    %v450 = vsel %vm229, %v445, %v449
    %v451 = vshrl.u32 %v435, 16
    %v453 = vrot.slane %v451, 4
    %v454 = vor.u32 %v453, %v449
    %v455 = vrot.slane %v454, 4
    %v457 = vshll.u32 %v436, 16
    %v459 = vrot.slane %v457, 5
    %v460 = vsel %vm229, %v455, %v459
    %461 = vrot.lane.b32.xlu0 %v450, 116
    %v462 = vpop.permute.xlu0 %461
    %463 = vrot.lane.b32.xlu0 %v460, 116
    %v464 = vpop.permute.xlu0 %463
    %467 = vst.msk [vmem:[#allocation2 + $0x30] sm:$0xf] %vm260, %v462
    %468 = vst.msk [vmem:[#allocation2 + $0x34] sm:$0xf] %vm260, %v464
    %v469 = vld [vmem:[%s0] sm:$0xf]
    %v470 = vld [vmem:[%s0 + $0x4] sm:$0xf]
    %v471 = vld [vmem:[%s0 + $0x8] sm:$0x1]
    %v473 = vshrl.u32 %v469, 16
    %v475 = vrot.slane %v473, 4
    %v476 = vshll.u32 %v469, 16
    %v478 = vrot.slane %v476, 5
    %v479 = vor.u32 %v475, %v478
    %v480 = vrot.slane %v479, 4
    %v482 = vshll.u32 %v470, 16
    %v484 = vrot.slane %v482, 5
    %v485 = vsel %vm229, %v480, %v484
    %v486 = vshrl.u32 %v470, 16
    %v488 = vrot.slane %v486, 4
    %v489 = vor.u32 %v488, %v484
    %v490 = vrot.slane %v489, 4
    %v492 = vshll.u32 %v471, 16
    %v494 = vrot.slane %v492, 5
    %v495 = vsel %vm229, %v490, %v494
    %496 = vrot.lane.b32.xlu0 %v485, 112
    %v497 = vpop.permute.xlu0 %496
    %498 = vrot.lane.b32.xlu0 %v495, 112
    %v499 = vpop.permute.xlu0 %498
    %502 = vst.msk [vmem:[#allocation2 + $0x38] sm:$0xf] %vm260, %v497
    %503 = vst.msk [vmem:[#allocation2 + $0x3c] sm:$0xf] %vm260, %v499
    %v504 = vld [vmem:[%s0] sm:$0xf]
    %v505 = vld [vmem:[%s0 + $0x4] sm:$0xf]
    %v506 = vld [vmem:[%s0 + $0x8] sm:$0x1]
    %v508 = vshrl.u32 %v504, 16
    %v510 = vrot.slane %v508, 4
    %v511 = vshll.u32 %v504, 16
    %v513 = vrot.slane %v511, 5
    %v514 = vor.u32 %v510, %v513
    %v515 = vrot.slane %v514, 4
    %v517 = vshll.u32 %v505, 16
    %v519 = vrot.slane %v517, 5
    %v520 = vsel %vm229, %v515, %v519
    %v521 = vshrl.u32 %v505, 16
    %v523 = vrot.slane %v521, 4
    %v524 = vor.u32 %v523, %v519
    %v525 = vrot.slane %v524, 4
    %v527 = vshll.u32 %v506, 16
    %v529 = vrot.slane %v527, 5
    %v530 = vsel %vm229, %v525, %v529
    %531 = vrot.lane.b32.xlu0 %v520, 108
    %v532 = vpop.permute.xlu0 %531
    %533 = vrot.lane.b32.xlu0 %v530, 108
    %v534 = vpop.permute.xlu0 %533
    %537 = vst.msk [vmem:[#allocation2 + $0x40] sm:$0xf] %vm260, %v532
    %538 = vst.msk [vmem:[#allocation2 + $0x44] sm:$0xf] %vm260, %v534
    %v539 = vld [vmem:[%s0] sm:$0xf]
    %v540 = vld [vmem:[%s0 + $0x4] sm:$0xf]
    %v541 = vld [vmem:[%s0 + $0x8] sm:$0x1]
    %v543 = vshrl.u32 %v539, 16
    %v545 = vrot.slane %v543, 4
    %v546 = vshll.u32 %v539, 16
    %v548 = vrot.slane %v546, 5
    %v549 = vor.u32 %v545, %v548
    %v550 = vrot.slane %v549, 4
    %v552 = vshll.u32 %v540, 16
    %v554 = vrot.slane %v552, 5
    %v555 = vsel %vm229, %v550, %v554
    %v556 = vshrl.u32 %v540, 16
    %v558 = vrot.slane %v556, 4
    %v559 = vor.u32 %v558, %v554
    %v560 = vrot.slane %v559, 4
    %v562 = vshll.u32 %v541, 16
    %v564 = vrot.slane %v562, 5
    %v565 = vsel %vm229, %v560, %v564
    %566 = vrot.lane.b32.xlu0 %v555, 104
    %v567 = vpop.permute.xlu0 %566
    %568 = vrot.lane.b32.xlu0 %v565, 104
    %v569 = vpop.permute.xlu0 %568
    %572 = vst.msk [vmem:[#allocation2 + $0x48] sm:$0xf] %vm260, %v567
    %573 = vst.msk [vmem:[#allocation2 + $0x4c] sm:$0xf] %vm260, %v569
    %v574 = vld [vmem:[%s0] sm:$0xf]
    %v575 = vld [vmem:[%s0 + $0x4] sm:$0xf]
    %v576 = vld [vmem:[%s0 + $0x8] sm:$0x1]
    %v578 = vshrl.u32 %v574, 16
    %v580 = vrot.slane %v578, 4
    %v581 = vshll.u32 %v574, 16
    %v583 = vrot.slane %v581, 5
    %v584 = vor.u32 %v580, %v583
    %v585 = vrot.slane %v584, 4
    %v587 = vshll.u32 %v575, 16
    %v589 = vrot.slane %v587, 5
    %v590 = vsel %vm229, %v585, %v589
    %v591 = vshrl.u32 %v575, 16
    %v593 = vrot.slane %v591, 4
    %v594 = vor.u32 %v593, %v589
    %v595 = vrot.slane %v594, 4
    %v597 = vshll.u32 %v576, 16
    %v599 = vrot.slane %v597, 5
    %v600 = vsel %vm229, %v595, %v599
    %601 = vrot.lane.b32.xlu0 %v590, 100
    %v602 = vpop.permute.xlu0 %601
    %603 = vrot.lane.b32.xlu0 %v600, 100
    %v604 = vpop.permute.xlu0 %603
    %607 = vst.msk [vmem:[#allocation2 + $0x50] sm:$0xf] %vm260, %v602
    %608 = vst.msk [vmem:[#allocation2 + $0x54] sm:$0xf] %vm260, %v604
    %v609 = vld [vmem:[%s0] sm:$0xf]
    %v610 = vld [vmem:[%s0 + $0x4] sm:$0xf]
    %v611 = vld [vmem:[%s0 + $0x8] sm:$0x1]
    %v613 = vshrl.u32 %v609, 16
    %v615 = vrot.slane %v613, 4
    %v616 = vshll.u32 %v609, 16
    %v618 = vrot.slane %v616, 5
    %v619 = vor.u32 %v615, %v618
    %v620 = vrot.slane %v619, 4
    %v622 = vshll.u32 %v610, 16
    %v624 = vrot.slane %v622, 5
    %v625 = vsel %vm229, %v620, %v624
    %v626 = vshrl.u32 %v610, 16
    %v628 = vrot.slane %v626, 4
    %v629 = vor.u32 %v628, %v624
    %v630 = vrot.slane %v629, 4
    %v632 = vshll.u32 %v611, 16
    %v634 = vrot.slane %v632, 5
    %v635 = vsel %vm229, %v630, %v634
    %636 = vrot.lane.b32.xlu0 %v625, 96
    %v637 = vpop.permute.xlu0 %636
    %638 = vrot.lane.b32.xlu0 %v635, 96
    %v639 = vpop.permute.xlu0 %638
    %642 = vst.msk [vmem:[#allocation2 + $0x58] sm:$0xf] %vm260, %v637
    %643 = vst.msk [vmem:[#allocation2 + $0x5c] sm:$0xf] %vm260, %v639
    %v644 = vld [vmem:[%s0] sm:$0xf]
    %v645 = vld [vmem:[%s0 + $0x4] sm:$0xf]
    %v646 = vld [vmem:[%s0 + $0x8] sm:$0x1]
    %v648 = vshrl.u32 %v644, 16
    %v650 = vrot.slane %v648, 4
    %v651 = vshll.u32 %v644, 16
    %v653 = vrot.slane %v651, 5
    %v654 = vor.u32 %v650, %v653
    %v655 = vrot.slane %v654, 4
    %v657 = vshll.u32 %v645, 16
    %v659 = vrot.slane %v657, 5
    %v660 = vsel %vm229, %v655, %v659
    %v661 = vshrl.u32 %v645, 16
    %v663 = vrot.slane %v661, 4
    %v664 = vor.u32 %v663, %v659
    %v665 = vrot.slane %v664, 4
    %v667 = vshll.u32 %v646, 16
    %v669 = vrot.slane %v667, 5
    %v670 = vsel %vm229, %v665, %v669
    %671 = vrot.lane.b32.xlu0 %v660, 92
    %v672 = vpop.permute.xlu0 %671
    %673 = vrot.lane.b32.xlu0 %v670, 92
    %v674 = vpop.permute.xlu0 %673
    %677 = vst.msk [vmem:[#allocation2 + $0x60] sm:$0xf] %vm260, %v672
    %678 = vst.msk [vmem:[#allocation2 + $0x64] sm:$0xf] %vm260, %v674
    %v679 = vld [vmem:[%s0] sm:$0xf]
    %v680 = vld [vmem:[%s0 + $0x4] sm:$0xf]
    %v681 = vld [vmem:[%s0 + $0x8] sm:$0x1]
    %v683 = vshrl.u32 %v679, 16
    %v685 = vrot.slane %v683, 4
    %v686 = vshll.u32 %v679, 16
    %v688 = vrot.slane %v686, 5
    %v689 = vor.u32 %v685, %v688
    %v690 = vrot.slane %v689, 4
    %v692 = vshll.u32 %v680, 16
    %v694 = vrot.slane %v692, 5
    %v695 = vsel %vm229, %v690, %v694
    %v696 = vshrl.u32 %v680, 16
    %v698 = vrot.slane %v696, 4
    %v699 = vor.u32 %v698, %v694
    %v700 = vrot.slane %v699, 4
    %v702 = vshll.u32 %v681, 16
    %v704 = vrot.slane %v702, 5
    %v705 = vsel %vm229, %v700, %v704
    %706 = vrot.lane.b32.xlu0 %v695, 88
    %v707 = vpop.permute.xlu0 %706
    %708 = vrot.lane.b32.xlu0 %v705, 88
    %v709 = vpop.permute.xlu0 %708
    %712 = vst.msk [vmem:[#allocation2 + $0x68] sm:$0xf] %vm260, %v707
    %713 = vst.msk [vmem:[#allocation2 + $0x6c] sm:$0xf] %vm260, %v709
    %v714 = vld [vmem:[%s0] sm:$0xf]
    %v715 = vld [vmem:[%s0 + $0x4] sm:$0xf]
    %v716 = vld [vmem:[%s0 + $0x8] sm:$0x1]
    %v718 = vshrl.u32 %v714, 16
    %v720 = vrot.slane %v718, 4
    %v721 = vshll.u32 %v714, 16
    %v723 = vrot.slane %v721, 5
    %v724 = vor.u32 %v720, %v723
    %v725 = vrot.slane %v724, 4
    %v727 = vshll.u32 %v715, 16
    %v729 = vrot.slane %v727, 5
    %v730 = vsel %vm229, %v725, %v729
    %v731 = vshrl.u32 %v715, 16
    %v733 = vrot.slane %v731, 4
    %v734 = vor.u32 %v733, %v729
    %v735 = vrot.slane %v734, 4
    %v737 = vshll.u32 %v716, 16
    %v739 = vrot.slane %v737, 5
    %v740 = vsel %vm229, %v735, %v739
    %741 = vrot.lane.b32.xlu0 %v730, 84
    %v742 = vpop.permute.xlu0 %741
    %743 = vrot.lane.b32.xlu0 %v740, 84
    %v744 = vpop.permute.xlu0 %743
    %747 = vst.msk [vmem:[#allocation2 + $0x70] sm:$0xf] %vm260, %v742
    %748 = vst.msk [vmem:[#allocation2 + $0x74] sm:$0xf] %vm260, %v744
    %v749 = vld [vmem:[%s0] sm:$0xf]
    %v750 = vld [vmem:[%s0 + $0x4] sm:$0xf]
    %v751 = vld [vmem:[%s0 + $0x8] sm:$0x1]
    %v753 = vshrl.u32 %v749, 16
    %v755 = vrot.slane %v753, 4
    %v756 = vshll.u32 %v749, 16
    %v758 = vrot.slane %v756, 5
    %v759 = vor.u32 %v755, %v758
    %v760 = vrot.slane %v759, 4
    %v762 = vshll.u32 %v750, 16
    %v764 = vrot.slane %v762, 5
    %v765 = vsel %vm229, %v760, %v764
    %v766 = vshrl.u32 %v750, 16
    %v768 = vrot.slane %v766, 4
    %v769 = vor.u32 %v768, %v764
    %v770 = vrot.slane %v769, 4
    %v772 = vshll.u32 %v751, 16
    %v774 = vrot.slane %v772, 5
    %v775 = vsel %vm229, %v770, %v774
    %776 = vrot.lane.b32.xlu0 %v765, 80
    %v777 = vpop.permute.xlu0 %776
    %778 = vrot.lane.b32.xlu0 %v775, 80
    %v779 = vpop.permute.xlu0 %778
    %782 = vst.msk [vmem:[#allocation2 + $0x78] sm:$0xf] %vm260, %v777
    %783 = vst.msk [vmem:[#allocation2 + $0x7c] sm:$0xf] %vm260, %v779
    %v784 = vld [vmem:[%s0] sm:$0xe]
    %v785 = vld [vmem:[%s0 + $0x4] sm:$0xf]
    %v786 = vld [vmem:[%s0 + $0x8] sm:$0x1]
    %vm790 = vcmask 1042432
    %vm791 = vcmask 1046532
    %vm792 = vmor %vm790, %vm791
    %v793 = vrot.slane %v784, 5
    %v794 = vrot.slane %v793, 4
    %v795 = vrot.slane %v785, 5
    %v796 = vsel %vm792, %v794, %v795
    %v797 = vrot.slane %v795, 4
    %v798 = vrot.slane %v786, 5
    %v799 = vsel %vm792, %v797, %v798
    %800 = vrot.lane.b32.xlu0 %v796, 24
    %v801 = vpop.permute.xlu0 %800
    %802 = vrot.lane.b32.xlu0 %v799, 24
    %v803 = vpop.permute.xlu0 %802
    %vm806 = vcmask 289984
    %807 = vst.msk [vmem:[#allocation2] sm:$0xf] %vm806, %v801
    %808 = vst.msk [vmem:[#allocation2 + $0x4] sm:$0xf] %vm806, %v803
    %v809 = vld [vmem:[%s0] sm:$0xe]
    %v810 = vld [vmem:[%s0 + $0x4] sm:$0xf]
    %v811 = vld [vmem:[%s0 + $0x8] sm:$0x1]
    %v815 = vrot.slane %v809, 5
    %v816 = vrot.slane %v815, 4
    %v817 = vrot.slane %v810, 5
    %v818 = vsel %vm792, %v816, %v817
    %v819 = vrot.slane %v817, 4
    %v820 = vrot.slane %v811, 5
    %v821 = vsel %vm792, %v819, %v820
    %822 = vrot.lane.b32.xlu0 %v818, 20
    %v823 = vpop.permute.xlu0 %822
    %824 = vrot.lane.b32.xlu0 %v821, 20
    %v825 = vpop.permute.xlu0 %824
    %828 = vst.msk [vmem:[#allocation2 + $0x8] sm:$0xf] %vm806, %v823
    %829 = vst.msk [vmem:[#allocation2 + $0xc] sm:$0xf] %vm806, %v825
    %v830 = vld [vmem:[%s0] sm:$0xe]
    %v831 = vld [vmem:[%s0 + $0x4] sm:$0xf]
    %v832 = vld [vmem:[%s0 + $0x8] sm:$0x1]
    %v836 = vrot.slane %v830, 5
    %v837 = vrot.slane %v836, 4
    %v838 = vrot.slane %v831, 5
    %v839 = vsel %vm792, %v837, %v838
    %v840 = vrot.slane %v838, 4
    %v841 = vrot.slane %v832, 5
    %v842 = vsel %vm792, %v840, %v841
    %843 = vrot.lane.b32.xlu0 %v839, 16
    %v844 = vpop.permute.xlu0 %843
    %845 = vrot.lane.b32.xlu0 %v842, 16
    %v846 = vpop.permute.xlu0 %845
    %849 = vst.msk [vmem:[#allocation2 + $0x10] sm:$0xf] %vm806, %v844
    %850 = vst.msk [vmem:[#allocation2 + $0x14] sm:$0xf] %vm806, %v846
    %v851 = vld [vmem:[%s0] sm:$0xe]
    %v852 = vld [vmem:[%s0 + $0x4] sm:$0xf]
    %v853 = vld [vmem:[%s0 + $0x8] sm:$0x1]
    %v857 = vrot.slane %v851, 5
    %v858 = vrot.slane %v857, 4
    %v859 = vrot.slane %v852, 5
    %v860 = vsel %vm792, %v858, %v859
    %v861 = vrot.slane %v859, 4
    %v862 = vrot.slane %v853, 5
    %v863 = vsel %vm792, %v861, %v862
    %864 = vrot.lane.b32.xlu0 %v860, 12
    %v865 = vpop.permute.xlu0 %864
    %866 = vrot.lane.b32.xlu0 %v863, 12
    %v867 = vpop.permute.xlu0 %866
    %870 = vst.msk [vmem:[#allocation2 + $0x18] sm:$0xf] %vm806, %v865
    %871 = vst.msk [vmem:[#allocation2 + $0x1c] sm:$0xf] %vm806, %v867
    %v872 = vld [vmem:[%s0] sm:$0xe]
    %v873 = vld [vmem:[%s0 + $0x4] sm:$0xf]
    %v874 = vld [vmem:[%s0 + $0x8] sm:$0x1]
    %v878 = vrot.slane %v872, 5
    %v879 = vrot.slane %v878, 4
    %v880 = vrot.slane %v873, 5
    %v881 = vsel %vm792, %v879, %v880
    %v882 = vrot.slane %v880, 4
    %v883 = vrot.slane %v874, 5
    %v884 = vsel %vm792, %v882, %v883
    %885 = vrot.lane.b32.xlu0 %v881, 8
    %v886 = vpop.permute.xlu0 %885
    %887 = vrot.lane.b32.xlu0 %v884, 8
    %v888 = vpop.permute.xlu0 %887
    %891 = vst.msk [vmem:[#allocation2 + $0x20] sm:$0xf] %vm806, %v886
    %892 = vst.msk [vmem:[#allocation2 + $0x24] sm:$0xf] %vm806, %v888
    %v893 = vld [vmem:[%s0] sm:$0xe]
    %v894 = vld [vmem:[%s0 + $0x4] sm:$0xf]
    %v895 = vld [vmem:[%s0 + $0x8] sm:$0x1]
    %v899 = vrot.slane %v893, 5
    %v900 = vrot.slane %v899, 4
    %v901 = vrot.slane %v894, 5
    %v902 = vsel %vm792, %v900, %v901
    %v903 = vrot.slane %v901, 4
    %v904 = vrot.slane %v895, 5
    %v905 = vsel %vm792, %v903, %v904
    %906 = vrot.lane.b32.xlu0 %v902, 4
    %v907 = vpop.permute.xlu0 %906
    %908 = vrot.lane.b32.xlu0 %v905, 4
    %v909 = vpop.permute.xlu0 %908
    %912 = vst.msk [vmem:[#allocation2 + $0x28] sm:$0xf] %vm806, %v907
    %913 = vst.msk [vmem:[#allocation2 + $0x2c] sm:$0xf] %vm806, %v909
    %v914 = vld [vmem:[%s0] sm:$0xe]
    %v915 = vld [vmem:[%s0 + $0x4] sm:$0xf]
    %v916 = vld [vmem:[%s0 + $0x8] sm:$0x1]
    %v920 = vrot.slane %v914, 5
    %v921 = vrot.slane %v920, 4
    %v922 = vrot.slane %v915, 5
    %v923 = vsel %vm792, %v921, %v922
    %v924 = vrot.slane %v922, 4
    %v925 = vrot.slane %v916, 5
    %v926 = vsel %vm792, %v924, %v925
    %929 = vst.msk [vmem:[#allocation2 + $0x30] sm:$0xf] %vm806, %v923
    %930 = vst.msk [vmem:[#allocation2 + $0x34] sm:$0xf] %vm806, %v926
    %v931 = vld [vmem:[%s0] sm:$0xe]
    %v932 = vld [vmem:[%s0 + $0x4] sm:$0xf]
    %v933 = vld [vmem:[%s0 + $0x8] sm:$0x1]
    %v937 = vrot.slane %v931, 5
    %v938 = vrot.slane %v937, 4
    %v939 = vrot.slane %v932, 5
    %v940 = vsel %vm792, %v938, %v939
    %v941 = vrot.slane %v939, 4
    %v942 = vrot.slane %v933, 5
    %v943 = vsel %vm792, %v941, %v942
    %944 = vrot.lane.b32.xlu0 %v940, 124
    %v945 = vpop.permute.xlu0 %944
    %946 = vrot.lane.b32.xlu0 %v943, 124
    %v947 = vpop.permute.xlu0 %946
    %950 = vst.msk [vmem:[#allocation2 + $0x38] sm:$0xf] %vm806, %v945
    %951 = vst.msk [vmem:[#allocation2 + $0x3c] sm:$0xf] %vm806, %v947
    %v952 = vld [vmem:[%s0] sm:$0xe]
    %v953 = vld [vmem:[%s0 + $0x4] sm:$0xf]
    %v954 = vld [vmem:[%s0 + $0x8] sm:$0x1]
    %v958 = vrot.slane %v952, 5
    %v959 = vrot.slane %v958, 4
    %v960 = vrot.slane %v953, 5
    %v961 = vsel %vm792, %v959, %v960
    %v962 = vrot.slane %v960, 4
    %v963 = vrot.slane %v954, 5
    %v964 = vsel %vm792, %v962, %v963
    %965 = vrot.lane.b32.xlu0 %v961, 120
    %v966 = vpop.permute.xlu0 %965
    %967 = vrot.lane.b32.xlu0 %v964, 120
    %v968 = vpop.permute.xlu0 %967
    %971 = vst.msk [vmem:[#allocation2 + $0x40] sm:$0xf] %vm806, %v966
    %972 = vst.msk [vmem:[#allocation2 + $0x44] sm:$0xf] %vm806, %v968
    %v973 = vld [vmem:[%s0] sm:$0xe]
    %v974 = vld [vmem:[%s0 + $0x4] sm:$0xf]
    %v975 = vld [vmem:[%s0 + $0x8] sm:$0x1]
    %v979 = vrot.slane %v973, 5
    %v980 = vrot.slane %v979, 4
    %v981 = vrot.slane %v974, 5
    %v982 = vsel %vm792, %v980, %v981
    %v983 = vrot.slane %v981, 4
    %v984 = vrot.slane %v975, 5
    %v985 = vsel %vm792, %v983, %v984
    %986 = vrot.lane.b32.xlu0 %v982, 116
    %v987 = vpop.permute.xlu0 %986
    %988 = vrot.lane.b32.xlu0 %v985, 116
    %v989 = vpop.permute.xlu0 %988
    %992 = vst.msk [vmem:[#allocation2 + $0x48] sm:$0xf] %vm806, %v987
    %993 = vst.msk [vmem:[#allocation2 + $0x4c] sm:$0xf] %vm806, %v989
    %v994 = vld [vmem:[%s0] sm:$0xe]
    %v995 = vld [vmem:[%s0 + $0x4] sm:$0xf]
    %v996 = vld [vmem:[%s0 + $0x8] sm:$0x1]
    %v1000 = vrot.slane %v994, 5
    %v1001 = vrot.slane %v1000, 4
    %v1002 = vrot.slane %v995, 5
    %v1003 = vsel %vm792, %v1001, %v1002
    %v1004 = vrot.slane %v1002, 4
    %v1005 = vrot.slane %v996, 5
    %v1006 = vsel %vm792, %v1004, %v1005
    %1007 = vrot.lane.b32.xlu0 %v1003, 112
    %v1008 = vpop.permute.xlu0 %1007
    %1009 = vrot.lane.b32.xlu0 %v1006, 112
    %v1010 = vpop.permute.xlu0 %1009
    %1013 = vst.msk [vmem:[#allocation2 + $0x50] sm:$0xf] %vm806, %v1008
    %1014 = vst.msk [vmem:[#allocation2 + $0x54] sm:$0xf] %vm806, %v1010
    %v1015 = vld [vmem:[%s0] sm:$0xe]
    %v1016 = vld [vmem:[%s0 + $0x4] sm:$0xf]
    %v1017 = vld [vmem:[%s0 + $0x8] sm:$0x1]
    %v1021 = vrot.slane %v1015, 5
    %v1022 = vrot.slane %v1021, 4
    %v1023 = vrot.slane %v1016, 5
    %v1024 = vsel %vm792, %v1022, %v1023
    %v1025 = vrot.slane %v1023, 4
    %v1026 = vrot.slane %v1017, 5
    %v1027 = vsel %vm792, %v1025, %v1026
    %1028 = vrot.lane.b32.xlu0 %v1024, 108
    %v1029 = vpop.permute.xlu0 %1028
    %1030 = vrot.lane.b32.xlu0 %v1027, 108
    %v1031 = vpop.permute.xlu0 %1030
    %1034 = vst.msk [vmem:[#allocation2 + $0x58] sm:$0xf] %vm806, %v1029
    %1035 = vst.msk [vmem:[#allocation2 + $0x5c] sm:$0xf] %vm806, %v1031
    %v1036 = vld [vmem:[%s0] sm:$0xe]
    %v1037 = vld [vmem:[%s0 + $0x4] sm:$0xf]
    %v1038 = vld [vmem:[%s0 + $0x8] sm:$0x1]
    %v1042 = vrot.slane %v1036, 5
    %v1043 = vrot.slane %v1042, 4
    %v1044 = vrot.slane %v1037, 5
    %v1045 = vsel %vm792, %v1043, %v1044
    %v1046 = vrot.slane %v1044, 4
    %v1047 = vrot.slane %v1038, 5
    %v1048 = vsel %vm792, %v1046, %v1047
    %1049 = vrot.lane.b32.xlu0 %v1045, 104
    %v1050 = vpop.permute.xlu0 %1049
    %1051 = vrot.lane.b32.xlu0 %v1048, 104
    %v1052 = vpop.permute.xlu0 %1051
    %1055 = vst.msk [vmem:[#allocation2 + $0x60] sm:$0xf] %vm806, %v1050
    %1056 = vst.msk [vmem:[#allocation2 + $0x64] sm:$0xf] %vm806, %v1052
    %v1057 = vld [vmem:[%s0] sm:$0xe]
    %v1058 = vld [vmem:[%s0 + $0x4] sm:$0xf]
    %v1059 = vld [vmem:[%s0 + $0x8] sm:$0x1]
    %v1063 = vrot.slane %v1057, 5
    %v1064 = vrot.slane %v1063, 4
    %v1065 = vrot.slane %v1058, 5
    %v1066 = vsel %vm792, %v1064, %v1065
    %v1067 = vrot.slane %v1065, 4
    %v1068 = vrot.slane %v1059, 5
    %v1069 = vsel %vm792, %v1067, %v1068
    %1070 = vrot.lane.b32.xlu0 %v1066, 100
    %v1071 = vpop.permute.xlu0 %1070
    %1072 = vrot.lane.b32.xlu0 %v1069, 100
    %v1073 = vpop.permute.xlu0 %1072
    %1076 = vst.msk [vmem:[#allocation2 + $0x68] sm:$0xf] %vm806, %v1071
    %1077 = vst.msk [vmem:[#allocation2 + $0x6c] sm:$0xf] %vm806, %v1073
    %v1078 = vld [vmem:[%s0] sm:$0xe]
    %v1079 = vld [vmem:[%s0 + $0x4] sm:$0xf]
    %v1080 = vld [vmem:[%s0 + $0x8] sm:$0x1]
    %v1084 = vrot.slane %v1078, 5
    %v1085 = vrot.slane %v1084, 4
    %v1086 = vrot.slane %v1079, 5
    %v1087 = vsel %vm792, %v1085, %v1086
    %v1088 = vrot.slane %v1086, 4
    %v1089 = vrot.slane %v1080, 5
    %v1090 = vsel %vm792, %v1088, %v1089
    %1091 = vrot.lane.b32.xlu0 %v1087, 96
    %v1092 = vpop.permute.xlu0 %1091
    %1093 = vrot.lane.b32.xlu0 %v1090, 96
    %v1094 = vpop.permute.xlu0 %1093
    %1097 = vst.msk [vmem:[#allocation2 + $0x70] sm:$0xf] %vm806, %v1092
    %1098 = vst.msk [vmem:[#allocation2 + $0x74] sm:$0xf] %vm806, %v1094
    %v1099 = vld [vmem:[%s0] sm:$0xe]
    %v1100 = vld [vmem:[%s0 + $0x4] sm:$0xf]
    %v1101 = vld [vmem:[%s0 + $0x8] sm:$0x1]
    %v1105 = vrot.slane %v1099, 5
    %v1106 = vrot.slane %v1105, 4
    %v1107 = vrot.slane %v1100, 5
    %v1108 = vsel %vm792, %v1106, %v1107
    %v1109 = vrot.slane %v1107, 4
    %v1110 = vrot.slane %v1101, 5
    %v1111 = vsel %vm792, %v1109, %v1110
    %1112 = vrot.lane.b32.xlu0 %v1108, 92
    %v1113 = vpop.permute.xlu0 %1112
    %1114 = vrot.lane.b32.xlu0 %v1111, 92
    %v1115 = vpop.permute.xlu0 %1114
    %1118 = vst.msk [vmem:[#allocation2 + $0x78] sm:$0xf] %vm806, %v1113
    %1119 = vst.msk [vmem:[#allocation2 + $0x7c] sm:$0xf] %vm806, %v1115
    %s1120 = scalar_lea.vmem %s0, 12
    %v1121 = vld [vmem:[%s1120] sm:$0xf]
    %v1122 = vld [vmem:[%s1120 + $0x4] sm:$0xf]
    %1123 = vst.msk [vmem:[#allocation2 + $0x80] sm:$0xf] %vm41, %v1121
    %1124 = vst.msk [vmem:[#allocation2 + $0x84] sm:$0xf] %vm41, %v1122
    %v1125 = vld [vmem:[%s1120] sm:$0xf]
    %v1126 = vld [vmem:[%s1120 + $0x4] sm:$0xf]
    %1129 = vrot.lane.b32.xlu0 %v1125, 124
    %v1130 = vpop.permute.xlu0 %1129
    %1131 = vrot.lane.b32.xlu0 %v1126, 124
    %v1132 = vpop.permute.xlu0 %1131
    %1135 = vst.msk [vmem:[#allocation2 + $0x88] sm:$0xf] %vm41, %v1130
    %1136 = vst.msk [vmem:[#allocation2 + $0x8c] sm:$0xf] %vm41, %v1132
    %v1137 = vld [vmem:[%s1120] sm:$0xf]
    %v1138 = vld [vmem:[%s1120 + $0x4] sm:$0xf]
    %1141 = vrot.lane.b32.xlu0 %v1137, 120
    %v1142 = vpop.permute.xlu0 %1141
    %1143 = vrot.lane.b32.xlu0 %v1138, 120
    %v1144 = vpop.permute.xlu0 %1143
    %1147 = vst.msk [vmem:[#allocation2 + $0x90] sm:$0xf] %vm41, %v1142
    %1148 = vst.msk [vmem:[#allocation2 + $0x94] sm:$0xf] %vm41, %v1144
    %v1149 = vld [vmem:[%s1120] sm:$0xf]
    %v1150 = vld [vmem:[%s1120 + $0x4] sm:$0xf]
    %1153 = vrot.lane.b32.xlu0 %v1149, 116
    %v1154 = vpop.permute.xlu0 %1153
    %1155 = vrot.lane.b32.xlu0 %v1150, 116
    %v1156 = vpop.permute.xlu0 %1155
    %1159 = vst.msk [vmem:[#allocation2 + $0x98] sm:$0xf] %vm41, %v1154
    %1160 = vst.msk [vmem:[#allocation2 + $0x9c] sm:$0xf] %vm41, %v1156
    %v1161 = vld [vmem:[%s1120] sm:$0xf]
    %v1162 = vld [vmem:[%s1120 + $0x4] sm:$0xf]
    %1165 = vrot.lane.b32.xlu0 %v1161, 112
    %v1166 = vpop.permute.xlu0 %1165
    %1167 = vrot.lane.b32.xlu0 %v1162, 112
    %v1168 = vpop.permute.xlu0 %1167
    %1171 = vst.msk [vmem:[#allocation2 + $0xa0] sm:$0xf] %vm41, %v1166
    %1172 = vst.msk [vmem:[#allocation2 + $0xa4] sm:$0xf] %vm41, %v1168
    %v1173 = vld [vmem:[%s1120] sm:$0xf]
    %v1174 = vld [vmem:[%s1120 + $0x4] sm:$0xf]
    %1177 = vrot.lane.b32.xlu0 %v1173, 108
    %v1178 = vpop.permute.xlu0 %1177
    %1179 = vrot.lane.b32.xlu0 %v1174, 108
    %v1180 = vpop.permute.xlu0 %1179
    %1183 = vst.msk [vmem:[#allocation2 + $0xa8] sm:$0xf] %vm41, %v1178
    %1184 = vst.msk [vmem:[#allocation2 + $0xac] sm:$0xf] %vm41, %v1180
    %v1185 = vld [vmem:[%s1120] sm:$0xf]
    %v1186 = vld [vmem:[%s1120 + $0x4] sm:$0xf]
    %1189 = vrot.lane.b32.xlu0 %v1185, 104
    %v1190 = vpop.permute.xlu0 %1189
    %1191 = vrot.lane.b32.xlu0 %v1186, 104
    %v1192 = vpop.permute.xlu0 %1191
    %1195 = vst.msk [vmem:[#allocation2 + $0xb0] sm:$0xf] %vm41, %v1190
    %1196 = vst.msk [vmem:[#allocation2 + $0xb4] sm:$0xf] %vm41, %v1192
    %v1197 = vld [vmem:[%s1120] sm:$0xf]
    %v1198 = vld [vmem:[%s1120 + $0x4] sm:$0xf]
    %1201 = vrot.lane.b32.xlu0 %v1197, 100
    %v1202 = vpop.permute.xlu0 %1201
    %1203 = vrot.lane.b32.xlu0 %v1198, 100
    %v1204 = vpop.permute.xlu0 %1203
    %1207 = vst.msk [vmem:[#allocation2 + $0xb8] sm:$0xf] %vm41, %v1202
    %1208 = vst.msk [vmem:[#allocation2 + $0xbc] sm:$0xf] %vm41, %v1204
    %v1209 = vld [vmem:[%s1120] sm:$0xf]
    %v1210 = vld [vmem:[%s1120 + $0x4] sm:$0xf]
    %1213 = vrot.lane.b32.xlu0 %v1209, 96
    %v1214 = vpop.permute.xlu0 %1213
    %1215 = vrot.lane.b32.xlu0 %v1210, 96
    %v1216 = vpop.permute.xlu0 %1215
    %1219 = vst.msk [vmem:[#allocation2 + $0xc0] sm:$0xf] %vm41, %v1214
    %1220 = vst.msk [vmem:[#allocation2 + $0xc4] sm:$0xf] %vm41, %v1216
    %v1221 = vld [vmem:[%s1120] sm:$0xf]
    %v1222 = vld [vmem:[%s1120 + $0x4] sm:$0xf]
    %1225 = vrot.lane.b32.xlu0 %v1221, 92
    %v1226 = vpop.permute.xlu0 %1225
    %1227 = vrot.lane.b32.xlu0 %v1222, 92
    %v1228 = vpop.permute.xlu0 %1227
    %1231 = vst.msk [vmem:[#allocation2 + $0xc8] sm:$0xf] %vm41, %v1226
    %1232 = vst.msk [vmem:[#allocation2 + $0xcc] sm:$0xf] %vm41, %v1228
    %v1233 = vld [vmem:[%s1120] sm:$0xf]
    %v1234 = vld [vmem:[%s1120 + $0x4] sm:$0xf]
    %1237 = vrot.lane.b32.xlu0 %v1233, 88
    %v1238 = vpop.permute.xlu0 %1237
    %1239 = vrot.lane.b32.xlu0 %v1234, 88
    %v1240 = vpop.permute.xlu0 %1239
    %1243 = vst.msk [vmem:[#allocation2 + $0xd0] sm:$0xf] %vm41, %v1238
    %1244 = vst.msk [vmem:[#allocation2 + $0xd4] sm:$0xf] %vm41, %v1240
    %v1245 = vld [vmem:[%s1120] sm:$0xf]
    %v1246 = vld [vmem:[%s1120 + $0x4] sm:$0xf]
    %1249 = vrot.lane.b32.xlu0 %v1245, 84
    %v1250 = vpop.permute.xlu0 %1249
    %1251 = vrot.lane.b32.xlu0 %v1246, 84
    %v1252 = vpop.permute.xlu0 %1251
    %1255 = vst.msk [vmem:[#allocation2 + $0xd8] sm:$0xf] %vm41, %v1250
    %1256 = vst.msk [vmem:[#allocation2 + $0xdc] sm:$0xf] %vm41, %v1252
    %v1257 = vld [vmem:[%s1120] sm:$0xf]
    %v1258 = vld [vmem:[%s1120 + $0x4] sm:$0xf]
    %1261 = vrot.lane.b32.xlu0 %v1257, 80
    %v1262 = vpop.permute.xlu0 %1261
    %1263 = vrot.lane.b32.xlu0 %v1258, 80
    %v1264 = vpop.permute.xlu0 %1263
    %1267 = vst.msk [vmem:[#allocation2 + $0xe0] sm:$0xf] %vm41, %v1262
    %1268 = vst.msk [vmem:[#allocation2 + $0xe4] sm:$0xf] %vm41, %v1264
    %v1269 = vld [vmem:[%s1120] sm:$0xf]
    %v1270 = vld [vmem:[%s1120 + $0x4] sm:$0xf]
    %1273 = vrot.lane.b32.xlu0 %v1269, 76
    %v1274 = vpop.permute.xlu0 %1273
    %1275 = vrot.lane.b32.xlu0 %v1270, 76
    %v1276 = vpop.permute.xlu0 %1275
    %1279 = vst.msk [vmem:[#allocation2 + $0xe8] sm:$0xf] %vm41, %v1274
    %1280 = vst.msk [vmem:[#allocation2 + $0xec] sm:$0xf] %vm41, %v1276
    %v1281 = vld [vmem:[%s1120] sm:$0xf]
    %v1282 = vld [vmem:[%s1120 + $0x4] sm:$0xf]
    %1285 = vrot.lane.b32.xlu0 %v1281, 72
    %v1286 = vpop.permute.xlu0 %1285
    %1287 = vrot.lane.b32.xlu0 %v1282, 72
    %v1288 = vpop.permute.xlu0 %1287
    %1291 = vst.msk [vmem:[#allocation2 + $0xf0] sm:$0xf] %vm41, %v1286
    %1292 = vst.msk [vmem:[#allocation2 + $0xf4] sm:$0xf] %vm41, %v1288
    %v1293 = vld [vmem:[%s1120] sm:$0xf]
    %v1294 = vld [vmem:[%s1120 + $0x4] sm:$0xf]
    %1297 = vrot.lane.b32.xlu0 %v1293, 68
    %v1298 = vpop.permute.xlu0 %1297
    %1299 = vrot.lane.b32.xlu0 %v1294, 68
    %v1300 = vpop.permute.xlu0 %1299
    %1303 = vst.msk [vmem:[#allocation2 + $0xf8] sm:$0xf] %vm41, %v1298
    %1304 = vst.msk [vmem:[#allocation2 + $0xfc] sm:$0xf] %vm41, %v1300
    %v1305 = vld [vmem:[%s1120] sm:$0xf]
    %v1306 = vld [vmem:[%s1120 + $0x4] sm:$0xf]
    %v1307 = vld [vmem:[%s1120 + $0x8] sm:$0x1]
    %v1309 = vshrl.u32 %v1305, 16
    %v1311 = vrot.slane %v1309, 4
    %v1312 = vshll.u32 %v1305, 16
    %v1314 = vrot.slane %v1312, 5
    %v1315 = vor.u32 %v1311, %v1314
    %v1316 = vrot.slane %v1315, 4
    %v1318 = vshll.u32 %v1306, 16
    %v1320 = vrot.slane %v1318, 5
    %v1321 = vsel %vm229, %v1316, %v1320
    %v1322 = vshrl.u32 %v1306, 16
    %v1324 = vrot.slane %v1322, 4
    %v1325 = vor.u32 %v1324, %v1320
    %v1326 = vrot.slane %v1325, 4
    %v1328 = vshll.u32 %v1307, 16
    %v1330 = vrot.slane %v1328, 5
    %v1331 = vsel %vm229, %v1326, %v1330
    %1332 = vrot.lane.b32.xlu0 %v1321, 12
    %v1333 = vpop.permute.xlu0 %1332
    %1334 = vrot.lane.b32.xlu0 %v1331, 12
    %v1335 = vpop.permute.xlu0 %1334
    %1338 = vst.msk [vmem:[#allocation2 + $0x80] sm:$0xf] %vm260, %v1333
    %1339 = vst.msk [vmem:[#allocation2 + $0x84] sm:$0xf] %vm260, %v1335
    %v1340 = vld [vmem:[%s1120] sm:$0xf]
    %v1341 = vld [vmem:[%s1120 + $0x4] sm:$0xf]
    %v1342 = vld [vmem:[%s1120 + $0x8] sm:$0x1]
    %v1344 = vshrl.u32 %v1340, 16
    %v1346 = vrot.slane %v1344, 4
    %v1347 = vshll.u32 %v1340, 16
    %v1349 = vrot.slane %v1347, 5
    %v1350 = vor.u32 %v1346, %v1349
    %v1351 = vrot.slane %v1350, 4
    %v1353 = vshll.u32 %v1341, 16
    %v1355 = vrot.slane %v1353, 5
    %v1356 = vsel %vm229, %v1351, %v1355
    %v1357 = vshrl.u32 %v1341, 16
    %v1359 = vrot.slane %v1357, 4
    %v1360 = vor.u32 %v1359, %v1355
    %v1361 = vrot.slane %v1360, 4
    %v1363 = vshll.u32 %v1342, 16
    %v1365 = vrot.slane %v1363, 5
    %v1366 = vsel %vm229, %v1361, %v1365
    %1367 = vrot.lane.b32.xlu0 %v1356, 8
    %v1368 = vpop.permute.xlu0 %1367
    %1369 = vrot.lane.b32.xlu0 %v1366, 8
    %v1370 = vpop.permute.xlu0 %1369
    %1373 = vst.msk [vmem:[#allocation2 + $0x88] sm:$0xf] %vm260, %v1368
    %1374 = vst.msk [vmem:[#allocation2 + $0x8c] sm:$0xf] %vm260, %v1370
    %v1375 = vld [vmem:[%s1120] sm:$0xf]
    %v1376 = vld [vmem:[%s1120 + $0x4] sm:$0xf]
    %v1377 = vld [vmem:[%s1120 + $0x8] sm:$0x1]
    %v1379 = vshrl.u32 %v1375, 16
    %v1381 = vrot.slane %v1379, 4
    %v1382 = vshll.u32 %v1375, 16
    %v1384 = vrot.slane %v1382, 5
    %v1385 = vor.u32 %v1381, %v1384
    %v1386 = vrot.slane %v1385, 4
    %v1388 = vshll.u32 %v1376, 16
    %v1390 = vrot.slane %v1388, 5
    %v1391 = vsel %vm229, %v1386, %v1390
    %v1392 = vshrl.u32 %v1376, 16
    %v1394 = vrot.slane %v1392, 4
    %v1395 = vor.u32 %v1394, %v1390
    %v1396 = vrot.slane %v1395, 4
    %v1398 = vshll.u32 %v1377, 16
    %v1400 = vrot.slane %v1398, 5
    %v1401 = vsel %vm229, %v1396, %v1400
    %1402 = vrot.lane.b32.xlu0 %v1391, 4
    %v1403 = vpop.permute.xlu0 %1402
    %1404 = vrot.lane.b32.xlu0 %v1401, 4
    %v1405 = vpop.permute.xlu0 %1404
    %1408 = vst.msk [vmem:[#allocation2 + $0x90] sm:$0xf] %vm260, %v1403
    %1409 = vst.msk [vmem:[#allocation2 + $0x94] sm:$0xf] %vm260, %v1405
    %v1410 = vld [vmem:[%s1120] sm:$0xf]
    %v1411 = vld [vmem:[%s1120 + $0x4] sm:$0xf]
    %v1412 = vld [vmem:[%s1120 + $0x8] sm:$0x1]
    %v1414 = vshrl.u32 %v1410, 16
    %v1416 = vrot.slane %v1414, 4
    %v1417 = vshll.u32 %v1410, 16
    %v1419 = vrot.slane %v1417, 5
    %v1420 = vor.u32 %v1416, %v1419
    %v1421 = vrot.slane %v1420, 4
    %v1423 = vshll.u32 %v1411, 16
    %v1425 = vrot.slane %v1423, 5
    %v1426 = vsel %vm229, %v1421, %v1425
    %v1427 = vshrl.u32 %v1411, 16
    %v1429 = vrot.slane %v1427, 4
    %v1430 = vor.u32 %v1429, %v1425
    %v1431 = vrot.slane %v1430, 4
    %v1433 = vshll.u32 %v1412, 16
    %v1435 = vrot.slane %v1433, 5
    %v1436 = vsel %vm229, %v1431, %v1435
    %1439 = vst.msk [vmem:[#allocation2 + $0x98] sm:$0xf] %vm260, %v1426
    %1440 = vst.msk [vmem:[#allocation2 + $0x9c] sm:$0xf] %vm260, %v1436
    %v1441 = vld [vmem:[%s1120] sm:$0xf]
    %v1442 = vld [vmem:[%s1120 + $0x4] sm:$0xf]
    %v1443 = vld [vmem:[%s1120 + $0x8] sm:$0x1]
    %v1445 = vshrl.u32 %v1441, 16
    %v1447 = vrot.slane %v1445, 4
    %v1448 = vshll.u32 %v1441, 16
    %v1450 = vrot.slane %v1448, 5
    %v1451 = vor.u32 %v1447, %v1450
    %v1452 = vrot.slane %v1451, 4
    %v1454 = vshll.u32 %v1442, 16
    %v1456 = vrot.slane %v1454, 5
    %v1457 = vsel %vm229, %v1452, %v1456
    %v1458 = vshrl.u32 %v1442, 16
    %v1460 = vrot.slane %v1458, 4
    %v1461 = vor.u32 %v1460, %v1456
    %v1462 = vrot.slane %v1461, 4
    %v1464 = vshll.u32 %v1443, 16
    %v1466 = vrot.slane %v1464, 5
    %v1467 = vsel %vm229, %v1462, %v1466
    %1468 = vrot.lane.b32.xlu0 %v1457, 124
    %v1469 = vpop.permute.xlu0 %1468
    %1470 = vrot.lane.b32.xlu0 %v1467, 124
    %v1471 = vpop.permute.xlu0 %1470
    %1474 = vst.msk [vmem:[#allocation2 + $0xa0] sm:$0xf] %vm260, %v1469
    %1475 = vst.msk [vmem:[#allocation2 + $0xa4] sm:$0xf] %vm260, %v1471
    %v1476 = vld [vmem:[%s1120] sm:$0xf]
    %v1477 = vld [vmem:[%s1120 + $0x4] sm:$0xf]
    %v1478 = vld [vmem:[%s1120 + $0x8] sm:$0x1]
    %v1480 = vshrl.u32 %v1476, 16
    %v1482 = vrot.slane %v1480, 4
    %v1483 = vshll.u32 %v1476, 16
    %v1485 = vrot.slane %v1483, 5
    %v1486 = vor.u32 %v1482, %v1485
    %v1487 = vrot.slane %v1486, 4
    %v1489 = vshll.u32 %v1477, 16
    %v1491 = vrot.slane %v1489, 5
    %v1492 = vsel %vm229, %v1487, %v1491
    %v1493 = vshrl.u32 %v1477, 16
    %v1495 = vrot.slane %v1493, 4
    %v1496 = vor.u32 %v1495, %v1491
    %v1497 = vrot.slane %v1496, 4
    %v1499 = vshll.u32 %v1478, 16
    %v1501 = vrot.slane %v1499, 5
    %v1502 = vsel %vm229, %v1497, %v1501
    %1503 = vrot.lane.b32.xlu0 %v1492, 120
    %v1504 = vpop.permute.xlu0 %1503
    %1505 = vrot.lane.b32.xlu0 %v1502, 120
    %v1506 = vpop.permute.xlu0 %1505
    %1509 = vst.msk [vmem:[#allocation2 + $0xa8] sm:$0xf] %vm260, %v1504
    %1510 = vst.msk [vmem:[#allocation2 + $0xac] sm:$0xf] %vm260, %v1506
    %v1511 = vld [vmem:[%s1120] sm:$0xf]
    %v1512 = vld [vmem:[%s1120 + $0x4] sm:$0xf]
    %v1513 = vld [vmem:[%s1120 + $0x8] sm:$0x1]
    %v1515 = vshrl.u32 %v1511, 16
    %v1517 = vrot.slane %v1515, 4
    %v1518 = vshll.u32 %v1511, 16
    %v1520 = vrot.slane %v1518, 5
    %v1521 = vor.u32 %v1517, %v1520
    %v1522 = vrot.slane %v1521, 4
    %v1524 = vshll.u32 %v1512, 16
    %v1526 = vrot.slane %v1524, 5
    %v1527 = vsel %vm229, %v1522, %v1526
    %v1528 = vshrl.u32 %v1512, 16
    %v1530 = vrot.slane %v1528, 4
    %v1531 = vor.u32 %v1530, %v1526
    %v1532 = vrot.slane %v1531, 4
    %v1534 = vshll.u32 %v1513, 16
    %v1536 = vrot.slane %v1534, 5
    %v1537 = vsel %vm229, %v1532, %v1536
    %1538 = vrot.lane.b32.xlu0 %v1527, 116
    %v1539 = vpop.permute.xlu0 %1538
    %1540 = vrot.lane.b32.xlu0 %v1537, 116
    %v1541 = vpop.permute.xlu0 %1540
    %1544 = vst.msk [vmem:[#allocation2 + $0xb0] sm:$0xf] %vm260, %v1539
    %1545 = vst.msk [vmem:[#allocation2 + $0xb4] sm:$0xf] %vm260, %v1541
    %v1546 = vld [vmem:[%s1120] sm:$0xf]
    %v1547 = vld [vmem:[%s1120 + $0x4] sm:$0xf]
    %v1548 = vld [vmem:[%s1120 + $0x8] sm:$0x1]
    %v1550 = vshrl.u32 %v1546, 16
    %v1552 = vrot.slane %v1550, 4
    %v1553 = vshll.u32 %v1546, 16
    %v1555 = vrot.slane %v1553, 5
    %v1556 = vor.u32 %v1552, %v1555
    %v1557 = vrot.slane %v1556, 4
    %v1559 = vshll.u32 %v1547, 16
    %v1561 = vrot.slane %v1559, 5
    %v1562 = vsel %vm229, %v1557, %v1561
    %v1563 = vshrl.u32 %v1547, 16
    %v1565 = vrot.slane %v1563, 4
    %v1566 = vor.u32 %v1565, %v1561
    %v1567 = vrot.slane %v1566, 4
    %v1569 = vshll.u32 %v1548, 16
    %v1571 = vrot.slane %v1569, 5
    %v1572 = vsel %vm229, %v1567, %v1571
    %1573 = vrot.lane.b32.xlu0 %v1562, 112
    %v1574 = vpop.permute.xlu0 %1573
    %1575 = vrot.lane.b32.xlu0 %v1572, 112
    %v1576 = vpop.permute.xlu0 %1575
    %1579 = vst.msk [vmem:[#allocation2 + $0xb8] sm:$0xf] %vm260, %v1574
    %1580 = vst.msk [vmem:[#allocation2 + $0xbc] sm:$0xf] %vm260, %v1576
    %v1581 = vld [vmem:[%s1120] sm:$0xf]
    %v1582 = vld [vmem:[%s1120 + $0x4] sm:$0xf]
    %v1583 = vld [vmem:[%s1120 + $0x8] sm:$0x1]
    %v1585 = vshrl.u32 %v1581, 16
    %v1587 = vrot.slane %v1585, 4
    %v1588 = vshll.u32 %v1581, 16
    %v1590 = vrot.slane %v1588, 5
    %v1591 = vor.u32 %v1587, %v1590
    %v1592 = vrot.slane %v1591, 4
    %v1594 = vshll.u32 %v1582, 16
    %v1596 = vrot.slane %v1594, 5
    %v1597 = vsel %vm229, %v1592, %v1596
    %v1598 = vshrl.u32 %v1582, 16
    %v1600 = vrot.slane %v1598, 4
    %v1601 = vor.u32 %v1600, %v1596
    %v1602 = vrot.slane %v1601, 4
    %v1604 = vshll.u32 %v1583, 16
    %v1606 = vrot.slane %v1604, 5
    %v1607 = vsel %vm229, %v1602, %v1606
    %1608 = vrot.lane.b32.xlu0 %v1597, 108
    %v1609 = vpop.permute.xlu0 %1608
    %1610 = vrot.lane.b32.xlu0 %v1607, 108
    %v1611 = vpop.permute.xlu0 %1610
    %1614 = vst.msk [vmem:[#allocation2 + $0xc0] sm:$0xf] %vm260, %v1609
    %1615 = vst.msk [vmem:[#allocation2 + $0xc4] sm:$0xf] %vm260, %v1611
    %v1616 = vld [vmem:[%s1120] sm:$0xf]
    %v1617 = vld [vmem:[%s1120 + $0x4] sm:$0xf]
    %v1618 = vld [vmem:[%s1120 + $0x8] sm:$0x1]
    %v1620 = vshrl.u32 %v1616, 16
    %v1622 = vrot.slane %v1620, 4
    %v1623 = vshll.u32 %v1616, 16
    %v1625 = vrot.slane %v1623, 5
    %v1626 = vor.u32 %v1622, %v1625
    %v1627 = vrot.slane %v1626, 4
    %v1629 = vshll.u32 %v1617, 16
    %v1631 = vrot.slane %v1629, 5
    %v1632 = vsel %vm229, %v1627, %v1631
    %v1633 = vshrl.u32 %v1617, 16
    %v1635 = vrot.slane %v1633, 4
    %v1636 = vor.u32 %v1635, %v1631
    %v1637 = vrot.slane %v1636, 4
    %v1639 = vshll.u32 %v1618, 16
    %v1641 = vrot.slane %v1639, 5
    %v1642 = vsel %vm229, %v1637, %v1641
    %1643 = vrot.lane.b32.xlu0 %v1632, 104
    %v1644 = vpop.permute.xlu0 %1643
    %1645 = vrot.lane.b32.xlu0 %v1642, 104
    %v1646 = vpop.permute.xlu0 %1645
    %1649 = vst.msk [vmem:[#allocation2 + $0xc8] sm:$0xf] %vm260, %v1644
    %1650 = vst.msk [vmem:[#allocation2 + $0xcc] sm:$0xf] %vm260, %v1646
    %v1651 = vld [vmem:[%s1120] sm:$0xf]
    %v1652 = vld [vmem:[%s1120 + $0x4] sm:$0xf]
    %v1653 = vld [vmem:[%s1120 + $0x8] sm:$0x1]
    %v1655 = vshrl.u32 %v1651, 16
    %v1657 = vrot.slane %v1655, 4
    %v1658 = vshll.u32 %v1651, 16
    %v1660 = vrot.slane %v1658, 5
    %v1661 = vor.u32 %v1657, %v1660
    %v1662 = vrot.slane %v1661, 4
    %v1664 = vshll.u32 %v1652, 16
    %v1666 = vrot.slane %v1664, 5
    %v1667 = vsel %vm229, %v1662, %v1666
    %v1668 = vshrl.u32 %v1652, 16
    %v1670 = vrot.slane %v1668, 4
    %v1671 = vor.u32 %v1670, %v1666
    %v1672 = vrot.slane %v1671, 4
    %v1674 = vshll.u32 %v1653, 16
    %v1676 = vrot.slane %v1674, 5
    %v1677 = vsel %vm229, %v1672, %v1676
    %1678 = vrot.lane.b32.xlu0 %v1667, 100
    %v1679 = vpop.permute.xlu0 %1678
    %1680 = vrot.lane.b32.xlu0 %v1677, 100
    %v1681 = vpop.permute.xlu0 %1680
    %1684 = vst.msk [vmem:[#allocation2 + $0xd0] sm:$0xf] %vm260, %v1679
    %1685 = vst.msk [vmem:[#allocation2 + $0xd4] sm:$0xf] %vm260, %v1681
    %v1686 = vld [vmem:[%s1120] sm:$0xf]
    %v1687 = vld [vmem:[%s1120 + $0x4] sm:$0xf]
    %v1688 = vld [vmem:[%s1120 + $0x8] sm:$0x1]
    %v1690 = vshrl.u32 %v1686, 16
    %v1692 = vrot.slane %v1690, 4
    %v1693 = vshll.u32 %v1686, 16
    %v1695 = vrot.slane %v1693, 5
    %v1696 = vor.u32 %v1692, %v1695
    %v1697 = vrot.slane %v1696, 4
    %v1699 = vshll.u32 %v1687, 16
    %v1701 = vrot.slane %v1699, 5
    %v1702 = vsel %vm229, %v1697, %v1701
    %v1703 = vshrl.u32 %v1687, 16
    %v1705 = vrot.slane %v1703, 4
    %v1706 = vor.u32 %v1705, %v1701
    %v1707 = vrot.slane %v1706, 4
    %v1709 = vshll.u32 %v1688, 16
    %v1711 = vrot.slane %v1709, 5
    %v1712 = vsel %vm229, %v1707, %v1711
    %1713 = vrot.lane.b32.xlu0 %v1702, 96
    %v1714 = vpop.permute.xlu0 %1713
    %1715 = vrot.lane.b32.xlu0 %v1712, 96
    %v1716 = vpop.permute.xlu0 %1715
    %1719 = vst.msk [vmem:[#allocation2 + $0xd8] sm:$0xf] %vm260, %v1714
    %1720 = vst.msk [vmem:[#allocation2 + $0xdc] sm:$0xf] %vm260, %v1716
    %v1721 = vld [vmem:[%s1120] sm:$0xf]
    %v1722 = vld [vmem:[%s1120 + $0x4] sm:$0xf]
    %v1723 = vld [vmem:[%s1120 + $0x8] sm:$0x1]
    %v1725 = vshrl.u32 %v1721, 16
    %v1727 = vrot.slane %v1725, 4
    %v1728 = vshll.u32 %v1721, 16
    %v1730 = vrot.slane %v1728, 5
    %v1731 = vor.u32 %v1727, %v1730
    %v1732 = vrot.slane %v1731, 4
    %v1734 = vshll.u32 %v1722, 16
    %v1736 = vrot.slane %v1734, 5
    %v1737 = vsel %vm229, %v1732, %v1736
    %v1738 = vshrl.u32 %v1722, 16
    %v1740 = vrot.slane %v1738, 4
    %v1741 = vor.u32 %v1740, %v1736
    %v1742 = vrot.slane %v1741, 4
    %v1744 = vshll.u32 %v1723, 16
    %v1746 = vrot.slane %v1744, 5
    %v1747 = vsel %vm229, %v1742, %v1746
    %1748 = vrot.lane.b32.xlu0 %v1737, 92
    %v1749 = vpop.permute.xlu0 %1748
    %1750 = vrot.lane.b32.xlu0 %v1747, 92
    %v1751 = vpop.permute.xlu0 %1750
    %1754 = vst.msk [vmem:[#allocation2 + $0xe0] sm:$0xf] %vm260, %v1749
    %1755 = vst.msk [vmem:[#allocation2 + $0xe4] sm:$0xf] %vm260, %v1751
    %v1756 = vld [vmem:[%s1120] sm:$0xf]
    %v1757 = vld [vmem:[%s1120 + $0x4] sm:$0xf]
    %v1758 = vld [vmem:[%s1120 + $0x8] sm:$0x1]
    %v1760 = vshrl.u32 %v1756, 16
    %v1762 = vrot.slane %v1760, 4
    %v1763 = vshll.u32 %v1756, 16
    %v1765 = vrot.slane %v1763, 5
    %v1766 = vor.u32 %v1762, %v1765
    %v1767 = vrot.slane %v1766, 4
    %v1769 = vshll.u32 %v1757, 16
    %v1771 = vrot.slane %v1769, 5
    %v1772 = vsel %vm229, %v1767, %v1771
    %v1773 = vshrl.u32 %v1757, 16
    %v1775 = vrot.slane %v1773, 4
    %v1776 = vor.u32 %v1775, %v1771
    %v1777 = vrot.slane %v1776, 4
    %v1779 = vshll.u32 %v1758, 16
    %v1781 = vrot.slane %v1779, 5
    %v1782 = vsel %vm229, %v1777, %v1781
    %1783 = vrot.lane.b32.xlu0 %v1772, 88
    %v1784 = vpop.permute.xlu0 %1783
    %1785 = vrot.lane.b32.xlu0 %v1782, 88
    %v1786 = vpop.permute.xlu0 %1785
    %1789 = vst.msk [vmem:[#allocation2 + $0xe8] sm:$0xf] %vm260, %v1784
    %1790 = vst.msk [vmem:[#allocation2 + $0xec] sm:$0xf] %vm260, %v1786
    %v1791 = vld [vmem:[%s1120] sm:$0xf]
    %v1792 = vld [vmem:[%s1120 + $0x4] sm:$0xf]
    %v1793 = vld [vmem:[%s1120 + $0x8] sm:$0x1]
    %v1795 = vshrl.u32 %v1791, 16
    %v1797 = vrot.slane %v1795, 4
    %v1798 = vshll.u32 %v1791, 16
    %v1800 = vrot.slane %v1798, 5
    %v1801 = vor.u32 %v1797, %v1800
    %v1802 = vrot.slane %v1801, 4
    %v1804 = vshll.u32 %v1792, 16
    %v1806 = vrot.slane %v1804, 5
    %v1807 = vsel %vm229, %v1802, %v1806
    %v1808 = vshrl.u32 %v1792, 16
    %v1810 = vrot.slane %v1808, 4
    %v1811 = vor.u32 %v1810, %v1806
    %v1812 = vrot.slane %v1811, 4
    %v1814 = vshll.u32 %v1793, 16
    %v1816 = vrot.slane %v1814, 5
    %v1817 = vsel %vm229, %v1812, %v1816
    %1818 = vrot.lane.b32.xlu0 %v1807, 84
    %v1819 = vpop.permute.xlu0 %1818
    %1820 = vrot.lane.b32.xlu0 %v1817, 84
    %v1821 = vpop.permute.xlu0 %1820
    %1824 = vst.msk [vmem:[#allocation2 + $0xf0] sm:$0xf] %vm260, %v1819
    %1825 = vst.msk [vmem:[#allocation2 + $0xf4] sm:$0xf] %vm260, %v1821
    %v1826 = vld [vmem:[%s1120] sm:$0xf]
    %v1827 = vld [vmem:[%s1120 + $0x4] sm:$0xf]
    %v1828 = vld [vmem:[%s1120 + $0x8] sm:$0x1]
    %v1830 = vshrl.u32 %v1826, 16
    %v1832 = vrot.slane %v1830, 4
    %v1833 = vshll.u32 %v1826, 16
    %v1835 = vrot.slane %v1833, 5
    %v1836 = vor.u32 %v1832, %v1835
    %v1837 = vrot.slane %v1836, 4
    %v1839 = vshll.u32 %v1827, 16
    %v1841 = vrot.slane %v1839, 5
    %v1842 = vsel %vm229, %v1837, %v1841
    %v1843 = vshrl.u32 %v1827, 16
    %v1845 = vrot.slane %v1843, 4
    %v1846 = vor.u32 %v1845, %v1841
    %v1847 = vrot.slane %v1846, 4
    %v1849 = vshll.u32 %v1828, 16
    %v1851 = vrot.slane %v1849, 5
    %v1852 = vsel %vm229, %v1847, %v1851
    %1853 = vrot.lane.b32.xlu0 %v1842, 80
    %v1854 = vpop.permute.xlu0 %1853
    %1855 = vrot.lane.b32.xlu0 %v1852, 80
    %v1856 = vpop.permute.xlu0 %1855
    %1859 = vst.msk [vmem:[#allocation2 + $0xf8] sm:$0xf] %vm260, %v1854
    %1860 = vst.msk [vmem:[#allocation2 + $0xfc] sm:$0xf] %vm260, %v1856
    %v1861 = vld [vmem:[%s1120] sm:$0xe]
    %v1862 = vld [vmem:[%s1120 + $0x4] sm:$0xf]
    %v1863 = vld [vmem:[%s1120 + $0x8] sm:$0x1]
    %v1867 = vrot.slane %v1861, 5
    %v1868 = vrot.slane %v1867, 4
    %v1869 = vrot.slane %v1862, 5
    %v1870 = vsel %vm792, %v1868, %v1869
    %v1871 = vrot.slane %v1869, 4
    %v1872 = vrot.slane %v1863, 5
    %v1873 = vsel %vm792, %v1871, %v1872
    %1874 = vrot.lane.b32.xlu0 %v1870, 24
    %v1875 = vpop.permute.xlu0 %1874
    %1876 = vrot.lane.b32.xlu0 %v1873, 24
    %v1877 = vpop.permute.xlu0 %1876
    %1880 = vst.msk [vmem:[#allocation2 + $0x80] sm:$0xf] %vm806, %v1875
    %1881 = vst.msk [vmem:[#allocation2 + $0x84] sm:$0xf] %vm806, %v1877
    %v1882 = vld [vmem:[%s1120] sm:$0xe]
    %v1883 = vld [vmem:[%s1120 + $0x4] sm:$0xf]
    %v1884 = vld [vmem:[%s1120 + $0x8] sm:$0x1]
    %v1888 = vrot.slane %v1882, 5
    %v1889 = vrot.slane %v1888, 4
    %v1890 = vrot.slane %v1883, 5
    %v1891 = vsel %vm792, %v1889, %v1890
    %v1892 = vrot.slane %v1890, 4
    %v1893 = vrot.slane %v1884, 5
    %v1894 = vsel %vm792, %v1892, %v1893
    %1895 = vrot.lane.b32.xlu0 %v1891, 20
    %v1896 = vpop.permute.xlu0 %1895
    %1897 = vrot.lane.b32.xlu0 %v1894, 20
    %v1898 = vpop.permute.xlu0 %1897
    %1901 = vst.msk [vmem:[#allocation2 + $0x88] sm:$0xf] %vm806, %v1896
    %1902 = vst.msk [vmem:[#allocation2 + $0x8c] sm:$0xf] %vm806, %v1898
    %v1903 = vld [vmem:[%s1120] sm:$0xe]
    %v1904 = vld [vmem:[%s1120 + $0x4] sm:$0xf]
    %v1905 = vld [vmem:[%s1120 + $0x8] sm:$0x1]
    %v1909 = vrot.slane %v1903, 5
    %v1910 = vrot.slane %v1909, 4
    %v1911 = vrot.slane %v1904, 5
    %v1912 = vsel %vm792, %v1910, %v1911
    %v1913 = vrot.slane %v1911, 4
    %v1914 = vrot.slane %v1905, 5
    %v1915 = vsel %vm792, %v1913, %v1914
    %1916 = vrot.lane.b32.xlu0 %v1912, 16
    %v1917 = vpop.permute.xlu0 %1916
    %1918 = vrot.lane.b32.xlu0 %v1915, 16
    %v1919 = vpop.permute.xlu0 %1918
    %1922 = vst.msk [vmem:[#allocation2 + $0x90] sm:$0xf] %vm806, %v1917
    %1923 = vst.msk [vmem:[#allocation2 + $0x94] sm:$0xf] %vm806, %v1919
    %v1924 = vld [vmem:[%s1120] sm:$0xe]
    %v1925 = vld [vmem:[%s1120 + $0x4] sm:$0xf]
    %v1926 = vld [vmem:[%s1120 + $0x8] sm:$0x1]
    %v1930 = vrot.slane %v1924, 5
    %v1931 = vrot.slane %v1930, 4
    %v1932 = vrot.slane %v1925, 5
    %v1933 = vsel %vm792, %v1931, %v1932
    %v1934 = vrot.slane %v1932, 4
    %v1935 = vrot.slane %v1926, 5
    %v1936 = vsel %vm792, %v1934, %v1935
    %1937 = vrot.lane.b32.xlu0 %v1933, 12
    %v1938 = vpop.permute.xlu0 %1937
    %1939 = vrot.lane.b32.xlu0 %v1936, 12
    %v1940 = vpop.permute.xlu0 %1939
    %1943 = vst.msk [vmem:[#allocation2 + $0x98] sm:$0xf] %vm806, %v1938
    %1944 = vst.msk [vmem:[#allocation2 + $0x9c] sm:$0xf] %vm806, %v1940
    %v1945 = vld [vmem:[%s1120] sm:$0xe]
    %v1946 = vld [vmem:[%s1120 + $0x4] sm:$0xf]
    %v1947 = vld [vmem:[%s1120 + $0x8] sm:$0x1]
    %v1951 = vrot.slane %v1945, 5
    %v1952 = vrot.slane %v1951, 4
    %v1953 = vrot.slane %v1946, 5
    %v1954 = vsel %vm792, %v1952, %v1953
    %v1955 = vrot.slane %v1953, 4
    %v1956 = vrot.slane %v1947, 5
    %v1957 = vsel %vm792, %v1955, %v1956
    %1958 = vrot.lane.b32.xlu0 %v1954, 8
    %v1959 = vpop.permute.xlu0 %1958
    %1960 = vrot.lane.b32.xlu0 %v1957, 8
    %v1961 = vpop.permute.xlu0 %1960
    %1964 = vst.msk [vmem:[#allocation2 + $0xa0] sm:$0xf] %vm806, %v1959
    %1965 = vst.msk [vmem:[#allocation2 + $0xa4] sm:$0xf] %vm806, %v1961
    %v1966 = vld [vmem:[%s1120] sm:$0xe]
    %v1967 = vld [vmem:[%s1120 + $0x4] sm:$0xf]
    %v1968 = vld [vmem:[%s1120 + $0x8] sm:$0x1]
    %v1972 = vrot.slane %v1966, 5
    %v1973 = vrot.slane %v1972, 4
    %v1974 = vrot.slane %v1967, 5
    %v1975 = vsel %vm792, %v1973, %v1974
    %v1976 = vrot.slane %v1974, 4
    %v1977 = vrot.slane %v1968, 5
    %v1978 = vsel %vm792, %v1976, %v1977
    %1979 = vrot.lane.b32.xlu0 %v1975, 4
    %v1980 = vpop.permute.xlu0 %1979
    %1981 = vrot.lane.b32.xlu0 %v1978, 4
    %v1982 = vpop.permute.xlu0 %1981
    %1985 = vst.msk [vmem:[#allocation2 + $0xa8] sm:$0xf] %vm806, %v1980
    %1986 = vst.msk [vmem:[#allocation2 + $0xac] sm:$0xf] %vm806, %v1982
    %v1987 = vld [vmem:[%s1120] sm:$0xe]
    %v1988 = vld [vmem:[%s1120 + $0x4] sm:$0xf]
    %v1989 = vld [vmem:[%s1120 + $0x8] sm:$0x1]
    %v1993 = vrot.slane %v1987, 5
    %v1994 = vrot.slane %v1993, 4
    %v1995 = vrot.slane %v1988, 5
    %v1996 = vsel %vm792, %v1994, %v1995
    %v1997 = vrot.slane %v1995, 4
    %v1998 = vrot.slane %v1989, 5
    %v1999 = vsel %vm792, %v1997, %v1998
    %2002 = vst.msk [vmem:[#allocation2 + $0xb0] sm:$0xf] %vm806, %v1996
    %2003 = vst.msk [vmem:[#allocation2 + $0xb4] sm:$0xf] %vm806, %v1999
    %v2004 = vld [vmem:[%s1120] sm:$0xe]
    %v2005 = vld [vmem:[%s1120 + $0x4] sm:$0xf]
    %v2006 = vld [vmem:[%s1120 + $0x8] sm:$0x1]
    %v2010 = vrot.slane %v2004, 5
    %v2011 = vrot.slane %v2010, 4
    %v2012 = vrot.slane %v2005, 5
    %v2013 = vsel %vm792, %v2011, %v2012
    %v2014 = vrot.slane %v2012, 4
    %v2015 = vrot.slane %v2006, 5
    %v2016 = vsel %vm792, %v2014, %v2015
    %2017 = vrot.lane.b32.xlu0 %v2013, 124
    %v2018 = vpop.permute.xlu0 %2017
    %2019 = vrot.lane.b32.xlu0 %v2016, 124
    %v2020 = vpop.permute.xlu0 %2019
    %2023 = vst.msk [vmem:[#allocation2 + $0xb8] sm:$0xf] %vm806, %v2018
    %2024 = vst.msk [vmem:[#allocation2 + $0xbc] sm:$0xf] %vm806, %v2020
    %v2025 = vld [vmem:[%s1120] sm:$0xe]
    %v2026 = vld [vmem:[%s1120 + $0x4] sm:$0xf]
    %v2027 = vld [vmem:[%s1120 + $0x8] sm:$0x1]
    %v2031 = vrot.slane %v2025, 5
    %v2032 = vrot.slane %v2031, 4
    %v2033 = vrot.slane %v2026, 5
    %v2034 = vsel %vm792, %v2032, %v2033
    %v2035 = vrot.slane %v2033, 4
    %v2036 = vrot.slane %v2027, 5
    %v2037 = vsel %vm792, %v2035, %v2036
    %2038 = vrot.lane.b32.xlu0 %v2034, 120
    %v2039 = vpop.permute.xlu0 %2038
    %2040 = vrot.lane.b32.xlu0 %v2037, 120
    %v2041 = vpop.permute.xlu0 %2040
    %2044 = vst.msk [vmem:[#allocation2 + $0xc0] sm:$0xf] %vm806, %v2039
    %2045 = vst.msk [vmem:[#allocation2 + $0xc4] sm:$0xf] %vm806, %v2041
    %v2046 = vld [vmem:[%s1120] sm:$0xe]
    %v2047 = vld [vmem:[%s1120 + $0x4] sm:$0xf]
    %v2048 = vld [vmem:[%s1120 + $0x8] sm:$0x1]
    %v2052 = vrot.slane %v2046, 5
    %v2053 = vrot.slane %v2052, 4
    %v2054 = vrot.slane %v2047, 5
    %v2055 = vsel %vm792, %v2053, %v2054
    %v2056 = vrot.slane %v2054, 4
    %v2057 = vrot.slane %v2048, 5
    %v2058 = vsel %vm792, %v2056, %v2057
    %2059 = vrot.lane.b32.xlu0 %v2055, 116
    %v2060 = vpop.permute.xlu0 %2059
    %2061 = vrot.lane.b32.xlu0 %v2058, 116
    %v2062 = vpop.permute.xlu0 %2061
    %2065 = vst.msk [vmem:[#allocation2 + $0xc8] sm:$0xf] %vm806, %v2060
    %2066 = vst.msk [vmem:[#allocation2 + $0xcc] sm:$0xf] %vm806, %v2062
    %v2067 = vld [vmem:[%s1120] sm:$0xe]
    %v2068 = vld [vmem:[%s1120 + $0x4] sm:$0xf]
    %v2069 = vld [vmem:[%s1120 + $0x8] sm:$0x1]
    %v2073 = vrot.slane %v2067, 5
    %v2074 = vrot.slane %v2073, 4
    %v2075 = vrot.slane %v2068, 5
    %v2076 = vsel %vm792, %v2074, %v2075
    %v2077 = vrot.slane %v2075, 4
    %v2078 = vrot.slane %v2069, 5
    %v2079 = vsel %vm792, %v2077, %v2078
    %2080 = vrot.lane.b32.xlu0 %v2076, 112
    %v2081 = vpop.permute.xlu0 %2080
    %2082 = vrot.lane.b32.xlu0 %v2079, 112
    %v2083 = vpop.permute.xlu0 %2082
    %2086 = vst.msk [vmem:[#allocation2 + $0xd0] sm:$0xf] %vm806, %v2081
    %2087 = vst.msk [vmem:[#allocation2 + $0xd4] sm:$0xf] %vm806, %v2083
    %v2088 = vld [vmem:[%s1120] sm:$0xe]
    %v2089 = vld [vmem:[%s1120 + $0x4] sm:$0xf]
    %v2090 = vld [vmem:[%s1120 + $0x8] sm:$0x1]
    %v2094 = vrot.slane %v2088, 5
    %v2095 = vrot.slane %v2094, 4
    %v2096 = vrot.slane %v2089, 5
    %v2097 = vsel %vm792, %v2095, %v2096
    %v2098 = vrot.slane %v2096, 4
    %v2099 = vrot.slane %v2090, 5
    %v2100 = vsel %vm792, %v2098, %v2099
    %2101 = vrot.lane.b32.xlu0 %v2097, 108
    %v2102 = vpop.permute.xlu0 %2101
    %2103 = vrot.lane.b32.xlu0 %v2100, 108
    %v2104 = vpop.permute.xlu0 %2103
    %2107 = vst.msk [vmem:[#allocation2 + $0xd8] sm:$0xf] %vm806, %v2102
    %2108 = vst.msk [vmem:[#allocation2 + $0xdc] sm:$0xf] %vm806, %v2104
    %v2109 = vld [vmem:[%s1120] sm:$0xe]
    %v2110 = vld [vmem:[%s1120 + $0x4] sm:$0xf]
    %v2111 = vld [vmem:[%s1120 + $0x8] sm:$0x1]
    %v2115 = vrot.slane %v2109, 5
    %v2116 = vrot.slane %v2115, 4
    %v2117 = vrot.slane %v2110, 5
    %v2118 = vsel %vm792, %v2116, %v2117
    %v2119 = vrot.slane %v2117, 4
    %v2120 = vrot.slane %v2111, 5
    %v2121 = vsel %vm792, %v2119, %v2120
    %2122 = vrot.lane.b32.xlu0 %v2118, 104
    %v2123 = vpop.permute.xlu0 %2122
    %2124 = vrot.lane.b32.xlu0 %v2121, 104
    %v2125 = vpop.permute.xlu0 %2124
    %2128 = vst.msk [vmem:[#allocation2 + $0xe0] sm:$0xf] %vm806, %v2123
    %2129 = vst.msk [vmem:[#allocation2 + $0xe4] sm:$0xf] %vm806, %v2125
    %v2130 = vld [vmem:[%s1120] sm:$0xe]
    %v2131 = vld [vmem:[%s1120 + $0x4] sm:$0xf]
    %v2132 = vld [vmem:[%s1120 + $0x8] sm:$0x1]
    %v2136 = vrot.slane %v2130, 5
    %v2137 = vrot.slane %v2136, 4
    %v2138 = vrot.slane %v2131, 5
    %v2139 = vsel %vm792, %v2137, %v2138
    %v2140 = vrot.slane %v2138, 4
    %v2141 = vrot.slane %v2132, 5
    %v2142 = vsel %vm792, %v2140, %v2141
    %2143 = vrot.lane.b32.xlu0 %v2139, 100
    %v2144 = vpop.permute.xlu0 %2143
    %2145 = vrot.lane.b32.xlu0 %v2142, 100
    %v2146 = vpop.permute.xlu0 %2145
    %2149 = vst.msk [vmem:[#allocation2 + $0xe8] sm:$0xf] %vm806, %v2144
    %2150 = vst.msk [vmem:[#allocation2 + $0xec] sm:$0xf] %vm806, %v2146
    %v2151 = vld [vmem:[%s1120] sm:$0xe]
    %v2152 = vld [vmem:[%s1120 + $0x4] sm:$0xf]
    %v2153 = vld [vmem:[%s1120 + $0x8] sm:$0x1]
    %v2157 = vrot.slane %v2151, 5
    %v2158 = vrot.slane %v2157, 4
    %v2159 = vrot.slane %v2152, 5
    %v2160 = vsel %vm792, %v2158, %v2159
    %v2161 = vrot.slane %v2159, 4
    %v2162 = vrot.slane %v2153, 5
    %v2163 = vsel %vm792, %v2161, %v2162
    %2164 = vrot.lane.b32.xlu0 %v2160, 96
    %v2165 = vpop.permute.xlu0 %2164
    %2166 = vrot.lane.b32.xlu0 %v2163, 96
    %v2167 = vpop.permute.xlu0 %2166
    %2170 = vst.msk [vmem:[#allocation2 + $0xf0] sm:$0xf] %vm806, %v2165
    %2171 = vst.msk [vmem:[#allocation2 + $0xf4] sm:$0xf] %vm806, %v2167
    %v2172 = vld [vmem:[%s1120] sm:$0xe]
    %v2173 = vld [vmem:[%s1120 + $0x4] sm:$0xf]
    %v2174 = vld [vmem:[%s1120 + $0x8] sm:$0x1]
    %v2178 = vrot.slane %v2172, 5
    %v2179 = vrot.slane %v2178, 4
    %v2180 = vrot.slane %v2173, 5
    %v2181 = vsel %vm792, %v2179, %v2180
    %v2182 = vrot.slane %v2180, 4
    %v2183 = vrot.slane %v2174, 5
    %v2184 = vsel %vm792, %v2182, %v2183
    %2185 = vrot.lane.b32.xlu0 %v2181, 92
    %v2186 = vpop.permute.xlu0 %2185
    %2187 = vrot.lane.b32.xlu0 %v2184, 92
    %v2188 = vpop.permute.xlu0 %2187
    %2191 = vst.msk [vmem:[#allocation2 + $0xf8] sm:$0xf] %vm806, %v2186
    %2192 = vst.msk [vmem:[#allocation2 + $0xfc] sm:$0xf] %vm806, %v2188
    %v2193 = vld [vmem:[#allocation2] sm:$0xf]
    %v2194 = vld [vmem:[#allocation2 + $0x4] sm:$0xf]
    %v2195 = vld [vmem:[#allocation2 + $0x8] sm:$0xf]
    %v2196 = vld [vmem:[#allocation2 + $0xc] sm:$0xf]
    %v2197 = vld [vmem:[#allocation2 + $0x10] sm:$0xf]
    %v2198 = vld [vmem:[#allocation2 + $0x14] sm:$0xf]
    %v2199 = vld [vmem:[#allocation2 + $0x18] sm:$0xf]
    %v2200 = vld [vmem:[#allocation2 + $0x1c] sm:$0xf]
    %v2201 = vld [vmem:[#allocation2 + $0x20] sm:$0xf]
    %v2202 = vld [vmem:[#allocation2 + $0x24] sm:$0xf]
    %v2203 = vld [vmem:[#allocation2 + $0x28] sm:$0xf]
    %v2204 = vld [vmem:[#allocation2 + $0x2c] sm:$0xf]
    %v2205 = vld [vmem:[#allocation2 + $0x30] sm:$0xf]
    %v2206 = vld [vmem:[#allocation2 + $0x34] sm:$0xf]
    %v2207 = vld [vmem:[#allocation2 + $0x38] sm:$0xf]
    %v2208 = vld [vmem:[#allocation2 + $0x3c] sm:$0xf]
    %v2209 = vld [vmem:[#allocation2 + $0x40] sm:$0xf]
    %v2210 = vld [vmem:[#allocation2 + $0x44] sm:$0xf]
    %v2211 = vld [vmem:[#allocation2 + $0x48] sm:$0xf]
    %v2212 = vld [vmem:[#allocation2 + $0x4c] sm:$0xf]
    %v2213 = vld [vmem:[#allocation2 + $0x50] sm:$0xf]
    %v2214 = vld [vmem:[#allocation2 + $0x54] sm:$0xf]
    %v2215 = vld [vmem:[#allocation2 + $0x58] sm:$0xf]
    %v2216 = vld [vmem:[#allocation2 + $0x5c] sm:$0xf]
    %v2217 = vld [vmem:[#allocation2 + $0x60] sm:$0xf]
    %v2218 = vld [vmem:[#allocation2 + $0x64] sm:$0xf]
    %v2219 = vld [vmem:[#allocation2 + $0x68] sm:$0xf]
    %v2220 = vld [vmem:[#allocation2 + $0x6c] sm:$0xf]
    %v2221 = vld [vmem:[#allocation2 + $0x70] sm:$0xf]
    %v2222 = vld [vmem:[#allocation2 + $0x74] sm:$0xf]
    %v2223 = vld [vmem:[#allocation2 + $0x78] sm:$0xf]
    %v2224 = vld [vmem:[#allocation2 + $0x7c] sm:$0xf]
    %v2225 = vld [vmem:[#allocation2 + $0x80] sm:$0xf]
    %v2226 = vld [vmem:[#allocation2 + $0x84] sm:$0xf]
    %v2227 = vld [vmem:[#allocation2 + $0x88] sm:$0xf]
    %v2228 = vld [vmem:[#allocation2 + $0x8c] sm:$0xf]
    %v2229 = vld [vmem:[#allocation2 + $0x90] sm:$0xf]
    %v2230 = vld [vmem:[#allocation2 + $0x94] sm:$0xf]
    %v2231 = vld [vmem:[#allocation2 + $0x98] sm:$0xf]
    %v2232 = vld [vmem:[#allocation2 + $0x9c] sm:$0xf]
    %v2233 = vld [vmem:[#allocation2 + $0xa0] sm:$0xf]
    %v2234 = vld [vmem:[#allocation2 + $0xa4] sm:$0xf]
    %v2235 = vld [vmem:[#allocation2 + $0xa8] sm:$0xf]
    %v2236 = vld [vmem:[#allocation2 + $0xac] sm:$0xf]
    %v2237 = vld [vmem:[#allocation2 + $0xb0] sm:$0xf]
    %v2238 = vld [vmem:[#allocation2 + $0xb4] sm:$0xf]
    %v2239 = vld [vmem:[#allocation2 + $0xb8] sm:$0xf]
    %v2240 = vld [vmem:[#allocation2 + $0xbc] sm:$0xf]
    %v2241 = vld [vmem:[#allocation2 + $0xc0] sm:$0xf]
    %v2242 = vld [vmem:[#allocation2 + $0xc4] sm:$0xf]
    %v2243 = vld [vmem:[#allocation2 + $0xc8] sm:$0xf]
    %v2244 = vld [vmem:[#allocation2 + $0xcc] sm:$0xf]
    %v2245 = vld [vmem:[#allocation2 + $0xd0] sm:$0xf]
    %v2246 = vld [vmem:[#allocation2 + $0xd4] sm:$0xf]
    %v2247 = vld [vmem:[#allocation2 + $0xd8] sm:$0xf]
    %v2248 = vld [vmem:[#allocation2 + $0xdc] sm:$0xf]
    %v2249 = vld [vmem:[#allocation2 + $0xe0] sm:$0xf]
    %v2250 = vld [vmem:[#allocation2 + $0xe4] sm:$0xf]
    %v2251 = vld [vmem:[#allocation2 + $0xe8] sm:$0xf]
    %v2252 = vld [vmem:[#allocation2 + $0xec] sm:$0xf]
    %v2253 = vld [vmem:[#allocation2 + $0xf0] sm:$0xf]
    %v2254 = vld [vmem:[#allocation2 + $0xf4] sm:$0xf]
    %v2255 = vld [vmem:[#allocation2 + $0xf8] sm:$0xf]
    %v2256 = vld [vmem:[#allocation2 + $0xfc] sm:$0xf]
    %v2257 = vld [vmem:[%s1] sm:$0xf]
    %v2258 = vld [vmem:[%s1 + $0x4] sm:$0xf]
    %v2259 = vld [vmem:[%s1 + $0x8] sm:$0xf]
    %v2260 = vld [vmem:[%s1 + $0xc] sm:$0xf]
    %v2261 = vld [vmem:[%s1 + $0x10] sm:$0x3]
    %v2262 = vld [vmem:[%s2] sm:$0x1]
    %v2264 = vlaneseq
    %v2265 = vshrl.u32 %v2264, 7
    %v2266 = vsub.s32 0, %v2265
    %v2267 = vrot.slane %v2262, %v2266
    %v2333 = vunpack.c.l.b16 %v2193
    %v2334 = vunpack.c.l.b16 %v2194
    %v2335 = vunpack.c.l.b16 %v2195
    %v2336 = vunpack.c.l.b16 %v2196
    %v2337 = vunpack.c.l.b16 %v2197
    %v2338 = vunpack.c.l.b16 %v2198
    %v2339 = vunpack.c.l.b16 %v2199
    %v2340 = vunpack.c.l.b16 %v2200
    %v2341 = vunpack.c.l.b16 %v2201
    %v2342 = vunpack.c.l.b16 %v2202
    %v2343 = vunpack.c.l.b16 %v2203
    %v2344 = vunpack.c.l.b16 %v2204
    %v2345 = vunpack.c.l.b16 %v2205
    %v2346 = vunpack.c.l.b16 %v2206
    %v2347 = vunpack.c.l.b16 %v2207
    %v2348 = vunpack.c.l.b16 %v2208
    %v2349 = vunpack.c.l.b16 %v2209
    %v2350 = vunpack.c.l.b16 %v2210
    %v2351 = vunpack.c.l.b16 %v2211
    %v2352 = vunpack.c.l.b16 %v2212
    %v2353 = vunpack.c.l.b16 %v2213
    %v2354 = vunpack.c.l.b16 %v2214
    %v2355 = vunpack.c.l.b16 %v2215
    %v2356 = vunpack.c.l.b16 %v2216
    %v2357 = vunpack.c.l.b16 %v2217
    %v2358 = vunpack.c.l.b16 %v2218
    %v2359 = vunpack.c.l.b16 %v2219
    %v2360 = vunpack.c.l.b16 %v2220
    %v2361 = vunpack.c.l.b16 %v2221
    %v2362 = vunpack.c.l.b16 %v2222
    %v2363 = vunpack.c.l.b16 %v2223
    %v2364 = vunpack.c.l.b16 %v2224
    %v2365 = vunpack.c.l.b16 %v2225
    %v2366 = vunpack.c.l.b16 %v2226
    %v2367 = vunpack.c.l.b16 %v2227
    %v2368 = vunpack.c.l.b16 %v2228
    %v2369 = vunpack.c.l.b16 %v2229
    %v2370 = vunpack.c.l.b16 %v2230
    %v2371 = vunpack.c.l.b16 %v2231
    %v2372 = vunpack.c.l.b16 %v2232
    %v2373 = vunpack.c.l.b16 %v2233
    %v2374 = vunpack.c.l.b16 %v2234
    %v2375 = vunpack.c.l.b16 %v2235
    %v2376 = vunpack.c.l.b16 %v2236
    %v2377 = vunpack.c.l.b16 %v2237
    %v2378 = vunpack.c.l.b16 %v2238
    %v2379 = vunpack.c.l.b16 %v2239
    %v2380 = vunpack.c.l.b16 %v2240
    %v2381 = vunpack.c.l.b16 %v2241
    %v2382 = vunpack.c.l.b16 %v2242
    %v2383 = vunpack.c.l.b16 %v2243
    %v2384 = vunpack.c.l.b16 %v2244
    %v2385 = vunpack.c.l.b16 %v2245
    %v2386 = vunpack.c.l.b16 %v2246
    %v2387 = vunpack.c.l.b16 %v2247
    %v2388 = vunpack.c.l.b16 %v2248
    %v2389 = vunpack.c.l.b16 %v2249
    %v2390 = vunpack.c.l.b16 %v2250
    %v2391 = vunpack.c.l.b16 %v2251
    %v2392 = vunpack.c.l.b16 %v2252
    %v2393 = vunpack.c.l.b16 %v2253
    %v2394 = vunpack.c.l.b16 %v2254
    %v2395 = vunpack.c.l.b16 %v2255
    %v2396 = vunpack.c.l.b16 %v2256
    %v2397 = vpack.c.b16 %v2334, %v2333
    %v2398 = vpack.c.b16 %v2336, %v2335
    %v2399 = vpack.c.b16 %v2338, %v2337
    %v2400 = vpack.c.b16 %v2340, %v2339
    %v2401 = vpack.c.b16 %v2342, %v2341
    %v2402 = vpack.c.b16 %v2344, %v2343
    %v2403 = vpack.c.b16 %v2346, %v2345
    %v2404 = vpack.c.b16 %v2348, %v2347
    %v2405 = vpack.c.b16 %v2350, %v2349
    %v2406 = vpack.c.b16 %v2352, %v2351
    %v2407 = vpack.c.b16 %v2354, %v2353
    %v2408 = vpack.c.b16 %v2356, %v2355
    %v2409 = vpack.c.b16 %v2358, %v2357
    %v2410 = vpack.c.b16 %v2360, %v2359
    %v2411 = vpack.c.b16 %v2362, %v2361
    %v2412 = vpack.c.b16 %v2364, %v2363
    %v2413 = vpack.c.b16 %v2366, %v2365
    %v2414 = vpack.c.b16 %v2368, %v2367
    %v2415 = vpack.c.b16 %v2370, %v2369
    %v2416 = vpack.c.b16 %v2372, %v2371
    %v2417 = vpack.c.b16 %v2374, %v2373
    %v2418 = vpack.c.b16 %v2376, %v2375
    %v2419 = vpack.c.b16 %v2378, %v2377
    %v2420 = vpack.c.b16 %v2380, %v2379
    %v2421 = vpack.c.b16 %v2382, %v2381
    %v2422 = vpack.c.b16 %v2384, %v2383
    %v2423 = vpack.c.b16 %v2386, %v2385
    %v2424 = vpack.c.b16 %v2388, %v2387
    %v2425 = vpack.c.b16 %v2390, %v2389
    %v2426 = vpack.c.b16 %v2392, %v2391
    %v2427 = vpack.c.b16 %v2394, %v2393
    %v2428 = vpack.c.b16 %v2396, %v2395
    %v2434 = vunpack.c.l.b16 %v2257
    %v2435 = vunpack.c.l.b16 %v2258
    %v2436 = vunpack.c.l.b16 %v2259
    %v2437 = vunpack.c.l.b16 %v2260
    %v2438 = vunpack.c.l.b16 %v2261
    %v2439 = vpack.c.b16 %v2435, %v2434
    %v2440 = vpack.c.b16 %v2437, %v2436
    %v2441 = vpack.c.b16 %v2438, %v2438
    %vm2444 = vcmask 293888
    %v2446 = vsel %vm2444, %v2397, 0
    %v2449 = vsel %vm2444, %v2398, 0
    %v2452 = vsel %vm2444, %v2399, 0
    %v2455 = vsel %vm2444, %v2400, 0
    %v2458 = vsel %vm2444, %v2401, 0
    %v2461 = vsel %vm2444, %v2402, 0
    %v2464 = vsel %vm2444, %v2403, 0
    %v2467 = vsel %vm2444, %v2404, 0
    %v2470 = vsel %vm2444, %v2405, 0
    %v2473 = vsel %vm2444, %v2406, 0
    %v2476 = vsel %vm2444, %v2407, 0
    %v2479 = vsel %vm2444, %v2408, 0
    %v2482 = vsel %vm2444, %v2409, 0
    %v2485 = vsel %vm2444, %v2410, 0
    %v2488 = vsel %vm2444, %v2411, 0
    %v2491 = vsel %vm2444, %v2412, 0
    %v2494 = vsel %vm2444, %v2413, 0
    %v2497 = vsel %vm2444, %v2414, 0
    %v2500 = vsel %vm2444, %v2415, 0
    %v2503 = vsel %vm2444, %v2416, 0
    %v2506 = vsel %vm2444, %v2417, 0
    %v2509 = vsel %vm2444, %v2418, 0
    %v2512 = vsel %vm2444, %v2419, 0
    %v2515 = vsel %vm2444, %v2420, 0
    %v2518 = vsel %vm2444, %v2421, 0
    %v2521 = vsel %vm2444, %v2422, 0
    %v2524 = vsel %vm2444, %v2423, 0
    %v2527 = vsel %vm2444, %v2424, 0
    %v2530 = vsel %vm2444, %v2425, 0
    %v2533 = vsel %vm2444, %v2426, 0
    %v2536 = vsel %vm2444, %v2427, 0
    %v2539 = vsel %vm2444, %v2428, 0
    %vm2541 = vcmask 1041408
    %v2543 = vsel %vm2541, %v2441, 0
    %2545 = vmatprep.subr.bf16.mxu0 0
    %2546 = vmatpush1.bf16.msra.mxu0 0
    %2547 = vmatprep.subr.bf16.mxu0 0
    %2548 = vmatpush1.bf16.msra.mxu0 0
    %2549 = vmatprep.subr.bf16.mxu0 0
    %2550 = vmatpush1.bf16.msra.mxu0 0
    %2551 = vmatprep.subr.bf16.mxu0 0
    %2552 = vmatpush1.bf16.msra.mxu0 0
    %2553 = vmatprep.subr.bf16.mxu0 0
    %2554 = vmatpush1.bf16.msra.mxu0 0
    %2555 = vmatprep.subr.bf16.mxu0 0
    %2556 = vmatpush1.bf16.msra.mxu0 %v2543
    %2557 = vmatprep.subr.bf16.mxu0 0
    %2558 = vmatpush1.bf16.msra.mxu0 %v2440
    %2559 = vmatprep.subr.bf16.mxu0 0
    %2560 = vmatpush1.bf16.msra.mxu0 %v2439
    %2561 = vmatprep.subr.bf16.mxu0 0
    %2562 = vmatpush2.bf16.msra.mxu0 0
    %2563 = vmatprep.subr.bf16.mxu0 0
    %2564 = vmatpush2.bf16.msra.mxu0 0
    %2565 = vmatprep.subr.bf16.mxu0 0
    %2566 = vmatpush2.bf16.msra.mxu0 0
    %2567 = vmatprep.subr.bf16.mxu0 0
    %2568 = vmatpush2.bf16.msra.mxu0 0
    %2569 = vmatprep.subr.bf16.mxu0 0
    %2570 = vmatpush2.bf16.msra.mxu0 0
    %2571 = vmatprep.subr.bf16.mxu0 0
    %2572 = vmatpush2.bf16.msra.mxu0 0
    %2573 = vmatprep.subr.bf16.mxu0 0
    %2574 = vmatpush2.bf16.msra.mxu0 0
    %2575 = vmatprep.subr.bf16.mxu0 0
    %2576 = vmatpush2.bf16.msra.mxu0 0
    %2577 = vmatprep.mubr.bf16.mxu0 0
    %2578 = vmatmul.mubr.bf16.gmra.mxu0 %v2446
    %v2579 = vpop.f32.mrf.mxu0
    %v2580 = vadd.f32 %v2267, %v2579
    %v2581 = vpop.f32.mrf.mxu0
    %v2582 = vpop.f32.mrf.mxu0
    %v2583 = vadd.f32 %v2267, %v2582
    %v2584 = vpop.f32.mrf.mxu0
    %2585 = vmatprep.mubr.bf16.mxu0 0
    %2586 = vmatmul.mubr.bf16.gmra.mxu0 %v2449
    %v2587 = vpop.f32.mrf.mxu0
    %v2588 = vadd.f32 %v2267, %v2587
    %v2589 = vpop.f32.mrf.mxu0
    %v2590 = vpop.f32.mrf.mxu0
    %v2591 = vadd.f32 %v2267, %v2590
    %v2592 = vpop.f32.mrf.mxu0
    %2593 = vmatprep.mubr.bf16.mxu0 0
    %2594 = vmatmul.mubr.bf16.gmra.mxu0 %v2452
    %v2595 = vpop.f32.mrf.mxu0
    %v2596 = vadd.f32 %v2267, %v2595
    %v2597 = vpop.f32.mrf.mxu0
    %v2598 = vpop.f32.mrf.mxu0
    %v2599 = vadd.f32 %v2267, %v2598
    %v2600 = vpop.f32.mrf.mxu0
    %2601 = vmatprep.mubr.bf16.mxu0 0
    %2602 = vmatmul.mubr.bf16.gmra.mxu0 %v2455
    %v2603 = vpop.f32.mrf.mxu0
    %v2604 = vadd.f32 %v2267, %v2603
    %v2605 = vpop.f32.mrf.mxu0
    %v2606 = vpop.f32.mrf.mxu0
    %v2607 = vadd.f32 %v2267, %v2606
    %v2608 = vpop.f32.mrf.mxu0
    %2609 = vmatprep.mubr.bf16.mxu0 0
    %2610 = vmatmul.mubr.bf16.gmra.mxu0 %v2458
    %v2611 = vpop.f32.mrf.mxu0
    %v2612 = vadd.f32 %v2267, %v2611
    %v2613 = vpop.f32.mrf.mxu0
    %v2614 = vpop.f32.mrf.mxu0
    %v2615 = vadd.f32 %v2267, %v2614
    %v2616 = vpop.f32.mrf.mxu0
    %2617 = vmatprep.mubr.bf16.mxu0 0
    %2618 = vmatmul.mubr.bf16.gmra.mxu0 %v2461
    %v2619 = vpop.f32.mrf.mxu0
    %v2620 = vadd.f32 %v2267, %v2619
    %v2621 = vpop.f32.mrf.mxu0
    %v2622 = vpop.f32.mrf.mxu0
    %v2623 = vadd.f32 %v2267, %v2622
    %v2624 = vpop.f32.mrf.mxu0
    %2625 = vmatprep.mubr.bf16.mxu0 0
    %2626 = vmatmul.mubr.bf16.gmra.mxu0 %v2464
    %v2627 = vpop.f32.mrf.mxu0
    %v2628 = vadd.f32 %v2267, %v2627
    %v2629 = vpop.f32.mrf.mxu0
    %v2630 = vpop.f32.mrf.mxu0
    %v2631 = vadd.f32 %v2267, %v2630
    %v2632 = vpop.f32.mrf.mxu0
    %2633 = vmatprep.mubr.bf16.mxu0 0
    %2634 = vmatmul.mubr.bf16.gmra.mxu0 %v2467
    %v2635 = vpop.f32.mrf.mxu0
    %v2636 = vadd.f32 %v2267, %v2635
    %v2637 = vpop.f32.mrf.mxu0
    %v2638 = vpop.f32.mrf.mxu0
    %v2639 = vadd.f32 %v2267, %v2638
    %v2640 = vpop.f32.mrf.mxu0
    %2641 = vmatprep.mubr.bf16.mxu0 0
    %2642 = vmatmul.mubr.bf16.gmra.mxu0 %v2470
    %v2643 = vpop.f32.mrf.mxu0
    %v2644 = vadd.f32 %v2267, %v2643
    %v2645 = vpop.f32.mrf.mxu0
    %v2646 = vpop.f32.mrf.mxu0
    %v2647 = vadd.f32 %v2267, %v2646
    %v2648 = vpop.f32.mrf.mxu0
    %2649 = vmatprep.mubr.bf16.mxu0 0
    %2650 = vmatmul.mubr.bf16.gmra.mxu0 %v2473
    %v2651 = vpop.f32.mrf.mxu0
    %v2652 = vadd.f32 %v2267, %v2651
    %v2653 = vpop.f32.mrf.mxu0
    %v2654 = vpop.f32.mrf.mxu0
    %v2655 = vadd.f32 %v2267, %v2654
    %v2656 = vpop.f32.mrf.mxu0
    %2657 = vmatprep.mubr.bf16.mxu0 0
    %2658 = vmatmul.mubr.bf16.gmra.mxu0 %v2476
    %v2659 = vpop.f32.mrf.mxu0
    %v2660 = vadd.f32 %v2267, %v2659
    %v2661 = vpop.f32.mrf.mxu0
    %v2662 = vpop.f32.mrf.mxu0
    %v2663 = vadd.f32 %v2267, %v2662
    %v2664 = vpop.f32.mrf.mxu0
    %2665 = vmatprep.mubr.bf16.mxu0 0
    %2666 = vmatmul.mubr.bf16.gmra.mxu0 %v2479
    %v2667 = vpop.f32.mrf.mxu0
    %v2668 = vadd.f32 %v2267, %v2667
    %v2669 = vpop.f32.mrf.mxu0
    %v2670 = vpop.f32.mrf.mxu0
    %v2671 = vadd.f32 %v2267, %v2670
    %v2672 = vpop.f32.mrf.mxu0
    %2673 = vmatprep.mubr.bf16.mxu0 0
    %2674 = vmatmul.mubr.bf16.gmra.mxu0 %v2482
    %v2675 = vpop.f32.mrf.mxu0
    %v2676 = vadd.f32 %v2267, %v2675
    %v2677 = vpop.f32.mrf.mxu0
    %v2678 = vpop.f32.mrf.mxu0
    %v2679 = vadd.f32 %v2267, %v2678
    %v2680 = vpop.f32.mrf.mxu0
    %2681 = vmatprep.mubr.bf16.mxu0 0
    %2682 = vmatmul.mubr.bf16.gmra.mxu0 %v2485
    %v2683 = vpop.f32.mrf.mxu0
    %v2684 = vadd.f32 %v2267, %v2683
    %v2685 = vpop.f32.mrf.mxu0
    %v2686 = vpop.f32.mrf.mxu0
    %v2687 = vadd.f32 %v2267, %v2686
    %v2688 = vpop.f32.mrf.mxu0
    %2689 = vmatprep.mubr.bf16.mxu0 0
    %2690 = vmatmul.mubr.bf16.gmra.mxu0 %v2488
    %v2691 = vpop.f32.mrf.mxu0
    %v2692 = vadd.f32 %v2267, %v2691
    %v2693 = vpop.f32.mrf.mxu0
    %v2694 = vpop.f32.mrf.mxu0
    %v2695 = vadd.f32 %v2267, %v2694
    %v2696 = vpop.f32.mrf.mxu0
    %2697 = vmatprep.mubr.bf16.mxu0 0
    %2698 = vmatmul.mubr.bf16.gmra.mxu0 %v2491
    %v2699 = vpop.f32.mrf.mxu0
    %v2700 = vadd.f32 %v2267, %v2699
    %v2701 = vpop.f32.mrf.mxu0
    %v2702 = vpop.f32.mrf.mxu0
    %v2703 = vadd.f32 %v2267, %v2702
    %v2704 = vpop.f32.mrf.mxu0
    %2705 = vmatprep.mubr.bf16.mxu0 0
    %2706 = vmatmul.mubr.bf16.gmra.mxu0 %v2494
    %v2707 = vpop.f32.mrf.mxu0
    %v2708 = vadd.f32 %v2267, %v2707
    %v2709 = vpop.f32.mrf.mxu0
    %v2710 = vpop.f32.mrf.mxu0
    %v2711 = vadd.f32 %v2267, %v2710
    %v2712 = vpop.f32.mrf.mxu0
    %2713 = vmatprep.mubr.bf16.mxu0 0
    %2714 = vmatmul.mubr.bf16.gmra.mxu0 %v2497
    %v2715 = vpop.f32.mrf.mxu0
    %v2716 = vadd.f32 %v2267, %v2715
    %v2717 = vpop.f32.mrf.mxu0
    %v2718 = vpop.f32.mrf.mxu0
    %v2719 = vadd.f32 %v2267, %v2718
    %v2720 = vpop.f32.mrf.mxu0
    %2721 = vmatprep.mubr.bf16.mxu0 0
    %2722 = vmatmul.mubr.bf16.gmra.mxu0 %v2500
    %v2723 = vpop.f32.mrf.mxu0
    %v2724 = vadd.f32 %v2267, %v2723
    %v2725 = vpop.f32.mrf.mxu0
    %v2726 = vpop.f32.mrf.mxu0
    %v2727 = vadd.f32 %v2267, %v2726
    %v2728 = vpop.f32.mrf.mxu0
    %2729 = vmatprep.mubr.bf16.mxu0 0
    %2730 = vmatmul.mubr.bf16.gmra.mxu0 %v2503
    %v2731 = vpop.f32.mrf.mxu0
    %v2732 = vadd.f32 %v2267, %v2731
    %v2733 = vpop.f32.mrf.mxu0
    %v2734 = vpop.f32.mrf.mxu0
    %v2735 = vadd.f32 %v2267, %v2734
    %v2736 = vpop.f32.mrf.mxu0
    %2737 = vmatprep.mubr.bf16.mxu0 0
    %2738 = vmatmul.mubr.bf16.gmra.mxu0 %v2506
    %v2739 = vpop.f32.mrf.mxu0
    %v2740 = vadd.f32 %v2267, %v2739
    %v2741 = vpop.f32.mrf.mxu0
    %v2742 = vpop.f32.mrf.mxu0
    %v2743 = vadd.f32 %v2267, %v2742
    %v2744 = vpop.f32.mrf.mxu0
    %2745 = vmatprep.mubr.bf16.mxu0 0
    %2746 = vmatmul.mubr.bf16.gmra.mxu0 %v2509
    %v2747 = vpop.f32.mrf.mxu0
    %v2748 = vadd.f32 %v2267, %v2747
    %v2749 = vpop.f32.mrf.mxu0
    %v2750 = vpop.f32.mrf.mxu0
    %v2751 = vadd.f32 %v2267, %v2750
    %v2752 = vpop.f32.mrf.mxu0
    %2753 = vmatprep.mubr.bf16.mxu0 0
    %2754 = vmatmul.mubr.bf16.gmra.mxu0 %v2512
    %v2755 = vpop.f32.mrf.mxu0
    %v2756 = vadd.f32 %v2267, %v2755
    %v2757 = vpop.f32.mrf.mxu0
    %v2758 = vpop.f32.mrf.mxu0
    %v2759 = vadd.f32 %v2267, %v2758
    %v2760 = vpop.f32.mrf.mxu0
    %2761 = vmatprep.mubr.bf16.mxu0 0
    %2762 = vmatmul.mubr.bf16.gmra.mxu0 %v2515
    %v2763 = vpop.f32.mrf.mxu0
    %v2764 = vadd.f32 %v2267, %v2763
    %v2765 = vpop.f32.mrf.mxu0
    %v2766 = vpop.f32.mrf.mxu0
    %v2767 = vadd.f32 %v2267, %v2766
    %v2768 = vpop.f32.mrf.mxu0
    %2769 = vmatprep.mubr.bf16.mxu0 0
    %2770 = vmatmul.mubr.bf16.gmra.mxu0 %v2518
    %v2771 = vpop.f32.mrf.mxu0
    %v2772 = vadd.f32 %v2267, %v2771
    %v2773 = vpop.f32.mrf.mxu0
    %v2774 = vpop.f32.mrf.mxu0
    %v2775 = vadd.f32 %v2267, %v2774
    %v2776 = vpop.f32.mrf.mxu0
    %2777 = vmatprep.mubr.bf16.mxu0 0
    %2778 = vmatmul.mubr.bf16.gmra.mxu0 %v2521
    %v2779 = vpop.f32.mrf.mxu0
    %v2780 = vadd.f32 %v2267, %v2779
    %v2781 = vpop.f32.mrf.mxu0
    %v2782 = vpop.f32.mrf.mxu0
    %v2783 = vadd.f32 %v2267, %v2782
    %v2784 = vpop.f32.mrf.mxu0
    %2785 = vmatprep.mubr.bf16.mxu0 0
    %2786 = vmatmul.mubr.bf16.gmra.mxu0 %v2524
    %v2787 = vpop.f32.mrf.mxu0
    %v2788 = vadd.f32 %v2267, %v2787
    %v2789 = vpop.f32.mrf.mxu0
    %v2790 = vpop.f32.mrf.mxu0
    %v2791 = vadd.f32 %v2267, %v2790
    %v2792 = vpop.f32.mrf.mxu0
    %2793 = vmatprep.mubr.bf16.mxu0 0
    %2794 = vmatmul.mubr.bf16.gmra.mxu0 %v2527
    %v2795 = vpop.f32.mrf.mxu0
    %v2796 = vadd.f32 %v2267, %v2795
    %v2797 = vpop.f32.mrf.mxu0
    %v2798 = vpop.f32.mrf.mxu0
    %v2799 = vadd.f32 %v2267, %v2798
    %v2800 = vpop.f32.mrf.mxu0
    %2801 = vmatprep.mubr.bf16.mxu0 0
    %2802 = vmatmul.mubr.bf16.gmra.mxu0 %v2530
    %v2803 = vpop.f32.mrf.mxu0
    %v2804 = vadd.f32 %v2267, %v2803
    %v2805 = vpop.f32.mrf.mxu0
    %v2806 = vpop.f32.mrf.mxu0
    %v2807 = vadd.f32 %v2267, %v2806
    %v2808 = vpop.f32.mrf.mxu0
    %2809 = vmatprep.mubr.bf16.mxu0 0
    %2810 = vmatmul.mubr.bf16.gmra.mxu0 %v2533
    %v2811 = vpop.f32.mrf.mxu0
    %v2812 = vadd.f32 %v2267, %v2811
    %v2813 = vpop.f32.mrf.mxu0
    %v2814 = vpop.f32.mrf.mxu0
    %v2815 = vadd.f32 %v2267, %v2814
    %v2816 = vpop.f32.mrf.mxu0
    %2817 = vmatprep.mubr.bf16.mxu0 0
    %2818 = vmatmul.mubr.bf16.gmra.mxu0 %v2536
    %v2819 = vpop.f32.mrf.mxu0
    %v2820 = vadd.f32 %v2267, %v2819
    %v2821 = vpop.f32.mrf.mxu0
    %v2822 = vpop.f32.mrf.mxu0
    %v2823 = vadd.f32 %v2267, %v2822
    %v2824 = vpop.f32.mrf.mxu0
    %2825 = vmatprep.mubr.bf16.mxu0 0
    %2826 = vmatmul.mubr.bf16.gmra.mxu0 %v2539
    %v2827 = vpop.f32.mrf.mxu0
    %v2828 = vadd.f32 %v2267, %v2827
    %v2829 = vpop.f32.mrf.mxu0
    %v2830 = vpop.f32.mrf.mxu0
    %v2831 = vadd.f32 %v2267, %v2830
    %v2832 = vpop.f32.mrf.mxu0
    %2833 = vdwg.mxu0
    %v2834 = vmax.f32 %v2580, 0.0
    %v2835 = vmax.f32 %v2583, 0.0
    %v2836 = vmax.f32 %v2588, 0.0
    %v2837 = vmax.f32 %v2591, 0.0
    %v2838 = vmax.f32 %v2596, 0.0
    %v2839 = vmax.f32 %v2599, 0.0
    %v2840 = vmax.f32 %v2604, 0.0
    %v2841 = vmax.f32 %v2607, 0.0
    %v2842 = vmax.f32 %v2612, 0.0
    %v2843 = vmax.f32 %v2615, 0.0
    %v2844 = vmax.f32 %v2620, 0.0
    %v2845 = vmax.f32 %v2623, 0.0
    %v2846 = vmax.f32 %v2628, 0.0
    %v2847 = vmax.f32 %v2631, 0.0
    %v2848 = vmax.f32 %v2636, 0.0
    %v2849 = vmax.f32 %v2639, 0.0
    %v2850 = vmax.f32 %v2644, 0.0
    %v2851 = vmax.f32 %v2647, 0.0
    %v2852 = vmax.f32 %v2652, 0.0
    %v2853 = vmax.f32 %v2655, 0.0
    %v2854 = vmax.f32 %v2660, 0.0
    %v2855 = vmax.f32 %v2663, 0.0
    %v2856 = vmax.f32 %v2668, 0.0
    %v2857 = vmax.f32 %v2671, 0.0
    %v2858 = vmax.f32 %v2676, 0.0
    %v2859 = vmax.f32 %v2679, 0.0
    %v2860 = vmax.f32 %v2684, 0.0
    %v2861 = vmax.f32 %v2687, 0.0
    %v2862 = vmax.f32 %v2692, 0.0
    %v2863 = vmax.f32 %v2695, 0.0
    %v2864 = vmax.f32 %v2700, 0.0
    %v2865 = vmax.f32 %v2703, 0.0
    %v2866 = vmax.f32 %v2708, 0.0
    %v2867 = vmax.f32 %v2711, 0.0
    %v2868 = vmax.f32 %v2716, 0.0
    %v2869 = vmax.f32 %v2719, 0.0
    %v2870 = vmax.f32 %v2724, 0.0
    %v2871 = vmax.f32 %v2727, 0.0
    %v2872 = vmax.f32 %v2732, 0.0
    %v2873 = vmax.f32 %v2735, 0.0
    %v2874 = vmax.f32 %v2740, 0.0
    %v2875 = vmax.f32 %v2743, 0.0
    %v2876 = vmax.f32 %v2748, 0.0
    %v2877 = vmax.f32 %v2751, 0.0
    %v2878 = vmax.f32 %v2756, 0.0
    %v2879 = vmax.f32 %v2759, 0.0
    %v2880 = vmax.f32 %v2764, 0.0
    %v2881 = vmax.f32 %v2767, 0.0
    %v2882 = vmax.f32 %v2772, 0.0
    %v2883 = vmax.f32 %v2775, 0.0
    %v2884 = vmax.f32 %v2780, 0.0
    %v2885 = vmax.f32 %v2783, 0.0
    %v2886 = vmax.f32 %v2788, 0.0
    %v2887 = vmax.f32 %v2791, 0.0
    %v2888 = vmax.f32 %v2796, 0.0
    %v2889 = vmax.f32 %v2799, 0.0
    %v2890 = vmax.f32 %v2804, 0.0
    %v2891 = vmax.f32 %v2807, 0.0
    %v2892 = vmax.f32 %v2812, 0.0
    %v2893 = vmax.f32 %v2815, 0.0
    %v2894 = vmax.f32 %v2820, 0.0
    %v2895 = vmax.f32 %v2823, 0.0
    %v2896 = vmax.f32 %v2828, 0.0
    %v2897 = vmax.f32 %v2831, 0.0
    %v2898 = vld [vmem:[%s5] sm:$0xf]
    %v2899 = vpack.c.bf16 %v2835, %v2834
    %v2900 = vpack.c.bf16 %v2837, %v2836
    %v2901 = vpack.c.bf16 %v2839, %v2838
    %v2902 = vpack.c.bf16 %v2841, %v2840
    %v2903 = vpack.c.bf16 %v2843, %v2842
    %v2904 = vpack.c.bf16 %v2845, %v2844
    %v2905 = vpack.c.bf16 %v2847, %v2846
    %v2906 = vpack.c.bf16 %v2849, %v2848
    %v2907 = vpack.c.bf16 %v2851, %v2850
    %v2908 = vpack.c.bf16 %v2853, %v2852
    %v2909 = vpack.c.bf16 %v2855, %v2854
    %v2910 = vpack.c.bf16 %v2857, %v2856
    %v2911 = vpack.c.bf16 %v2859, %v2858
    %v2912 = vpack.c.bf16 %v2861, %v2860
    %v2913 = vpack.c.bf16 %v2863, %v2862
    %v2914 = vpack.c.bf16 %v2865, %v2864
    %v2915 = vpack.c.bf16 %v2867, %v2866
    %v2916 = vpack.c.bf16 %v2869, %v2868
    %v2917 = vpack.c.bf16 %v2871, %v2870
    %v2918 = vpack.c.bf16 %v2873, %v2872
    %v2919 = vpack.c.bf16 %v2875, %v2874
    %v2920 = vpack.c.bf16 %v2877, %v2876
    %v2921 = vpack.c.bf16 %v2879, %v2878
    %v2922 = vpack.c.bf16 %v2881, %v2880
    %v2923 = vpack.c.bf16 %v2883, %v2882
    %v2924 = vpack.c.bf16 %v2885, %v2884
    %v2925 = vpack.c.bf16 %v2887, %v2886
    %v2926 = vpack.c.bf16 %v2889, %v2888
    %v2927 = vpack.c.bf16 %v2891, %v2890
    %v2928 = vpack.c.bf16 %v2893, %v2892
    %v2929 = vpack.c.bf16 %v2895, %v2894
    %v2930 = vpack.c.bf16 %v2897, %v2896
    %v2933 = vunpack.c.l.s4 1966171168
    %v2934 = vunpack.c.0.s8 %v2933
    %v2935 = vlaneseq
    %v2936 = vshrl.u32 %v2935, 7
    %v2937 = vsub.s32 %v2934, %v2936
    %v2938 = vrot.slane %v2898, %v2937
    %v2939 = vcombine.high %v2938, %v2938
    %v2941 = vunpack.c.l.s4 1966171168
    %v2942 = vunpack.c.0.s8 %v2941
    %v2943 = vlaneseq
    %v2944 = vshrl.u32 %v2943, 7
    %v2945 = vsub.s32 %v2942, %v2944
    %v2946 = vrot.slane %v2938, %v2945
    %v2948 = vunpack.c.l.s4 1966171168
    %v2949 = vunpack.c.0.s8 %v2948
    %v2950 = vlaneseq
    %v2951 = vshrl.u32 %v2950, 7
    %v2952 = vsub.s32 %v2949, %v2951
    %v2953 = vrot.slane %v2939, %v2952
    %v2954 = vcombine.high %v2946, %v2946
    %v2955 = vcombine.high %v2953, %v2953
    %2960 = vmatprep.subr.bf16.mxu0 0
    %2961 = vmatpush1.bf16.msra.mxu0 %v2906
    %2962 = vmatprep.subr.bf16.mxu0 0
    %2963 = vmatpush1.bf16.msra.mxu0 %v2905
    %2964 = vmatprep.subr.bf16.mxu0 0
    %2965 = vmatpush1.bf16.msra.mxu0 %v2904
    %2966 = vmatprep.subr.bf16.mxu0 0
    %2967 = vmatpush1.bf16.msra.mxu0 %v2903
    %2968 = vmatprep.subr.bf16.mxu0 0
    %2969 = vmatpush1.bf16.msra.mxu0 %v2902
    %2970 = vmatprep.subr.bf16.mxu0 0
    %2971 = vmatpush1.bf16.msra.mxu0 %v2901
    %2972 = vmatprep.subr.bf16.mxu0 0
    %2973 = vmatpush1.bf16.msra.mxu0 %v2900
    %2974 = vmatprep.subr.bf16.mxu0 0
    %2975 = vmatpush1.bf16.msra.mxu0 %v2899
    %2976 = vmatprep.subr.bf16.mxu0 0
    %2977 = vmatpush2.bf16.msra.mxu0 %v2914
    %2978 = vmatprep.subr.bf16.mxu0 0
    %2979 = vmatpush2.bf16.msra.mxu0 %v2913
    %2980 = vmatprep.subr.bf16.mxu0 0
    %2981 = vmatpush2.bf16.msra.mxu0 %v2912
    %2982 = vmatprep.subr.bf16.mxu0 0
    %2983 = vmatpush2.bf16.msra.mxu0 %v2911
    %2984 = vmatprep.subr.bf16.mxu0 0
    %2985 = vmatpush2.bf16.msra.mxu0 %v2910
    %2986 = vmatprep.subr.bf16.mxu0 0
    %2987 = vmatpush2.bf16.msra.mxu0 %v2909
    %2988 = vmatprep.subr.bf16.mxu0 0
    %2989 = vmatpush2.bf16.msra.mxu0 %v2908
    %2990 = vmatprep.subr.bf16.mxu0 0
    %2991 = vmatpush2.bf16.msra.mxu0 %v2907
    %2992 = vmatprep.mubr.bf16.mxu0 %v2953
    %2993 = vmatmul.mubr.bf16.gmra.mxu0 %v2946
    %v2994 = vpop.f32.mrf.mxu0
    %v2995 = vadd.f32 0.0, %v2994
    %v2996 = vpop.f32.mrf.mxu0
    %v2997 = vpop.f32.mrf.mxu0
    %v2998 = vpop.f32.mrf.mxu0
    %2999 = vdwg.mxu0
    %3000 = vmatprep.subr.bf16.mxu0 0
    %3001 = vmatpush1.bf16.msra.mxu0 %v2922
    %3002 = vmatprep.subr.bf16.mxu0 0
    %3003 = vmatpush1.bf16.msra.mxu0 %v2921
    %3004 = vmatprep.subr.bf16.mxu0 0
    %3005 = vmatpush1.bf16.msra.mxu0 %v2920
    %3006 = vmatprep.subr.bf16.mxu0 0
    %3007 = vmatpush1.bf16.msra.mxu0 %v2919
    %3008 = vmatprep.subr.bf16.mxu0 0
    %3009 = vmatpush1.bf16.msra.mxu0 %v2918
    %3010 = vmatprep.subr.bf16.mxu0 0
    %3011 = vmatpush1.bf16.msra.mxu0 %v2917
    %3012 = vmatprep.subr.bf16.mxu0 0
    %3013 = vmatpush1.bf16.msra.mxu0 %v2916
    %3014 = vmatprep.subr.bf16.mxu0 0
    %3015 = vmatpush1.bf16.msra.mxu0 %v2915
    %3016 = vmatprep.subr.bf16.mxu0 0
    %3017 = vmatpush2.bf16.msra.mxu0 %v2930
    %3018 = vmatprep.subr.bf16.mxu0 0
    %3019 = vmatpush2.bf16.msra.mxu0 %v2929
    %3020 = vmatprep.subr.bf16.mxu0 0
    %3021 = vmatpush2.bf16.msra.mxu0 %v2928
    %3022 = vmatprep.subr.bf16.mxu0 0
    %3023 = vmatpush2.bf16.msra.mxu0 %v2927
    %3024 = vmatprep.subr.bf16.mxu0 0
    %3025 = vmatpush2.bf16.msra.mxu0 %v2926
    %3026 = vmatprep.subr.bf16.mxu0 0
    %3027 = vmatpush2.bf16.msra.mxu0 %v2925
    %3028 = vmatprep.subr.bf16.mxu0 0
    %3029 = vmatpush2.bf16.msra.mxu0 %v2924
    %3030 = vmatprep.subr.bf16.mxu0 0
    %3031 = vmatpush2.bf16.msra.mxu0 %v2923
    %3032 = vmatprep.mubr.bf16.mxu0 %v2955
    %3033 = vmatmul.mubr.bf16.gmra.mxu0 %v2954
    %v3034 = vpop.f32.mrf.mxu0
    %v3035 = vadd.f32 %v2995, %v3034
    %v3036 = vpop.f32.mrf.mxu0
    %v3037 = vpop.f32.mrf.mxu0
    %v3038 = vpop.f32.mrf.mxu0
    %3039 = vdwg.mxu0
    %v3040 = vpack.c.bf16 %v3035, %v3035
    %v3041 = vld [vmem:[#allocation3] sm:$0xf]
    %v3042 = vld [vmem:[#allocation3 + $0x4] sm:$0xf]
    %v3043 = vld [vmem:[#allocation3 + $0x8] sm:$0xf]
    %v3044 = vld [vmem:[#allocation3 + $0xc] sm:$0xf]
    %v3045 = vld [vmem:[#allocation3 + $0x10] sm:$0xf]
    %v3046 = vld [vmem:[#allocation3 + $0x14] sm:$0xf]
    %v3047 = vld [vmem:[#allocation3 + $0x18] sm:$0xf]
    %v3048 = vld [vmem:[#allocation3 + $0x1c] sm:$0xf]
    %v3049 = vld [vmem:[#allocation3 + $0x20] sm:$0xf]
    %v3050 = vld [vmem:[#allocation3 + $0x24] sm:$0xf]
    %v3051 = vld [vmem:[#allocation3 + $0x28] sm:$0xf]
    %v3052 = vld [vmem:[#allocation3 + $0x2c] sm:$0xf]
    %v3053 = vld [vmem:[#allocation3 + $0x30] sm:$0xf]
    %v3054 = vld [vmem:[#allocation3 + $0x34] sm:$0xf]
    %v3055 = vld [vmem:[#allocation3 + $0x38] sm:$0xf]
    %v3056 = vld [vmem:[#allocation3 + $0x3c] sm:$0xf]
    %v3057 = vld [vmem:[%s4] sm:$0x1]
    %v3059 = vlaneseq
    %v3060 = vshrl.u32 %v3059, 7
    %v3061 = vsub.s32 0, %v3060
    %v3062 = vrot.slane %v3057, %v3061
    %v3080 = vunpack.c.l.b16 %v3041
    %v3081 = vunpack.c.l.b16 %v3042
    %v3082 = vunpack.c.l.b16 %v3043
    %v3083 = vunpack.c.l.b16 %v3044
    %v3084 = vunpack.c.l.b16 %v3045
    %v3085 = vunpack.c.l.b16 %v3046
    %v3086 = vunpack.c.l.b16 %v3047
    %v3087 = vunpack.c.l.b16 %v3048
    %v3088 = vunpack.c.l.b16 %v3049
    %v3089 = vunpack.c.l.b16 %v3050
    %v3090 = vunpack.c.l.b16 %v3051
    %v3091 = vunpack.c.l.b16 %v3052
    %v3092 = vunpack.c.l.b16 %v3053
    %v3093 = vunpack.c.l.b16 %v3054
    %v3094 = vunpack.c.l.b16 %v3055
    %v3095 = vunpack.c.l.b16 %v3056
    %v3096 = vpack.c.b16 %v3081, %v3080
    %v3097 = vpack.c.b16 %v3083, %v3082
    %v3098 = vpack.c.b16 %v3085, %v3084
    %v3099 = vpack.c.b16 %v3087, %v3086
    %v3100 = vpack.c.b16 %v3089, %v3088
    %v3101 = vpack.c.b16 %v3091, %v3090
    %v3102 = vpack.c.b16 %v3093, %v3092
    %v3103 = vpack.c.b16 %v3095, %v3094
    %3112 = vmatprep.subr.bf16.mxu0 0
    %3113 = vmatpush1.bf16.msra.mxu0 %v3103
    %3114 = vmatprep.subr.bf16.mxu0 0
    %3115 = vmatpush1.bf16.msra.mxu0 %v3102
    %3116 = vmatprep.subr.bf16.mxu0 0
    %3117 = vmatpush1.bf16.msra.mxu0 %v3101
    %3118 = vmatprep.subr.bf16.mxu0 0
    %3119 = vmatpush1.bf16.msra.mxu0 %v3100
    %3120 = vmatprep.subr.bf16.mxu0 0
    %3121 = vmatpush1.bf16.msra.mxu0 %v3099
    %3122 = vmatprep.subr.bf16.mxu0 0
    %3123 = vmatpush1.bf16.msra.mxu0 %v3098
    %3124 = vmatprep.subr.bf16.mxu0 0
    %3125 = vmatpush1.bf16.msra.mxu0 %v3097
    %3126 = vmatprep.subr.bf16.mxu0 0
    %3127 = vmatpush1.bf16.msra.mxu0 %v3096
    %3128 = vmatprep.subr.bf16.mxu0 0
    %3129 = vmatpush2.bf16.msra.mxu0 0
    %3130 = vmatprep.subr.bf16.mxu0 0
    %3131 = vmatpush2.bf16.msra.mxu0 0
    %3132 = vmatprep.subr.bf16.mxu0 0
    %3133 = vmatpush2.bf16.msra.mxu0 0
    %3134 = vmatprep.subr.bf16.mxu0 0
    %3135 = vmatpush2.bf16.msra.mxu0 0
    %3136 = vmatprep.subr.bf16.mxu0 0
    %3137 = vmatpush2.bf16.msra.mxu0 0
    %3138 = vmatprep.subr.bf16.mxu0 0
    %3139 = vmatpush2.bf16.msra.mxu0 0
    %3140 = vmatprep.subr.bf16.mxu0 0
    %3141 = vmatpush2.bf16.msra.mxu0 0
    %3142 = vmatprep.subr.bf16.mxu0 0
    %3143 = vmatpush2.bf16.msra.mxu0 0
    %3144 = vmatprep.mubr.bf16.mxu0 0
    %3145 = vmatmul.mubr.bf16.gmra.mxu0 %v3040
    %v3146 = vpop.f32.mrf.mxu0
    %v3147 = vadd.f32 %v3062, %v3146
    %v3148 = vpop.f32.mrf.mxu0
    %v3149 = vpop.f32.mrf.mxu0
    %v3150 = vpop.f32.mrf.mxu0
    %3151 = vdwg.mxu0
    %3152 = vst [vmem:[#allocation6] sm:$0x3] %v3147
    // Predicated region
    $region30: #{tpu_custom_call.1} parent=1 // pred_check
      _
    $region31: #{tpu_custom_call.1} parent=1 // pred_check_branch
      %3154 = sbr.rel (0) target = $region33
    $region32: #{tpu_custom_call.1} parent=1 // pred_region
      %s3156 = ssub.s32 32, 32
      %3157 = vsyncadd [#allocation5], %s3156
      %s3159 = sshll.u32 [#allocation6], 4
      %s3160 = int_to_ptr.vmem [resolvable:$true] %s3159
      %3162 = dma.vmem_to_hbm [thread:$0]  %s3160, 32, %s6, [#allocation5]
    $region33: #{tpu_custom_call.1} parent=1 // pred_fallthru
      _
    // Predicated region
    $region34: #{tpu_custom_call.1} parent=1 // pred_check
      _
    $region35: #{tpu_custom_call.1} parent=1 // pred_check_branch
      %3164 = sbr.rel (0) target = $region37
    $region36: #{tpu_custom_call.1} parent=1 // pred_region
      %3165 = dma.done [#allocation5], 32
    $region37: #{tpu_custom_call.1} parent=1 // pred_fallthru
      _
    %3166 = vsyncpa [#allocation4], 1
    %3167 = vsyncpa [#allocation5], 1

</llo_original>
